<compile_context>
chip_gen: v7x
topology: tpu7x:2x2x1
jax: 0.10.0
libtpu: 0.0.40
codegen_flags: <defaults>
</compile_context>

<pallas_src>
import functools
import math

import jax
import jax.numpy as jnp
from jax.experimental import pallas as pl
from jax.experimental.pallas import tpu as pltpu

LANE = 128
SUBLANE = 8


def _round_up(x, m):
    return (x + m - 1) // m * m


# -----------------------------------------------------------------------------
# Fused LSTMTagger forward kernel: one time-chunk per grid step.
# -----------------------------------------------------------------------------
def _tagger_kernel(x_ref, mask_ref, bbias_ref, wih0_ref, wih_rest_ref, whh_ref,
                   b_ref, wfc_ref, bfc_ref, out_ref,
                   act_scr, gates_scr, h_scr, c_scr, *, num_layers):
    """
    x_ref:        (Tt, B, E)   f32 embeddings for this time-chunk (time-major)
    mask_ref:     (Tt, B, H)   f32 validity mask, pre-broadcast to lane width
    bbias_ref:    (B, V)       additive batch mask (0 for real rows, -1e30 for padded rows)
    wih0_ref:     (E, 4H)      layer-0 input weights, pre-transposed, gate blocks lane-128 aligned
    wih_rest_ref: (max(L-1,1), H, 4H)   input weights for layers >= 1 (dummy when L == 1)
    whh_ref:      (L, H, 4H)   hidden weights, pre-transposed
    b_ref:        (L, 1, 4H)   combined biases (b_ih + b_hh), gate-block padded
    wfc_ref:      (H, V)       FC weights, pre-transposed, zero-padded
    bfc_ref:      (1, V)
    out_ref:      (Tt, B, V)   log-probabilities (softmax over dim=1, the batch axis)
    act_scr:      (Tt, B, H)   VMEM, current layer's output chunk
    gates_scr:    (Tt, B, 4H)  VMEM, hoisted input-projection gates for the chunk
    h_scr/c_scr:  (L, B, H)    VMEM, recurrent state carried across grid steps
    """
    Tt, B, _ = x_ref.shape
    H = h_scr.shape[-1]
    G = 4 * H
    f32 = jnp.float32

    # Zero the carried recurrent state on the first time-chunk only.
    @pl.when(pl.program_id(0) == 0)
    def _():
        h_scr[...] = jnp.zeros_like(h_scr)
        c_scr[...] = jnp.zeros_like(c_scr)

    def run_layer(layer, layer_in, w_in):
        e_in = layer_in.shape[-1]
        w_hid = whh_ref[layer]                               # (H, 4H), static layer index
        bias = b_ref[layer]                                  # (1, 4H)

        # Hoisted input projection (+ bias) for the whole chunk: ONE big MXU matmul.
        # (Tt, B, E) -> (Tt*B, E) is a free view (B is a sublane multiple, E lane-dense).
        gates_scr[...] = (
            jnp.dot(layer_in.reshape(Tt * B, e_in), w_in, preferred_element_type=f32)
            + bias
        ).reshape(Tt, B, G)

        # Recurrence: only h @ W_hh remains on the serial critical path.
        # Tt is small and static -> fully unrolled for LLO scheduling visibility.
        for t in range(Tt):
            h = h_scr[layer]
            c = c_scr[layer]
            gates = gates_scr[t] + jnp.dot(h, w_hid, preferred_element_type=f32)  # (B, 4H)
            # PyTorch gate order i, f, g, o; H is padded to 128 so every slice is a
            # lane-128-aligned block (free vreg select, no XLU shuffle).
            i_g = jax.nn.sigmoid(gates[:, 0 * H:1 * H])
            f_g = jax.nn.sigmoid(gates[:, 1 * H:2 * H])
            g_g = jnp.tanh(gates[:, 2 * H:3 * H])
            o_g = jax.nn.sigmoid(gates[:, 3 * H:4 * H])
            c_new = f_g * c + i_g * g_g
            h_new = o_g * jnp.tanh(c_new)
            m = mask_ref[t]                                  # (B, H), lane-dense
            h_scr[layer] = h + m * (h_new - h)               # freeze state past length
            c_scr[layer] = c + m * (c_new - c)
            act_scr[t] = m * h_new                           # padded steps emit zero rows

    # Layer 0 reads the embedding chunk; deeper layers read the previous layer's whole
    # chunk (loaded into gates before the recurrence overwrites act_scr in place).
    run_layer(0, x_ref[...], wih0_ref[...])
    for layer in range(1, num_layers):
        run_layer(layer, act_scr[...], wih_rest_ref[layer - 1])

    # FC as ONE (Tt*B, H) @ (H, V) matmul, then log_softmax over the batch axis (dim=1),
    # vectorized over the whole chunk.  Lane-dense (V = 128-padded) unmasked stores.
    V = out_ref.shape[-1]
    z = (jnp.dot(act_scr[...].reshape(Tt * B, H), wfc_ref[...],
                 preferred_element_type=f32) + bfc_ref[...]).reshape(Tt, B, V)
    zm = z + bbias_ref[...]                      # exclude padded batch rows from the reduction
    zmax = jnp.max(zm, axis=1, keepdims=True)
    lse = jnp.log(jnp.sum(jnp.exp(zm - zmax), axis=1, keepdims=True)) + zmax
    out_ref[...] = z - lse


# -----------------------------------------------------------------------------
# Full LSTMTagger forward (wrapper).
# -----------------------------------------------------------------------------
def lstm_tagger_forward(params, x_input, x_lengths, *, time_chunk=4):
    """x_input: (B, T) int32 token ids (0 = pad); x_lengths: (B,) int32."""
    L = params["num_layers"]
    V = params["vocab_size"]
    E_pad, H_pad, V_pad = params["E_pad"], params["H_pad"], params["V_pad"]
    G_pad = 4 * H_pad

    B, T = x_input.shape
    B_pad = _round_up(max(B, SUBLANE), SUBLANE)
    Tt = min(time_chunk, T) if time_chunk > 0 else T
    T_pad = _round_up(T, Tt)
    n_chunks = T_pad // Tt

    # Pad tokens (pad id 0 -> zero embedding row) and lengths (padded rows: length 0).
    tok = jnp.zeros((B_pad, T_pad), jnp.int32).at[:B, :T].set(x_input.astype(jnp.int32))
    lens = jnp.zeros((B_pad,), jnp.int32).at[:B].set(x_lengths.astype(jnp.int32))

    # Embedding lookup stays in the wrapper (irregular gather; no clean tiled Pallas form).
    embeds = jnp.take(params["embedding"], tok, axis=0)            # (B_pad, T_pad, E_pad)
    x = jnp.transpose(embeds, (1, 0, 2)).astype(jnp.float32)       # (T_pad, B_pad, E_pad)

    # Packed-sequence validity mask, pre-broadcast to lane width once (off the serial path).
    t_idx = jnp.arange(T_pad, dtype=jnp.int32)[:, None]
    mask2d = (t_idx < lens[None, :]).astype(jnp.float32)           # (T_pad, B_pad)
    mask = jnp.broadcast_to(mask2d[:, :, None], (T_pad, B_pad, H_pad))

    # Additive batch mask: padded batch rows must not participate in the dim=1 softmax.
    brow = (jnp.arange(B_pad) < B).astype(jnp.float32)[:, None]
    bbias = jnp.broadcast_to((brow - 1.0) * 1e30, (B_pad, V_pad))

    n_rest = params["w_ih_rest_t"].shape[0]

    # Explicit VMEM budget: weights + double-buffered chunk I/O + scratch, with headroom.
    weight_bytes = 4 * (E_pad * G_pad + n_rest * H_pad * G_pad + L * H_pad * G_pad
                        + L * G_pad + H_pad * V_pad + V_pad + B_pad * V_pad)
    chunk_io_bytes = 4 * Tt * B_pad * (E_pad + H_pad + V_pad)
    scratch_bytes = 4 * (Tt * B_pad * (H_pad + G_pad) + 2 * L * B_pad * H_pad)
    vmem_limit = 2 * (weight_bytes + chunk_io_bytes) + scratch_bytes + (2 << 20)
    vmem_limit = int(min(max(vmem_limit, 4 << 20), 48 << 20))

    kernel = functools.partial(_tagger_kernel, num_layers=L)

    out = pl.pallas_call(
        kernel,
        out_shape=jax.ShapeDtypeStruct((T_pad, B_pad, V_pad), jnp.float32),
        grid_spec=pltpu.PrefetchScalarGridSpec(
            num_scalar_prefetch=0,
            grid=(n_chunks,),
            in_specs=[
                pl.BlockSpec((Tt, B_pad, E_pad), lambda i: (i, 0, 0)),      # embeddings chunk
                pl.BlockSpec((Tt, B_pad, H_pad), lambda i: (i, 0, 0)),      # length mask chunk
                pl.BlockSpec((B_pad, V_pad), lambda i: (0, 0)),             # batch softmax mask
                pl.BlockSpec((E_pad, G_pad), lambda i: (0, 0)),             # W_ih layer 0
                pl.BlockSpec((n_rest, H_pad, G_pad), lambda i: (0, 0, 0)),  # W_ih layers >= 1
                pl.BlockSpec((L, H_pad, G_pad), lambda i: (0, 0, 0)),       # W_hh all layers
                pl.BlockSpec((L, 1, G_pad), lambda i: (0, 0, 0)),           # combined biases
                pl.BlockSpec((H_pad, V_pad), lambda i: (0, 0)),             # W_fc
                pl.BlockSpec((1, V_pad), lambda i: (0, 0)),                 # b_fc
            ],
            out_specs=pl.BlockSpec((Tt, B_pad, V_pad), lambda i: (i, 0, 0)),
            scratch_shapes=[
                pltpu.VMEM((Tt, B_pad, H_pad), jnp.float32),   # inter-layer activations (chunk)
                pltpu.VMEM((Tt, B_pad, G_pad), jnp.float32),   # hoisted gates (chunk)
                pltpu.VMEM((L, B_pad, H_pad), jnp.float32),    # h (carried across chunks)
                pltpu.VMEM((L, B_pad, H_pad), jnp.float32),    # c (carried across chunks)
            ],
        ),
        compiler_params=pltpu.CompilerParams(
            dimension_semantics=("arbitrary",),   # sequential: h/c carried across time chunks
            vmem_limit_bytes=vmem_limit,
        ),
    )(x, mask, bbias, params["w_ih0_t"], params["w_ih_rest_t"], params["w_hh_t"],
      params["b_t"], params["w_fc_t"], params["b_fc_2d"])

    # TODO(synk): on v7x, additionally shard the (padded) batch across the two TensorCores
    # with a leading "parallel"/core_map axis and a cross-core exchange for the dim=1 softmax.
    return out[:T, :B, :V]


# -----------------------------------------------------------------------------
# Parameter init (shapes mirror nn.Embedding / nn.LSTM / nn.Linear), packed into
# lane/sublane-aligned, pre-transposed kernel layouts.
# -----------------------------------------------------------------------------
def _scatter_gates(w_t, rows_pad, H, H_pad):
    """(rows, 4H) -> (rows_pad, 4*H_pad); each i/f/g/o block starts at a lane-128 boundary."""
    rows = w_t.shape[0]
    out = jnp.zeros((rows_pad, 4 * H_pad), w_t.dtype)
    for g in range(4):
        out = out.at[:rows, g * H_pad:g * H_pad + H].set(w_t[:, g * H:(g + 1) * H])
    return out


def init_params(key, vocab_size, embedding_dim, hidden_dim, num_layers):
    E, H, V, L = embedding_dim, hidden_dim, vocab_size, num_layers
    E_pad, H_pad, V_pad = _round_up(E, LANE), _round_up(H, LANE), _round_up(V, LANE)

    keys = jax.random.split(key, 3 + 4 * L)
    k_it = iter(keys)

    emb = jax.random.normal(next(k_it), (V, E), jnp.float32)
    emb = emb.at[0].set(0.0)                                        # padding_idx=0
    emb_pad = jnp.zeros((V, E_pad), jnp.float32).at[:, :E].set(emb)

    bound = 1.0 / math.sqrt(H)
    wih0 = None
    wih_rest, whh_all, b_all = [], [], []
    for layer in range(L):
        e_in = E if layer == 0 else H
        e_in_pad = E_pad if layer == 0 else H_pad
        w_ih = jax.random.uniform(next(k_it), (4 * H, e_in), jnp.float32, -bound, bound)
        w_hh = jax.random.uniform(next(k_it), (4 * H, H), jnp.float32, -bound, bound)
        b_ih = jax.random.uniform(next(k_it), (4 * H,), jnp.float32, -bound, bound)
        b_hh = jax.random.uniform(next(k_it), (4 * H,), jnp.float32, -bound, bound)
        w_ih_t = _scatter_gates(w_ih.T, e_in_pad, H, H_pad)          # (Ein_pad, 4*H_pad)
        w_hh_t = _scatter_gates(w_hh.T, H_pad, H, H_pad)             # (H_pad, 4*H_pad)
        b_t = _scatter_gates((b_ih + b_hh).reshape(1, 4 * H), 1, H, H_pad)  # (1, 4*H_pad)
        if layer == 0:
            wih0 = w_ih_t
        else:
            wih_rest.append(w_ih_t)
        whh_all.append(w_hh_t)
        b_all.append(b_t)

    if wih_rest:
        wih_rest_t = jnp.stack(wih_rest, axis=0)                     # (L-1, H_pad, 4*H_pad)
    else:
        wih_rest_t = jnp.zeros((1, H_pad, 4 * H_pad), jnp.float32)   # dummy when L == 1

    w_fc = jax.random.uniform(next(k_it), (V, H), jnp.float32, -bound, bound)
    b_fc = jax.random.uniform(next(k_it), (V,), jnp.float32, -bound, bound)
    w_fc_t = jnp.zeros((H_pad, V_pad), jnp.float32).at[:H, :V].set(w_fc.T)
    b_fc_2d = jnp.zeros((1, V_pad), jnp.float32).at[0, :V].set(b_fc)

    return {
        "embedding": emb_pad,                    # (vocab, E_pad)
        "num_layers": L,
        "vocab_size": V,
        "E_pad": E_pad, "H_pad": H_pad, "V_pad": V_pad,
        "w_ih0_t": wih0,                         # (E_pad, 4*H_pad)
        "w_ih_rest_t": wih_rest_t,               # (max(L-1,1), H_pad, 4*H_pad)
        "w_hh_t": jnp.stack(whh_all, axis=0),    # (L, H_pad, 4*H_pad)
        "b_t": jnp.stack(b_all, axis=0),         # (L, 1, 4*H_pad)
        "w_fc_t": w_fc_t,                        # (H_pad, V_pad)
        "b_fc_2d": b_fc_2d,                      # (1, V_pad)
    }


if __name__ == "__main__":
    VOCAB = 16
    EMBED = 32
    HIDDEN = 32
    LAYERS = 2
    BATCH = 2
    SEQ = 8

    key = jax.random.PRNGKey(0)
    k_params, k_tokens = jax.random.split(key)
    params = init_params(k_params, VOCAB, EMBED, HIDDEN, LAYERS)

    # Token ids in [1, VOCAB); lengths descending (pack_padded_sequence default);
    # positions past each length set to pad id 0.
    x_lengths = jnp.array([SEQ, 5], dtype=jnp.int32)
    tokens = jax.random.randint(k_tokens, (BATCH, SEQ), 1, VOCAB, dtype=jnp.int32)
    pos = jnp.arange(SEQ, dtype=jnp.int32)[None, :]
    x_input = jnp.where(pos < x_lengths[:, None], tokens, 0)

    fwd = jax.jit(functools.partial(lstm_tagger_forward, params))
    tag_scores = fwd(x_input, x_lengths)
    jax.block_until_ready(tag_scores)

    assert tag_scores.shape == (SEQ, BATCH, VOCAB)
    assert tag_scores.dtype == jnp.float32
    assert bool(jnp.all(jnp.isfinite(tag_scores)))
    print("KERNEL_OK")
</pallas_src>

<mosaic_0001>
module attributes {stable_mosaic.version = 11 : i64} {
  func.func @_tagger_kernel(%arg0: i32, %arg1: memref<4x8x128xf32, #tpu.memory_space<vmem>>, %arg2: memref<4x8x128xf32, #tpu.memory_space<vmem>>, %arg3: memref<8x128xf32, #tpu.memory_space<vmem>>, %arg4: memref<128x512xf32, #tpu.memory_space<vmem>>, %arg5: memref<1x128x512xf32, #tpu.memory_space<vmem>>, %arg6: memref<2x128x512xf32, #tpu.memory_space<vmem>>, %arg7: memref<2x1x512xf32, #tpu.memory_space<vmem>>, %arg8: memref<128x128xf32, #tpu.memory_space<vmem>>, %arg9: memref<1x128xf32, #tpu.memory_space<vmem>>, %arg10: memref<4x8x128xf32, #tpu.memory_space<vmem>>, %arg11: memref<4x8x128xf32, #tpu.memory_space<vmem>>, %arg12: memref<4x8x512xf32, #tpu.memory_space<vmem>>, %arg13: memref<2x8x128xf32, #tpu.memory_space<vmem>>, %arg14: memref<2x8x128xf32, #tpu.memory_space<vmem>>) attributes {dimension_semantics = [#tpu.dimension_semantics<arbitrary>], iteration_bounds = array<i64: 2>, scalar_prefetch = 0 : i64, scratch_operands = 4 : i64, tpu.core_type = #tpu.core_type<tc>, window_params = [{transform_indices = @transform_0, window_bounds = array<i64: 4, 8, 128>}, {transform_indices = @transform_1, window_bounds = array<i64: 4, 8, 128>}, {pipeline_mode = #tpu.pipeline_mode<synchronous>, transform_indices = @transform_2, window_bounds = array<i64: 8, 128>}, {pipeline_mode = #tpu.pipeline_mode<synchronous>, transform_indices = @transform_3, window_bounds = array<i64: 128, 512>}, {pipeline_mode = #tpu.pipeline_mode<synchronous>, transform_indices = @transform_4, window_bounds = array<i64: 1, 128, 512>}, {pipeline_mode = #tpu.pipeline_mode<synchronous>, transform_indices = @transform_5, window_bounds = array<i64: 2, 128, 512>}, {pipeline_mode = #tpu.pipeline_mode<synchronous>, transform_indices = @transform_6, window_bounds = array<i64: 2, 1, 512>}, {pipeline_mode = #tpu.pipeline_mode<synchronous>, transform_indices = @transform_7, window_bounds = array<i64: 128, 128>}, {pipeline_mode = #tpu.pipeline_mode<synchronous>, transform_indices = @transform_8, window_bounds = array<i64: 1, 128>}, {transform_indices = @transform_9, window_bounds = array<i64: 4, 8, 128>}]} {
    %c0_i32 = arith.constant 0 : i32
    %0 = arith.cmpi eq, %arg0, %c0_i32 : i32
    %1 = arith.extui %0 : i1 to i32
    %c0_i32_0 = arith.constant 0 : i32
    %2 = arith.cmpi ne, %1, %c0_i32_0 : i32
    scf.if %2 {
      %cst_242 = arith.constant 0.000000e+00 : f32
      %460 = vector.broadcast %cst_242 : f32 to vector<2x8x128xf32>
      %c0_243 = arith.constant 0 : index
      %c0_244 = arith.constant 0 : index
      %c0_245 = arith.constant 0 : index
      %461 = vector.load %arg13[%c0_243, %c0_244, %c0_245] : memref<2x8x128xf32, #tpu.memory_space<vmem>>, vector<2x8x128xf32>
      tpu.vector_store %arg13[%c0_243, %c0_244, %c0_245], %460 {strides = array<i32>} : memref<2x8x128xf32, #tpu.memory_space<vmem>>, vector<2x8x128xf32>,
      %cst_246 = arith.constant 0.000000e+00 : f32
      %462 = vector.broadcast %cst_246 : f32 to vector<2x8x128xf32>
      %c0_247 = arith.constant 0 : index
      %c0_248 = arith.constant 0 : index
      %c0_249 = arith.constant 0 : index
      %463 = vector.load %arg14[%c0_247, %c0_248, %c0_249] : memref<2x8x128xf32, #tpu.memory_space<vmem>>, vector<2x8x128xf32>
      tpu.vector_store %arg14[%c0_247, %c0_248, %c0_249], %462 {strides = array<i32>} : memref<2x8x128xf32, #tpu.memory_space<vmem>>, vector<2x8x128xf32>,
    } else {
    }
    %c0 = arith.constant 0 : index
    %c0_1 = arith.constant 0 : index
    %c0_2 = arith.constant 0 : index
    %3 = vector.load %arg1[%c0, %c0_1, %c0_2] : memref<4x8x128xf32, #tpu.memory_space<vmem>>, vector<4x8x128xf32>
    %c0_3 = arith.constant 0 : index
    %c0_4 = arith.constant 0 : index
    %4 = vector.load %arg4[%c0_3, %c0_4] : memref<128x512xf32, #tpu.memory_space<vmem>>, vector<128x512xf32>
    %c0_5 = arith.constant 0 : index
    %c0_6 = arith.constant 0 : index
    %c0_7 = arith.constant 0 : index
    %5 = vector.load %arg6[%c0_5, %c0_6, %c0_7] : memref<2x128x512xf32, #tpu.memory_space<vmem>>, vector<1x128x512xf32>
    %6 = vector.shape_cast %5 : vector<1x128x512xf32> to vector<128x512xf32>
    %c0_8 = arith.constant 0 : index
    %c0_9 = arith.constant 0 : index
    %c0_10 = arith.constant 0 : index
    %7 = vector.load %arg7[%c0_8, %c0_9, %c0_10] : memref<2x1x512xf32, #tpu.memory_space<vmem>>, vector<1x1x512xf32>
    %8 = vector.shape_cast %7 : vector<1x1x512xf32> to vector<1x512xf32>
    %9 = vector.shape_cast %3 : vector<4x8x128xf32> to vector<32x128xf32>
    %cst = arith.constant dense<0.000000e+00> : vector<32x512xf32>
    %10 = tpu.matmul %9, %4, %cst {dimension_numbers = #tpu.dot_dimension_numbers<[1], [0], [0], [1], [0, 0, 1, 1], [], []>} : vector<32x128xf32>, vector<128x512xf32>, vector<32x512xf32> -> vector<32x512xf32>
    %11 = vector.broadcast %8 : vector<1x512xf32> to vector<32x512xf32>
    %12 = arith.addf %10, %11 : vector<32x512xf32>
    %13 = vector.shape_cast %12 : vector<32x512xf32> to vector<4x8x512xf32>
    %c0_11 = arith.constant 0 : index
    %c0_12 = arith.constant 0 : index
    %c0_13 = arith.constant 0 : index
    %14 = vector.load %arg12[%c0_11, %c0_12, %c0_13] : memref<4x8x512xf32, #tpu.memory_space<vmem>>, vector<4x8x512xf32>
    tpu.vector_store %arg12[%c0_11, %c0_12, %c0_13], %13 {strides = array<i32>} : memref<4x8x512xf32, #tpu.memory_space<vmem>>, vector<4x8x512xf32>,
    %c0_14 = arith.constant 0 : index
    %c0_15 = arith.constant 0 : index
    %c0_16 = arith.constant 0 : index
    %15 = vector.load %arg13[%c0_14, %c0_15, %c0_16] : memref<2x8x128xf32, #tpu.memory_space<vmem>>, vector<1x8x128xf32>
    %16 = vector.shape_cast %15 : vector<1x8x128xf32> to vector<8x128xf32>
    %c0_17 = arith.constant 0 : index
    %c0_18 = arith.constant 0 : index
    %c0_19 = arith.constant 0 : index
    %17 = vector.load %arg14[%c0_17, %c0_18, %c0_19] : memref<2x8x128xf32, #tpu.memory_space<vmem>>, vector<1x8x128xf32>
    %18 = vector.shape_cast %17 : vector<1x8x128xf32> to vector<8x128xf32>
    %c0_20 = arith.constant 0 : index
    %c0_21 = arith.constant 0 : index
    %c0_22 = arith.constant 0 : index
    %19 = vector.load %arg12[%c0_20, %c0_21, %c0_22] : memref<4x8x512xf32, #tpu.memory_space<vmem>>, vector<1x8x512xf32>
    %20 = vector.shape_cast %19 : vector<1x8x512xf32> to vector<8x512xf32>
    %cst_23 = arith.constant dense<0.000000e+00> : vector<8x512xf32>
    %21 = tpu.matmul %16, %6, %cst_23 {dimension_numbers = #tpu.dot_dimension_numbers<[1], [0], [0], [1], [0, 0, 1, 1], [], []>} : vector<8x128xf32>, vector<128x512xf32>, vector<8x512xf32> -> vector<8x512xf32>
    %22 = arith.addf %20, %21 : vector<8x512xf32>
    %23 = vector.extract_strided_slice %22 {offsets = [0, 0], sizes = [8, 128], strides = [1, 1]} : vector<8x512xf32> to vector<8x128xf32>
    %24 = arith.negf %23 : vector<8x128xf32>
    %25 = math.exp %24 : vector<8x128xf32>
    %cst_24 = arith.constant 1.000000e+00 : f32
    %26 = vector.broadcast %cst_24 : f32 to vector<8x128xf32>
    %27 = arith.addf %26, %25 : vector<8x128xf32>
    %28 = arith.divf %26, %27 : vector<8x128xf32>
    %29 = vector.extract_strided_slice %22 {offsets = [0, 128], sizes = [8, 128], strides = [1, 1]} : vector<8x512xf32> to vector<8x128xf32>
    %30 = arith.negf %29 : vector<8x128xf32>
    %31 = math.exp %30 : vector<8x128xf32>
    %cst_25 = arith.constant 1.000000e+00 : f32
    %32 = vector.broadcast %cst_25 : f32 to vector<8x128xf32>
    %33 = arith.addf %32, %31 : vector<8x128xf32>
    %34 = arith.divf %32, %33 : vector<8x128xf32>
    %35 = vector.extract_strided_slice %22 {offsets = [0, 256], sizes = [8, 128], strides = [1, 1]} : vector<8x512xf32> to vector<8x128xf32>
    %36 = math.tanh %35 : vector<8x128xf32>
    %37 = vector.extract_strided_slice %22 {offsets = [0, 384], sizes = [8, 128], strides = [1, 1]} : vector<8x512xf32> to vector<8x128xf32>
    %38 = arith.negf %37 : vector<8x128xf32>
    %39 = math.exp %38 : vector<8x128xf32>
    %cst_26 = arith.constant 1.000000e+00 : f32
    %40 = vector.broadcast %cst_26 : f32 to vector<8x128xf32>
    %41 = arith.addf %40, %39 : vector<8x128xf32>
    %42 = arith.divf %40, %41 : vector<8x128xf32>
    %43 = arith.mulf %34, %18 : vector<8x128xf32>
    %44 = arith.mulf %28, %36 : vector<8x128xf32>
    %45 = arith.addf %43, %44 : vector<8x128xf32>
    %46 = math.tanh %45 : vector<8x128xf32>
    %47 = arith.mulf %42, %46 : vector<8x128xf32>
    %c0_27 = arith.constant 0 : index
    %c0_28 = arith.constant 0 : index
    %c0_29 = arith.constant 0 : index
    %48 = vector.load %arg2[%c0_27, %c0_28, %c0_29] : memref<4x8x128xf32, #tpu.memory_space<vmem>>, vector<1x8x128xf32>
    %49 = vector.shape_cast %48 : vector<1x8x128xf32> to vector<8x128xf32>
    %50 = arith.subf %47, %16 : vector<8x128xf32>
    %51 = arith.mulf %49, %50 : vector<8x128xf32>
    %52 = arith.addf %16, %51 : vector<8x128xf32>
    %c0_30 = arith.constant 0 : index
    %c0_31 = arith.constant 0 : index
    %c0_32 = arith.constant 0 : index
    %53 = vector.load %arg13[%c0_30, %c0_31, %c0_32] : memref<2x8x128xf32, #tpu.memory_space<vmem>>, vector<1x8x128xf32>
    %54 = vector.shape_cast %53 : vector<1x8x128xf32> to vector<8x128xf32>
    %55 = vector.shape_cast %52 : vector<8x128xf32> to vector<1x8x128xf32>
    tpu.vector_store %arg13[%c0_30, %c0_31, %c0_32], %55 {strides = array<i32>} : memref<2x8x128xf32, #tpu.memory_space<vmem>>, vector<1x8x128xf32>,
    %56 = arith.subf %45, %18 : vector<8x128xf32>
    %57 = arith.mulf %49, %56 : vector<8x128xf32>
    %58 = arith.addf %18, %57 : vector<8x128xf32>
    %c0_33 = arith.constant 0 : index
    %c0_34 = arith.constant 0 : index
    %c0_35 = arith.constant 0 : index
    %59 = vector.load %arg14[%c0_33, %c0_34, %c0_35] : memref<2x8x128xf32, #tpu.memory_space<vmem>>, vector<1x8x128xf32>
    %60 = vector.shape_cast %59 : vector<1x8x128xf32> to vector<8x128xf32>
    %61 = vector.shape_cast %58 : vector<8x128xf32> to vector<1x8x128xf32>
    tpu.vector_store %arg14[%c0_33, %c0_34, %c0_35], %61 {strides = array<i32>} : memref<2x8x128xf32, #tpu.memory_space<vmem>>, vector<1x8x128xf32>,
    %62 = arith.mulf %49, %47 : vector<8x128xf32>
    %c0_36 = arith.constant 0 : index
    %c0_37 = arith.constant 0 : index
    %c0_38 = arith.constant 0 : index
    %63 = vector.load %arg11[%c0_36, %c0_37, %c0_38] : memref<4x8x128xf32, #tpu.memory_space<vmem>>, vector<1x8x128xf32>
    %64 = vector.shape_cast %63 : vector<1x8x128xf32> to vector<8x128xf32>
    %65 = vector.shape_cast %62 : vector<8x128xf32> to vector<1x8x128xf32>
    tpu.vector_store %arg11[%c0_36, %c0_37, %c0_38], %65 {strides = array<i32>} : memref<4x8x128xf32, #tpu.memory_space<vmem>>, vector<1x8x128xf32>,
    %c0_39 = arith.constant 0 : index
    %c0_40 = arith.constant 0 : index
    %c0_41 = arith.constant 0 : index
    %66 = vector.load %arg13[%c0_39, %c0_40, %c0_41] : memref<2x8x128xf32, #tpu.memory_space<vmem>>, vector<1x8x128xf32>
    %67 = vector.shape_cast %66 : vector<1x8x128xf32> to vector<8x128xf32>
    %c0_42 = arith.constant 0 : index
    %c0_43 = arith.constant 0 : index
    %c0_44 = arith.constant 0 : index
    %68 = vector.load %arg14[%c0_42, %c0_43, %c0_44] : memref<2x8x128xf32, #tpu.memory_space<vmem>>, vector<1x8x128xf32>
    %69 = vector.shape_cast %68 : vector<1x8x128xf32> to vector<8x128xf32>
    %c1 = arith.constant 1 : index
    %c0_45 = arith.constant 0 : index
    %c0_46 = arith.constant 0 : index
    %70 = vector.load %arg12[%c1, %c0_45, %c0_46] : memref<4x8x512xf32, #tpu.memory_space<vmem>>, vector<1x8x512xf32>
    %71 = vector.shape_cast %70 : vector<1x8x512xf32> to vector<8x512xf32>
    %cst_47 = arith.constant dense<0.000000e+00> : vector<8x512xf32>
    %72 = tpu.matmul %67, %6, %cst_47 {dimension_numbers = #tpu.dot_dimension_numbers<[1], [0], [0], [1], [0, 0, 1, 1], [], []>} : vector<8x128xf32>, vector<128x512xf32>, vector<8x512xf32> -> vector<8x512xf32>
    %73 = arith.addf %71, %72 : vector<8x512xf32>
    %74 = vector.extract_strided_slice %73 {offsets = [0, 0], sizes = [8, 128], strides = [1, 1]} : vector<8x512xf32> to vector<8x128xf32>
    %75 = arith.negf %74 : vector<8x128xf32>
    %76 = math.exp %75 : vector<8x128xf32>
    %cst_48 = arith.constant 1.000000e+00 : f32
    %77 = vector.broadcast %cst_48 : f32 to vector<8x128xf32>
    %78 = arith.addf %77, %76 : vector<8x128xf32>
    %79 = arith.divf %77, %78 : vector<8x128xf32>
    %80 = vector.extract_strided_slice %73 {offsets = [0, 128], sizes = [8, 128], strides = [1, 1]} : vector<8x512xf32> to vector<8x128xf32>
    %81 = arith.negf %80 : vector<8x128xf32>
    %82 = math.exp %81 : vector<8x128xf32>
    %cst_49 = arith.constant 1.000000e+00 : f32
    %83 = vector.broadcast %cst_49 : f32 to vector<8x128xf32>
    %84 = arith.addf %83, %82 : vector<8x128xf32>
    %85 = arith.divf %83, %84 : vector<8x128xf32>
    %86 = vector.extract_strided_slice %73 {offsets = [0, 256], sizes = [8, 128], strides = [1, 1]} : vector<8x512xf32> to vector<8x128xf32>
    %87 = math.tanh %86 : vector<8x128xf32>
    %88 = vector.extract_strided_slice %73 {offsets = [0, 384], sizes = [8, 128], strides = [1, 1]} : vector<8x512xf32> to vector<8x128xf32>
    %89 = arith.negf %88 : vector<8x128xf32>
    %90 = math.exp %89 : vector<8x128xf32>
    %cst_50 = arith.constant 1.000000e+00 : f32
    %91 = vector.broadcast %cst_50 : f32 to vector<8x128xf32>
    %92 = arith.addf %91, %90 : vector<8x128xf32>
    %93 = arith.divf %91, %92 : vector<8x128xf32>
    %94 = arith.mulf %85, %69 : vector<8x128xf32>
    %95 = arith.mulf %79, %87 : vector<8x128xf32>
    %96 = arith.addf %94, %95 : vector<8x128xf32>
    %97 = math.tanh %96 : vector<8x128xf32>
    %98 = arith.mulf %93, %97 : vector<8x128xf32>
    %c1_51 = arith.constant 1 : index
    %c0_52 = arith.constant 0 : index
    %c0_53 = arith.constant 0 : index
    %99 = vector.load %arg2[%c1_51, %c0_52, %c0_53] : memref<4x8x128xf32, #tpu.memory_space<vmem>>, vector<1x8x128xf32>
    %100 = vector.shape_cast %99 : vector<1x8x128xf32> to vector<8x128xf32>
    %101 = arith.subf %98, %67 : vector<8x128xf32>
    %102 = arith.mulf %100, %101 : vector<8x128xf32>
    %103 = arith.addf %67, %102 : vector<8x128xf32>
    %c0_54 = arith.constant 0 : index
    %c0_55 = arith.constant 0 : index
    %c0_56 = arith.constant 0 : index
    %104 = vector.load %arg13[%c0_54, %c0_55, %c0_56] : memref<2x8x128xf32, #tpu.memory_space<vmem>>, vector<1x8x128xf32>
    %105 = vector.shape_cast %104 : vector<1x8x128xf32> to vector<8x128xf32>
    %106 = vector.shape_cast %103 : vector<8x128xf32> to vector<1x8x128xf32>
    tpu.vector_store %arg13[%c0_54, %c0_55, %c0_56], %106 {strides = array<i32>} : memref<2x8x128xf32, #tpu.memory_space<vmem>>, vector<1x8x128xf32>,
    %107 = arith.subf %96, %69 : vector<8x128xf32>
    %108 = arith.mulf %100, %107 : vector<8x128xf32>
    %109 = arith.addf %69, %108 : vector<8x128xf32>
    %c0_57 = arith.constant 0 : index
    %c0_58 = arith.constant 0 : index
    %c0_59 = arith.constant 0 : index
    %110 = vector.load %arg14[%c0_57, %c0_58, %c0_59] : memref<2x8x128xf32, #tpu.memory_space<vmem>>, vector<1x8x128xf32>
    %111 = vector.shape_cast %110 : vector<1x8x128xf32> to vector<8x128xf32>
    %112 = vector.shape_cast %109 : vector<8x128xf32> to vector<1x8x128xf32>
    tpu.vector_store %arg14[%c0_57, %c0_58, %c0_59], %112 {strides = array<i32>} : memref<2x8x128xf32, #tpu.memory_space<vmem>>, vector<1x8x128xf32>,
    %113 = arith.mulf %100, %98 : vector<8x128xf32>
    %c1_60 = arith.constant 1 : index
    %c0_61 = arith.constant 0 : index
    %c0_62 = arith.constant 0 : index
    %114 = vector.load %arg11[%c1_60, %c0_61, %c0_62] : memref<4x8x128xf32, #tpu.memory_space<vmem>>, vector<1x8x128xf32>
    %115 = vector.shape_cast %114 : vector<1x8x128xf32> to vector<8x128xf32>
    %116 = vector.shape_cast %113 : vector<8x128xf32> to vector<1x8x128xf32>
    tpu.vector_store %arg11[%c1_60, %c0_61, %c0_62], %116 {strides = array<i32>} : memref<4x8x128xf32, #tpu.memory_space<vmem>>, vector<1x8x128xf32>,
    %c0_63 = arith.constant 0 : index
    %c0_64 = arith.constant 0 : index
    %c0_65 = arith.constant 0 : index
    %117 = vector.load %arg13[%c0_63, %c0_64, %c0_65] : memref<2x8x128xf32, #tpu.memory_space<vmem>>, vector<1x8x128xf32>
    %118 = vector.shape_cast %117 : vector<1x8x128xf32> to vector<8x128xf32>
    %c0_66 = arith.constant 0 : index
    %c0_67 = arith.constant 0 : index
    %c0_68 = arith.constant 0 : index
    %119 = vector.load %arg14[%c0_66, %c0_67, %c0_68] : memref<2x8x128xf32, #tpu.memory_space<vmem>>, vector<1x8x128xf32>
    %120 = vector.shape_cast %119 : vector<1x8x128xf32> to vector<8x128xf32>
    %c2 = arith.constant 2 : index
    %c0_69 = arith.constant 0 : index
    %c0_70 = arith.constant 0 : index
    %121 = vector.load %arg12[%c2, %c0_69, %c0_70] : memref<4x8x512xf32, #tpu.memory_space<vmem>>, vector<1x8x512xf32>
    %122 = vector.shape_cast %121 : vector<1x8x512xf32> to vector<8x512xf32>
    %cst_71 = arith.constant dense<0.000000e+00> : vector<8x512xf32>
    %123 = tpu.matmul %118, %6, %cst_71 {dimension_numbers = #tpu.dot_dimension_numbers<[1], [0], [0], [1], [0, 0, 1, 1], [], []>} : vector<8x128xf32>, vector<128x512xf32>, vector<8x512xf32> -> vector<8x512xf32>
    %124 = arith.addf %122, %123 : vector<8x512xf32>
    %125 = vector.extract_strided_slice %124 {offsets = [0, 0], sizes = [8, 128], strides = [1, 1]} : vector<8x512xf32> to vector<8x128xf32>
    %126 = arith.negf %125 : vector<8x128xf32>
    %127 = math.exp %126 : vector<8x128xf32>
    %cst_72 = arith.constant 1.000000e+00 : f32
    %128 = vector.broadcast %cst_72 : f32 to vector<8x128xf32>
    %129 = arith.addf %128, %127 : vector<8x128xf32>
    %130 = arith.divf %128, %129 : vector<8x128xf32>
    %131 = vector.extract_strided_slice %124 {offsets = [0, 128], sizes = [8, 128], strides = [1, 1]} : vector<8x512xf32> to vector<8x128xf32>
    %132 = arith.negf %131 : vector<8x128xf32>
    %133 = math.exp %132 : vector<8x128xf32>
    %cst_73 = arith.constant 1.000000e+00 : f32
    %134 = vector.broadcast %cst_73 : f32 to vector<8x128xf32>
    %135 = arith.addf %134, %133 : vector<8x128xf32>
    %136 = arith.divf %134, %135 : vector<8x128xf32>
    %137 = vector.extract_strided_slice %124 {offsets = [0, 256], sizes = [8, 128], strides = [1, 1]} : vector<8x512xf32> to vector<8x128xf32>
    %138 = math.tanh %137 : vector<8x128xf32>
    %139 = vector.extract_strided_slice %124 {offsets = [0, 384], sizes = [8, 128], strides = [1, 1]} : vector<8x512xf32> to vector<8x128xf32>
    %140 = arith.negf %139 : vector<8x128xf32>
    %141 = math.exp %140 : vector<8x128xf32>
    %cst_74 = arith.constant 1.000000e+00 : f32
    %142 = vector.broadcast %cst_74 : f32 to vector<8x128xf32>
    %143 = arith.addf %142, %141 : vector<8x128xf32>
    %144 = arith.divf %142, %143 : vector<8x128xf32>
    %145 = arith.mulf %136, %120 : vector<8x128xf32>
    %146 = arith.mulf %130, %138 : vector<8x128xf32>
    %147 = arith.addf %145, %146 : vector<8x128xf32>
    %148 = math.tanh %147 : vector<8x128xf32>
    %149 = arith.mulf %144, %148 : vector<8x128xf32>
    %c2_75 = arith.constant 2 : index
    %c0_76 = arith.constant 0 : index
    %c0_77 = arith.constant 0 : index
    %150 = vector.load %arg2[%c2_75, %c0_76, %c0_77] : memref<4x8x128xf32, #tpu.memory_space<vmem>>, vector<1x8x128xf32>
    %151 = vector.shape_cast %150 : vector<1x8x128xf32> to vector<8x128xf32>
    %152 = arith.subf %149, %118 : vector<8x128xf32>
    %153 = arith.mulf %151, %152 : vector<8x128xf32>
    %154 = arith.addf %118, %153 : vector<8x128xf32>
    %c0_78 = arith.constant 0 : index
    %c0_79 = arith.constant 0 : index
    %c0_80 = arith.constant 0 : index
    %155 = vector.load %arg13[%c0_78, %c0_79, %c0_80] : memref<2x8x128xf32, #tpu.memory_space<vmem>>, vector<1x8x128xf32>
    %156 = vector.shape_cast %155 : vector<1x8x128xf32> to vector<8x128xf32>
    %157 = vector.shape_cast %154 : vector<8x128xf32> to vector<1x8x128xf32>
    tpu.vector_store %arg13[%c0_78, %c0_79, %c0_80], %157 {strides = array<i32>} : memref<2x8x128xf32, #tpu.memory_space<vmem>>, vector<1x8x128xf32>,
    %158 = arith.subf %147, %120 : vector<8x128xf32>
    %159 = arith.mulf %151, %158 : vector<8x128xf32>
    %160 = arith.addf %120, %159 : vector<8x128xf32>
    %c0_81 = arith.constant 0 : index
    %c0_82 = arith.constant 0 : index
    %c0_83 = arith.constant 0 : index
    %161 = vector.load %arg14[%c0_81, %c0_82, %c0_83] : memref<2x8x128xf32, #tpu.memory_space<vmem>>, vector<1x8x128xf32>
    %162 = vector.shape_cast %161 : vector<1x8x128xf32> to vector<8x128xf32>
    %163 = vector.shape_cast %160 : vector<8x128xf32> to vector<1x8x128xf32>
    tpu.vector_store %arg14[%c0_81, %c0_82, %c0_83], %163 {strides = array<i32>} : memref<2x8x128xf32, #tpu.memory_space<vmem>>, vector<1x8x128xf32>,
    %164 = arith.mulf %151, %149 : vector<8x128xf32>
    %c2_84 = arith.constant 2 : index
    %c0_85 = arith.constant 0 : index
    %c0_86 = arith.constant 0 : index
    %165 = vector.load %arg11[%c2_84, %c0_85, %c0_86] : memref<4x8x128xf32, #tpu.memory_space<vmem>>, vector<1x8x128xf32>
    %166 = vector.shape_cast %165 : vector<1x8x128xf32> to vector<8x128xf32>
    %167 = vector.shape_cast %164 : vector<8x128xf32> to vector<1x8x128xf32>
    tpu.vector_store %arg11[%c2_84, %c0_85, %c0_86], %167 {strides = array<i32>} : memref<4x8x128xf32, #tpu.memory_space<vmem>>, vector<1x8x128xf32>,
    %c0_87 = arith.constant 0 : index
    %c0_88 = arith.constant 0 : index
    %c0_89 = arith.constant 0 : index
    %168 = vector.load %arg13[%c0_87, %c0_88, %c0_89] : memref<2x8x128xf32, #tpu.memory_space<vmem>>, vector<1x8x128xf32>
    %169 = vector.shape_cast %168 : vector<1x8x128xf32> to vector<8x128xf32>
    %c0_90 = arith.constant 0 : index
    %c0_91 = arith.constant 0 : index
    %c0_92 = arith.constant 0 : index
    %170 = vector.load %arg14[%c0_90, %c0_91, %c0_92] : memref<2x8x128xf32, #tpu.memory_space<vmem>>, vector<1x8x128xf32>
    %171 = vector.shape_cast %170 : vector<1x8x128xf32> to vector<8x128xf32>
    %c3 = arith.constant 3 : index
    %c0_93 = arith.constant 0 : index
    %c0_94 = arith.constant 0 : index
    %172 = vector.load %arg12[%c3, %c0_93, %c0_94] : memref<4x8x512xf32, #tpu.memory_space<vmem>>, vector<1x8x512xf32>
    %173 = vector.shape_cast %172 : vector<1x8x512xf32> to vector<8x512xf32>
    %cst_95 = arith.constant dense<0.000000e+00> : vector<8x512xf32>
    %174 = tpu.matmul %169, %6, %cst_95 {dimension_numbers = #tpu.dot_dimension_numbers<[1], [0], [0], [1], [0, 0, 1, 1], [], []>} : vector<8x128xf32>, vector<128x512xf32>, vector<8x512xf32> -> vector<8x512xf32>
    %175 = arith.addf %173, %174 : vector<8x512xf32>
    %176 = vector.extract_strided_slice %175 {offsets = [0, 0], sizes = [8, 128], strides = [1, 1]} : vector<8x512xf32> to vector<8x128xf32>
    %177 = arith.negf %176 : vector<8x128xf32>
    %178 = math.exp %177 : vector<8x128xf32>
    %cst_96 = arith.constant 1.000000e+00 : f32
    %179 = vector.broadcast %cst_96 : f32 to vector<8x128xf32>
    %180 = arith.addf %179, %178 : vector<8x128xf32>
    %181 = arith.divf %179, %180 : vector<8x128xf32>
    %182 = vector.extract_strided_slice %175 {offsets = [0, 128], sizes = [8, 128], strides = [1, 1]} : vector<8x512xf32> to vector<8x128xf32>
    %183 = arith.negf %182 : vector<8x128xf32>
    %184 = math.exp %183 : vector<8x128xf32>
    %cst_97 = arith.constant 1.000000e+00 : f32
    %185 = vector.broadcast %cst_97 : f32 to vector<8x128xf32>
    %186 = arith.addf %185, %184 : vector<8x128xf32>
    %187 = arith.divf %185, %186 : vector<8x128xf32>
    %188 = vector.extract_strided_slice %175 {offsets = [0, 256], sizes = [8, 128], strides = [1, 1]} : vector<8x512xf32> to vector<8x128xf32>
    %189 = math.tanh %188 : vector<8x128xf32>
    %190 = vector.extract_strided_slice %175 {offsets = [0, 384], sizes = [8, 128], strides = [1, 1]} : vector<8x512xf32> to vector<8x128xf32>
    %191 = arith.negf %190 : vector<8x128xf32>
    %192 = math.exp %191 : vector<8x128xf32>
    %cst_98 = arith.constant 1.000000e+00 : f32
    %193 = vector.broadcast %cst_98 : f32 to vector<8x128xf32>
    %194 = arith.addf %193, %192 : vector<8x128xf32>
    %195 = arith.divf %193, %194 : vector<8x128xf32>
    %196 = arith.mulf %187, %171 : vector<8x128xf32>
    %197 = arith.mulf %181, %189 : vector<8x128xf32>
    %198 = arith.addf %196, %197 : vector<8x128xf32>
    %199 = math.tanh %198 : vector<8x128xf32>
    %200 = arith.mulf %195, %199 : vector<8x128xf32>
    %c3_99 = arith.constant 3 : index
    %c0_100 = arith.constant 0 : index
    %c0_101 = arith.constant 0 : index
    %201 = vector.load %arg2[%c3_99, %c0_100, %c0_101] : memref<4x8x128xf32, #tpu.memory_space<vmem>>, vector<1x8x128xf32>
    %202 = vector.shape_cast %201 : vector<1x8x128xf32> to vector<8x128xf32>
    %203 = arith.subf %200, %169 : vector<8x128xf32>
    %204 = arith.mulf %202, %203 : vector<8x128xf32>
    %205 = arith.addf %169, %204 : vector<8x128xf32>
    %c0_102 = arith.constant 0 : index
    %c0_103 = arith.constant 0 : index
    %c0_104 = arith.constant 0 : index
    %206 = vector.load %arg13[%c0_102, %c0_103, %c0_104] : memref<2x8x128xf32, #tpu.memory_space<vmem>>, vector<1x8x128xf32>
    %207 = vector.shape_cast %206 : vector<1x8x128xf32> to vector<8x128xf32>
    %208 = vector.shape_cast %205 : vector<8x128xf32> to vector<1x8x128xf32>
    tpu.vector_store %arg13[%c0_102, %c0_103, %c0_104], %208 {strides = array<i32>} : memref<2x8x128xf32, #tpu.memory_space<vmem>>, vector<1x8x128xf32>,
    %209 = arith.subf %198, %171 : vector<8x128xf32>
    %210 = arith.mulf %202, %209 : vector<8x128xf32>
    %211 = arith.addf %171, %210 : vector<8x128xf32>
    %c0_105 = arith.constant 0 : index
    %c0_106 = arith.constant 0 : index
    %c0_107 = arith.constant 0 : index
    %212 = vector.load %arg14[%c0_105, %c0_106, %c0_107] : memref<2x8x128xf32, #tpu.memory_space<vmem>>, vector<1x8x128xf32>
    %213 = vector.shape_cast %212 : vector<1x8x128xf32> to vector<8x128xf32>
    %214 = vector.shape_cast %211 : vector<8x128xf32> to vector<1x8x128xf32>
    tpu.vector_store %arg14[%c0_105, %c0_106, %c0_107], %214 {strides = array<i32>} : memref<2x8x128xf32, #tpu.memory_space<vmem>>, vector<1x8x128xf32>,
    %215 = arith.mulf %202, %200 : vector<8x128xf32>
    %c3_108 = arith.constant 3 : index
    %c0_109 = arith.constant 0 : index
    %c0_110 = arith.constant 0 : index
    %216 = vector.load %arg11[%c3_108, %c0_109, %c0_110] : memref<4x8x128xf32, #tpu.memory_space<vmem>>, vector<1x8x128xf32>
    %217 = vector.shape_cast %216 : vector<1x8x128xf32> to vector<8x128xf32>
    %218 = vector.shape_cast %215 : vector<8x128xf32> to vector<1x8x128xf32>
    tpu.vector_store %arg11[%c3_108, %c0_109, %c0_110], %218 {strides = array<i32>} : memref<4x8x128xf32, #tpu.memory_space<vmem>>, vector<1x8x128xf32>,
    %c0_111 = arith.constant 0 : index
    %c0_112 = arith.constant 0 : index
    %c0_113 = arith.constant 0 : index
    %219 = vector.load %arg11[%c0_111, %c0_112, %c0_113] : memref<4x8x128xf32, #tpu.memory_space<vmem>>, vector<4x8x128xf32>
    %c0_114 = arith.constant 0 : index
    %c0_115 = arith.constant 0 : index
    %c0_116 = arith.constant 0 : index
    %220 = vector.load %arg5[%c0_114, %c0_115, %c0_116] : memref<1x128x512xf32, #tpu.memory_space<vmem>>, vector<1x128x512xf32>
    %221 = vector.shape_cast %220 : vector<1x128x512xf32> to vector<128x512xf32>
    %c1_117 = arith.constant 1 : index
    %c0_118 = arith.constant 0 : index
    %c0_119 = arith.constant 0 : index
    %222 = vector.load %arg6[%c1_117, %c0_118, %c0_119] : memref<2x128x512xf32, #tpu.memory_space<vmem>>, vector<1x128x512xf32>
    %223 = vector.shape_cast %222 : vector<1x128x512xf32> to vector<128x512xf32>
    %c1_120 = arith.constant 1 : index
    %c0_121 = arith.constant 0 : index
    %c0_122 = arith.constant 0 : index
    %224 = vector.load %arg7[%c1_120, %c0_121, %c0_122] : memref<2x1x512xf32, #tpu.memory_space<vmem>>, vector<1x1x512xf32>
    %225 = vector.shape_cast %224 : vector<1x1x512xf32> to vector<1x512xf32>
    %226 = vector.shape_cast %219 : vector<4x8x128xf32> to vector<32x128xf32>
    %cst_123 = arith.constant dense<0.000000e+00> : vector<32x512xf32>
    %227 = tpu.matmul %226, %221, %cst_123 {dimension_numbers = #tpu.dot_dimension_numbers<[1], [0], [0], [1], [0, 0, 1, 1], [], []>} : vector<32x128xf32>, vector<128x512xf32>, vector<32x512xf32> -> vector<32x512xf32>
    %228 = vector.broadcast %225 : vector<1x512xf32> to vector<32x512xf32>
    %229 = arith.addf %227, %228 : vector<32x512xf32>
    %230 = vector.shape_cast %229 : vector<32x512xf32> to vector<4x8x512xf32>
    %c0_124 = arith.constant 0 : index
    %c0_125 = arith.constant 0 : index
    %c0_126 = arith.constant 0 : index
    %231 = vector.load %arg12[%c0_124, %c0_125, %c0_126] : memref<4x8x512xf32, #tpu.memory_space<vmem>>, vector<4x8x512xf32>
    tpu.vector_store %arg12[%c0_124, %c0_125, %c0_126], %230 {strides = array<i32>} : memref<4x8x512xf32, #tpu.memory_space<vmem>>, vector<4x8x512xf32>,
    %c1_127 = arith.constant 1 : index
    %c0_128 = arith.constant 0 : index
    %c0_129 = arith.constant 0 : index
    %232 = vector.load %arg13[%c1_127, %c0_128, %c0_129] : memref<2x8x128xf32, #tpu.memory_space<vmem>>, vector<1x8x128xf32>
    %233 = vector.shape_cast %232 : vector<1x8x128xf32> to vector<8x128xf32>
    %c1_130 = arith.constant 1 : index
    %c0_131 = arith.constant 0 : index
    %c0_132 = arith.constant 0 : index
    %234 = vector.load %arg14[%c1_130, %c0_131, %c0_132] : memref<2x8x128xf32, #tpu.memory_space<vmem>>, vector<1x8x128xf32>
    %235 = vector.shape_cast %234 : vector<1x8x128xf32> to vector<8x128xf32>
    %c0_133 = arith.constant 0 : index
    %c0_134 = arith.constant 0 : index
    %c0_135 = arith.constant 0 : index
    %236 = vector.load %arg12[%c0_133, %c0_134, %c0_135] : memref<4x8x512xf32, #tpu.memory_space<vmem>>, vector<1x8x512xf32>
    %237 = vector.shape_cast %236 : vector<1x8x512xf32> to vector<8x512xf32>
    %cst_136 = arith.constant dense<0.000000e+00> : vector<8x512xf32>
    %238 = tpu.matmul %233, %223, %cst_136 {dimension_numbers = #tpu.dot_dimension_numbers<[1], [0], [0], [1], [0, 0, 1, 1], [], []>} : vector<8x128xf32>, vector<128x512xf32>, vector<8x512xf32> -> vector<8x512xf32>
    %239 = arith.addf %237, %238 : vector<8x512xf32>
    %240 = vector.extract_strided_slice %239 {offsets = [0, 0], sizes = [8, 128], strides = [1, 1]} : vector<8x512xf32> to vector<8x128xf32>
    %241 = arith.negf %240 : vector<8x128xf32>
    %242 = math.exp %241 : vector<8x128xf32>
    %cst_137 = arith.constant 1.000000e+00 : f32
    %243 = vector.broadcast %cst_137 : f32 to vector<8x128xf32>
    %244 = arith.addf %243, %242 : vector<8x128xf32>
    %245 = arith.divf %243, %244 : vector<8x128xf32>
    %246 = vector.extract_strided_slice %239 {offsets = [0, 128], sizes = [8, 128], strides = [1, 1]} : vector<8x512xf32> to vector<8x128xf32>
    %247 = arith.negf %246 : vector<8x128xf32>
    %248 = math.exp %247 : vector<8x128xf32>
    %cst_138 = arith.constant 1.000000e+00 : f32
    %249 = vector.broadcast %cst_138 : f32 to vector<8x128xf32>
    %250 = arith.addf %249, %248 : vector<8x128xf32>
    %251 = arith.divf %249, %250 : vector<8x128xf32>
    %252 = vector.extract_strided_slice %239 {offsets = [0, 256], sizes = [8, 128], strides = [1, 1]} : vector<8x512xf32> to vector<8x128xf32>
    %253 = math.tanh %252 : vector<8x128xf32>
    %254 = vector.extract_strided_slice %239 {offsets = [0, 384], sizes = [8, 128], strides = [1, 1]} : vector<8x512xf32> to vector<8x128xf32>
    %255 = arith.negf %254 : vector<8x128xf32>
    %256 = math.exp %255 : vector<8x128xf32>
    %cst_139 = arith.constant 1.000000e+00 : f32
    %257 = vector.broadcast %cst_139 : f32 to vector<8x128xf32>
    %258 = arith.addf %257, %256 : vector<8x128xf32>
    %259 = arith.divf %257, %258 : vector<8x128xf32>
    %260 = arith.mulf %251, %235 : vector<8x128xf32>
    %261 = arith.mulf %245, %253 : vector<8x128xf32>
    %262 = arith.addf %260, %261 : vector<8x128xf32>
    %263 = math.tanh %262 : vector<8x128xf32>
    %264 = arith.mulf %259, %263 : vector<8x128xf32>
    %c0_140 = arith.constant 0 : index
    %c0_141 = arith.constant 0 : index
    %c0_142 = arith.constant 0 : index
    %265 = vector.load %arg2[%c0_140, %c0_141, %c0_142] : memref<4x8x128xf32, #tpu.memory_space<vmem>>, vector<1x8x128xf32>
    %266 = vector.shape_cast %265 : vector<1x8x128xf32> to vector<8x128xf32>
    %267 = arith.subf %264, %233 : vector<8x128xf32>
    %268 = arith.mulf %266, %267 : vector<8x128xf32>
    %269 = arith.addf %233, %268 : vector<8x128xf32>
    %c1_143 = arith.constant 1 : index
    %c0_144 = arith.constant 0 : index
    %c0_145 = arith.constant 0 : index
    %270 = vector.load %arg13[%c1_143, %c0_144, %c0_145] : memref<2x8x128xf32, #tpu.memory_space<vmem>>, vector<1x8x128xf32>
    %271 = vector.shape_cast %270 : vector<1x8x128xf32> to vector<8x128xf32>
    %272 = vector.shape_cast %269 : vector<8x128xf32> to vector<1x8x128xf32>
    tpu.vector_store %arg13[%c1_143, %c0_144, %c0_145], %272 {strides = array<i32>} : memref<2x8x128xf32, #tpu.memory_space<vmem>>, vector<1x8x128xf32>,
    %273 = arith.subf %262, %235 : vector<8x128xf32>
    %274 = arith.mulf %266, %273 : vector<8x128xf32>
    %275 = arith.addf %235, %274 : vector<8x128xf32>
    %c1_146 = arith.constant 1 : index
    %c0_147 = arith.constant 0 : index
    %c0_148 = arith.constant 0 : index
    %276 = vector.load %arg14[%c1_146, %c0_147, %c0_148] : memref<2x8x128xf32, #tpu.memory_space<vmem>>, vector<1x8x128xf32>
    %277 = vector.shape_cast %276 : vector<1x8x128xf32> to vector<8x128xf32>
    %278 = vector.shape_cast %275 : vector<8x128xf32> to vector<1x8x128xf32>
    tpu.vector_store %arg14[%c1_146, %c0_147, %c0_148], %278 {strides = array<i32>} : memref<2x8x128xf32, #tpu.memory_space<vmem>>, vector<1x8x128xf32>,
    %279 = arith.mulf %266, %264 : vector<8x128xf32>
    %c0_149 = arith.constant 0 : index
    %c0_150 = arith.constant 0 : index
    %c0_151 = arith.constant 0 : index
    %280 = vector.load %arg11[%c0_149, %c0_150, %c0_151] : memref<4x8x128xf32, #tpu.memory_space<vmem>>, vector<1x8x128xf32>
    %281 = vector.shape_cast %280 : vector<1x8x128xf32> to vector<8x128xf32>
    %282 = vector.shape_cast %279 : vector<8x128xf32> to vector<1x8x128xf32>
    tpu.vector_store %arg11[%c0_149, %c0_150, %c0_151], %282 {strides = array<i32>} : memref<4x8x128xf32, #tpu.memory_space<vmem>>, vector<1x8x128xf32>,
    %c1_152 = arith.constant 1 : index
    %c0_153 = arith.constant 0 : index
    %c0_154 = arith.constant 0 : index
    %283 = vector.load %arg13[%c1_152, %c0_153, %c0_154] : memref<2x8x128xf32, #tpu.memory_space<vmem>>, vector<1x8x128xf32>
    %284 = vector.shape_cast %283 : vector<1x8x128xf32> to vector<8x128xf32>
    %c1_155 = arith.constant 1 : index
    %c0_156 = arith.constant 0 : index
    %c0_157 = arith.constant 0 : index
    %285 = vector.load %arg14[%c1_155, %c0_156, %c0_157] : memref<2x8x128xf32, #tpu.memory_space<vmem>>, vector<1x8x128xf32>
    %286 = vector.shape_cast %285 : vector<1x8x128xf32> to vector<8x128xf32>
    %c1_158 = arith.constant 1 : index
    %c0_159 = arith.constant 0 : index
    %c0_160 = arith.constant 0 : index
    %287 = vector.load %arg12[%c1_158, %c0_159, %c0_160] : memref<4x8x512xf32, #tpu.memory_space<vmem>>, vector<1x8x512xf32>
    %288 = vector.shape_cast %287 : vector<1x8x512xf32> to vector<8x512xf32>
    %cst_161 = arith.constant dense<0.000000e+00> : vector<8x512xf32>
    %289 = tpu.matmul %284, %223, %cst_161 {dimension_numbers = #tpu.dot_dimension_numbers<[1], [0], [0], [1], [0, 0, 1, 1], [], []>} : vector<8x128xf32>, vector<128x512xf32>, vector<8x512xf32> -> vector<8x512xf32>
    %290 = arith.addf %288, %289 : vector<8x512xf32>
    %291 = vector.extract_strided_slice %290 {offsets = [0, 0], sizes = [8, 128], strides = [1, 1]} : vector<8x512xf32> to vector<8x128xf32>
    %292 = arith.negf %291 : vector<8x128xf32>
    %293 = math.exp %292 : vector<8x128xf32>
    %cst_162 = arith.constant 1.000000e+00 : f32
    %294 = vector.broadcast %cst_162 : f32 to vector<8x128xf32>
    %295 = arith.addf %294, %293 : vector<8x128xf32>
    %296 = arith.divf %294, %295 : vector<8x128xf32>
    %297 = vector.extract_strided_slice %290 {offsets = [0, 128], sizes = [8, 128], strides = [1, 1]} : vector<8x512xf32> to vector<8x128xf32>
    %298 = arith.negf %297 : vector<8x128xf32>
    %299 = math.exp %298 : vector<8x128xf32>
    %cst_163 = arith.constant 1.000000e+00 : f32
    %300 = vector.broadcast %cst_163 : f32 to vector<8x128xf32>
    %301 = arith.addf %300, %299 : vector<8x128xf32>
    %302 = arith.divf %300, %301 : vector<8x128xf32>
    %303 = vector.extract_strided_slice %290 {offsets = [0, 256], sizes = [8, 128], strides = [1, 1]} : vector<8x512xf32> to vector<8x128xf32>
    %304 = math.tanh %303 : vector<8x128xf32>
    %305 = vector.extract_strided_slice %290 {offsets = [0, 384], sizes = [8, 128], strides = [1, 1]} : vector<8x512xf32> to vector<8x128xf32>
    %306 = arith.negf %305 : vector<8x128xf32>
    %307 = math.exp %306 : vector<8x128xf32>
    %cst_164 = arith.constant 1.000000e+00 : f32
    %308 = vector.broadcast %cst_164 : f32 to vector<8x128xf32>
    %309 = arith.addf %308, %307 : vector<8x128xf32>
    %310 = arith.divf %308, %309 : vector<8x128xf32>
    %311 = arith.mulf %302, %286 : vector<8x128xf32>
    %312 = arith.mulf %296, %304 : vector<8x128xf32>
    %313 = arith.addf %311, %312 : vector<8x128xf32>
    %314 = math.tanh %313 : vector<8x128xf32>
    %315 = arith.mulf %310, %314 : vector<8x128xf32>
    %c1_165 = arith.constant 1 : index
    %c0_166 = arith.constant 0 : index
    %c0_167 = arith.constant 0 : index
    %316 = vector.load %arg2[%c1_165, %c0_166, %c0_167] : memref<4x8x128xf32, #tpu.memory_space<vmem>>, vector<1x8x128xf32>
    %317 = vector.shape_cast %316 : vector<1x8x128xf32> to vector<8x128xf32>
    %318 = arith.subf %315, %284 : vector<8x128xf32>
    %319 = arith.mulf %317, %318 : vector<8x128xf32>
    %320 = arith.addf %284, %319 : vector<8x128xf32>
    %c1_168 = arith.constant 1 : index
    %c0_169 = arith.constant 0 : index
    %c0_170 = arith.constant 0 : index
    %321 = vector.load %arg13[%c1_168, %c0_169, %c0_170] : memref<2x8x128xf32, #tpu.memory_space<vmem>>, vector<1x8x128xf32>
    %322 = vector.shape_cast %321 : vector<1x8x128xf32> to vector<8x128xf32>
    %323 = vector.shape_cast %320 : vector<8x128xf32> to vector<1x8x128xf32>
    tpu.vector_store %arg13[%c1_168, %c0_169, %c0_170], %323 {strides = array<i32>} : memref<2x8x128xf32, #tpu.memory_space<vmem>>, vector<1x8x128xf32>,
    %324 = arith.subf %313, %286 : vector<8x128xf32>
    %325 = arith.mulf %317, %324 : vector<8x128xf32>
    %326 = arith.addf %286, %325 : vector<8x128xf32>
    %c1_171 = arith.constant 1 : index
    %c0_172 = arith.constant 0 : index
    %c0_173 = arith.constant 0 : index
    %327 = vector.load %arg14[%c1_171, %c0_172, %c0_173] : memref<2x8x128xf32, #tpu.memory_space<vmem>>, vector<1x8x128xf32>
    %328 = vector.shape_cast %327 : vector<1x8x128xf32> to vector<8x128xf32>
    %329 = vector.shape_cast %326 : vector<8x128xf32> to vector<1x8x128xf32>
    tpu.vector_store %arg14[%c1_171, %c0_172, %c0_173], %329 {strides = array<i32>} : memref<2x8x128xf32, #tpu.memory_space<vmem>>, vector<1x8x128xf32>,
    %330 = arith.mulf %317, %315 : vector<8x128xf32>
    %c1_174 = arith.constant 1 : index
    %c0_175 = arith.constant 0 : index
    %c0_176 = arith.constant 0 : index
    %331 = vector.load %arg11[%c1_174, %c0_175, %c0_176] : memref<4x8x128xf32, #tpu.memory_space<vmem>>, vector<1x8x128xf32>
    %332 = vector.shape_cast %331 : vector<1x8x128xf32> to vector<8x128xf32>
    %333 = vector.shape_cast %330 : vector<8x128xf32> to vector<1x8x128xf32>
    tpu.vector_store %arg11[%c1_174, %c0_175, %c0_176], %333 {strides = array<i32>} : memref<4x8x128xf32, #tpu.memory_space<vmem>>, vector<1x8x128xf32>,
    %c1_177 = arith.constant 1 : index
    %c0_178 = arith.constant 0 : index
    %c0_179 = arith.constant 0 : index
    %334 = vector.load %arg13[%c1_177, %c0_178, %c0_179] : memref<2x8x128xf32, #tpu.memory_space<vmem>>, vector<1x8x128xf32>
    %335 = vector.shape_cast %334 : vector<1x8x128xf32> to vector<8x128xf32>
    %c1_180 = arith.constant 1 : index
    %c0_181 = arith.constant 0 : index
    %c0_182 = arith.constant 0 : index
    %336 = vector.load %arg14[%c1_180, %c0_181, %c0_182] : memref<2x8x128xf32, #tpu.memory_space<vmem>>, vector<1x8x128xf32>
    %337 = vector.shape_cast %336 : vector<1x8x128xf32> to vector<8x128xf32>
    %c2_183 = arith.constant 2 : index
    %c0_184 = arith.constant 0 : index
    %c0_185 = arith.constant 0 : index
    %338 = vector.load %arg12[%c2_183, %c0_184, %c0_185] : memref<4x8x512xf32, #tpu.memory_space<vmem>>, vector<1x8x512xf32>
    %339 = vector.shape_cast %338 : vector<1x8x512xf32> to vector<8x512xf32>
    %cst_186 = arith.constant dense<0.000000e+00> : vector<8x512xf32>
    %340 = tpu.matmul %335, %223, %cst_186 {dimension_numbers = #tpu.dot_dimension_numbers<[1], [0], [0], [1], [0, 0, 1, 1], [], []>} : vector<8x128xf32>, vector<128x512xf32>, vector<8x512xf32> -> vector<8x512xf32>
    %341 = arith.addf %339, %340 : vector<8x512xf32>
    %342 = vector.extract_strided_slice %341 {offsets = [0, 0], sizes = [8, 128], strides = [1, 1]} : vector<8x512xf32> to vector<8x128xf32>
    %343 = arith.negf %342 : vector<8x128xf32>
    %344 = math.exp %343 : vector<8x128xf32>
    %cst_187 = arith.constant 1.000000e+00 : f32
    %345 = vector.broadcast %cst_187 : f32 to vector<8x128xf32>
    %346 = arith.addf %345, %344 : vector<8x128xf32>
    %347 = arith.divf %345, %346 : vector<8x128xf32>
    %348 = vector.extract_strided_slice %341 {offsets = [0, 128], sizes = [8, 128], strides = [1, 1]} : vector<8x512xf32> to vector<8x128xf32>
    %349 = arith.negf %348 : vector<8x128xf32>
    %350 = math.exp %349 : vector<8x128xf32>
    %cst_188 = arith.constant 1.000000e+00 : f32
    %351 = vector.broadcast %cst_188 : f32 to vector<8x128xf32>
    %352 = arith.addf %351, %350 : vector<8x128xf32>
    %353 = arith.divf %351, %352 : vector<8x128xf32>
    %354 = vector.extract_strided_slice %341 {offsets = [0, 256], sizes = [8, 128], strides = [1, 1]} : vector<8x512xf32> to vector<8x128xf32>
    %355 = math.tanh %354 : vector<8x128xf32>
    %356 = vector.extract_strided_slice %341 {offsets = [0, 384], sizes = [8, 128], strides = [1, 1]} : vector<8x512xf32> to vector<8x128xf32>
    %357 = arith.negf %356 : vector<8x128xf32>
    %358 = math.exp %357 : vector<8x128xf32>
    %cst_189 = arith.constant 1.000000e+00 : f32
    %359 = vector.broadcast %cst_189 : f32 to vector<8x128xf32>
    %360 = arith.addf %359, %358 : vector<8x128xf32>
    %361 = arith.divf %359, %360 : vector<8x128xf32>
    %362 = arith.mulf %353, %337 : vector<8x128xf32>
    %363 = arith.mulf %347, %355 : vector<8x128xf32>
    %364 = arith.addf %362, %363 : vector<8x128xf32>
    %365 = math.tanh %364 : vector<8x128xf32>
    %366 = arith.mulf %361, %365 : vector<8x128xf32>
    %c2_190 = arith.constant 2 : index
    %c0_191 = arith.constant 0 : index
    %c0_192 = arith.constant 0 : index
    %367 = vector.load %arg2[%c2_190, %c0_191, %c0_192] : memref<4x8x128xf32, #tpu.memory_space<vmem>>, vector<1x8x128xf32>
    %368 = vector.shape_cast %367 : vector<1x8x128xf32> to vector<8x128xf32>
    %369 = arith.subf %366, %335 : vector<8x128xf32>
    %370 = arith.mulf %368, %369 : vector<8x128xf32>
    %371 = arith.addf %335, %370 : vector<8x128xf32>
    %c1_193 = arith.constant 1 : index
    %c0_194 = arith.constant 0 : index
    %c0_195 = arith.constant 0 : index
    %372 = vector.load %arg13[%c1_193, %c0_194, %c0_195] : memref<2x8x128xf32, #tpu.memory_space<vmem>>, vector<1x8x128xf32>
    %373 = vector.shape_cast %372 : vector<1x8x128xf32> to vector<8x128xf32>
    %374 = vector.shape_cast %371 : vector<8x128xf32> to vector<1x8x128xf32>
    tpu.vector_store %arg13[%c1_193, %c0_194, %c0_195], %374 {strides = array<i32>} : memref<2x8x128xf32, #tpu.memory_space<vmem>>, vector<1x8x128xf32>,
    %375 = arith.subf %364, %337 : vector<8x128xf32>
    %376 = arith.mulf %368, %375 : vector<8x128xf32>
    %377 = arith.addf %337, %376 : vector<8x128xf32>
    %c1_196 = arith.constant 1 : index
    %c0_197 = arith.constant 0 : index
    %c0_198 = arith.constant 0 : index
    %378 = vector.load %arg14[%c1_196, %c0_197, %c0_198] : memref<2x8x128xf32, #tpu.memory_space<vmem>>, vector<1x8x128xf32>
    %379 = vector.shape_cast %378 : vector<1x8x128xf32> to vector<8x128xf32>
    %380 = vector.shape_cast %377 : vector<8x128xf32> to vector<1x8x128xf32>
    tpu.vector_store %arg14[%c1_196, %c0_197, %c0_198], %380 {strides = array<i32>} : memref<2x8x128xf32, #tpu.memory_space<vmem>>, vector<1x8x128xf32>,
    %381 = arith.mulf %368, %366 : vector<8x128xf32>
    %c2_199 = arith.constant 2 : index
    %c0_200 = arith.constant 0 : index
    %c0_201 = arith.constant 0 : index
    %382 = vector.load %arg11[%c2_199, %c0_200, %c0_201] : memref<4x8x128xf32, #tpu.memory_space<vmem>>, vector<1x8x128xf32>
    %383 = vector.shape_cast %382 : vector<1x8x128xf32> to vector<8x128xf32>
    %384 = vector.shape_cast %381 : vector<8x128xf32> to vector<1x8x128xf32>
    tpu.vector_store %arg11[%c2_199, %c0_200, %c0_201], %384 {strides = array<i32>} : memref<4x8x128xf32, #tpu.memory_space<vmem>>, vector<1x8x128xf32>,
    %c1_202 = arith.constant 1 : index
    %c0_203 = arith.constant 0 : index
    %c0_204 = arith.constant 0 : index
    %385 = vector.load %arg13[%c1_202, %c0_203, %c0_204] : memref<2x8x128xf32, #tpu.memory_space<vmem>>, vector<1x8x128xf32>
    %386 = vector.shape_cast %385 : vector<1x8x128xf32> to vector<8x128xf32>
    %c1_205 = arith.constant 1 : index
    %c0_206 = arith.constant 0 : index
    %c0_207 = arith.constant 0 : index
    %387 = vector.load %arg14[%c1_205, %c0_206, %c0_207] : memref<2x8x128xf32, #tpu.memory_space<vmem>>, vector<1x8x128xf32>
    %388 = vector.shape_cast %387 : vector<1x8x128xf32> to vector<8x128xf32>
    %c3_208 = arith.constant 3 : index
    %c0_209 = arith.constant 0 : index
    %c0_210 = arith.constant 0 : index
    %389 = vector.load %arg12[%c3_208, %c0_209, %c0_210] : memref<4x8x512xf32, #tpu.memory_space<vmem>>, vector<1x8x512xf32>
    %390 = vector.shape_cast %389 : vector<1x8x512xf32> to vector<8x512xf32>
    %cst_211 = arith.constant dense<0.000000e+00> : vector<8x512xf32>
    %391 = tpu.matmul %386, %223, %cst_211 {dimension_numbers = #tpu.dot_dimension_numbers<[1], [0], [0], [1], [0, 0, 1, 1], [], []>} : vector<8x128xf32>, vector<128x512xf32>, vector<8x512xf32> -> vector<8x512xf32>
    %392 = arith.addf %390, %391 : vector<8x512xf32>
    %393 = vector.extract_strided_slice %392 {offsets = [0, 0], sizes = [8, 128], strides = [1, 1]} : vector<8x512xf32> to vector<8x128xf32>
    %394 = arith.negf %393 : vector<8x128xf32>
    %395 = math.exp %394 : vector<8x128xf32>
    %cst_212 = arith.constant 1.000000e+00 : f32
    %396 = vector.broadcast %cst_212 : f32 to vector<8x128xf32>
    %397 = arith.addf %396, %395 : vector<8x128xf32>
    %398 = arith.divf %396, %397 : vector<8x128xf32>
    %399 = vector.extract_strided_slice %392 {offsets = [0, 128], sizes = [8, 128], strides = [1, 1]} : vector<8x512xf32> to vector<8x128xf32>
    %400 = arith.negf %399 : vector<8x128xf32>
    %401 = math.exp %400 : vector<8x128xf32>
    %cst_213 = arith.constant 1.000000e+00 : f32
    %402 = vector.broadcast %cst_213 : f32 to vector<8x128xf32>
    %403 = arith.addf %402, %401 : vector<8x128xf32>
    %404 = arith.divf %402, %403 : vector<8x128xf32>
    %405 = vector.extract_strided_slice %392 {offsets = [0, 256], sizes = [8, 128], strides = [1, 1]} : vector<8x512xf32> to vector<8x128xf32>
    %406 = math.tanh %405 : vector<8x128xf32>
    %407 = vector.extract_strided_slice %392 {offsets = [0, 384], sizes = [8, 128], strides = [1, 1]} : vector<8x512xf32> to vector<8x128xf32>
    %408 = arith.negf %407 : vector<8x128xf32>
    %409 = math.exp %408 : vector<8x128xf32>
    %cst_214 = arith.constant 1.000000e+00 : f32
    %410 = vector.broadcast %cst_214 : f32 to vector<8x128xf32>
    %411 = arith.addf %410, %409 : vector<8x128xf32>
    %412 = arith.divf %410, %411 : vector<8x128xf32>
    %413 = arith.mulf %404, %388 : vector<8x128xf32>
    %414 = arith.mulf %398, %406 : vector<8x128xf32>
    %415 = arith.addf %413, %414 : vector<8x128xf32>
    %416 = math.tanh %415 : vector<8x128xf32>
    %417 = arith.mulf %412, %416 : vector<8x128xf32>
    %c3_215 = arith.constant 3 : index
    %c0_216 = arith.constant 0 : index
    %c0_217 = arith.constant 0 : index
    %418 = vector.load %arg2[%c3_215, %c0_216, %c0_217] : memref<4x8x128xf32, #tpu.memory_space<vmem>>, vector<1x8x128xf32>
    %419 = vector.shape_cast %418 : vector<1x8x128xf32> to vector<8x128xf32>
    %420 = arith.subf %417, %386 : vector<8x128xf32>
    %421 = arith.mulf %419, %420 : vector<8x128xf32>
    %422 = arith.addf %386, %421 : vector<8x128xf32>
    %c1_218 = arith.constant 1 : index
    %c0_219 = arith.constant 0 : index
    %c0_220 = arith.constant 0 : index
    %423 = vector.load %arg13[%c1_218, %c0_219, %c0_220] : memref<2x8x128xf32, #tpu.memory_space<vmem>>, vector<1x8x128xf32>
    %424 = vector.shape_cast %423 : vector<1x8x128xf32> to vector<8x128xf32>
    %425 = vector.shape_cast %422 : vector<8x128xf32> to vector<1x8x128xf32>
    tpu.vector_store %arg13[%c1_218, %c0_219, %c0_220], %425 {strides = array<i32>} : memref<2x8x128xf32, #tpu.memory_space<vmem>>, vector<1x8x128xf32>,
    %426 = arith.subf %415, %388 : vector<8x128xf32>
    %427 = arith.mulf %419, %426 : vector<8x128xf32>
    %428 = arith.addf %388, %427 : vector<8x128xf32>
    %c1_221 = arith.constant 1 : index
    %c0_222 = arith.constant 0 : index
    %c0_223 = arith.constant 0 : index
    %429 = vector.load %arg14[%c1_221, %c0_222, %c0_223] : memref<2x8x128xf32, #tpu.memory_space<vmem>>, vector<1x8x128xf32>
    %430 = vector.shape_cast %429 : vector<1x8x128xf32> to vector<8x128xf32>
    %431 = vector.shape_cast %428 : vector<8x128xf32> to vector<1x8x128xf32>
    tpu.vector_store %arg14[%c1_221, %c0_222, %c0_223], %431 {strides = array<i32>} : memref<2x8x128xf32, #tpu.memory_space<vmem>>, vector<1x8x128xf32>,
    %432 = arith.mulf %419, %417 : vector<8x128xf32>
    %c3_224 = arith.constant 3 : index
    %c0_225 = arith.constant 0 : index
    %c0_226 = arith.constant 0 : index
    %433 = vector.load %arg11[%c3_224, %c0_225, %c0_226] : memref<4x8x128xf32, #tpu.memory_space<vmem>>, vector<1x8x128xf32>
    %434 = vector.shape_cast %433 : vector<1x8x128xf32> to vector<8x128xf32>
    %435 = vector.shape_cast %432 : vector<8x128xf32> to vector<1x8x128xf32>
    tpu.vector_store %arg11[%c3_224, %c0_225, %c0_226], %435 {strides = array<i32>} : memref<4x8x128xf32, #tpu.memory_space<vmem>>, vector<1x8x128xf32>,
    %c0_227 = arith.constant 0 : index
    %c0_228 = arith.constant 0 : index
    %c0_229 = arith.constant 0 : index
    %436 = vector.load %arg11[%c0_227, %c0_228, %c0_229] : memref<4x8x128xf32, #tpu.memory_space<vmem>>, vector<4x8x128xf32>
    %437 = vector.shape_cast %436 : vector<4x8x128xf32> to vector<32x128xf32>
    %c0_230 = arith.constant 0 : index
    %c0_231 = arith.constant 0 : index
    %438 = vector.load %arg8[%c0_230, %c0_231] : memref<128x128xf32, #tpu.memory_space<vmem>>, vector<128x128xf32>
    %cst_232 = arith.constant dense<0.000000e+00> : vector<32x128xf32>
    %439 = tpu.matmul %437, %438, %cst_232 {dimension_numbers = #tpu.dot_dimension_numbers<[1], [0], [0], [1], [0, 0, 1, 1], [], []>} : vector<32x128xf32>, vector<128x128xf32>, vector<32x128xf32> -> vector<32x128xf32>
    %c0_233 = arith.constant 0 : index
    %c0_234 = arith.constant 0 : index
    %440 = vector.load %arg9[%c0_233, %c0_234] : memref<1x128xf32, #tpu.memory_space<vmem>>, vector<1x128xf32>
    %441 = vector.broadcast %440 : vector<1x128xf32> to vector<32x128xf32>
    %442 = arith.addf %439, %441 : vector<32x128xf32>
    %443 = vector.shape_cast %442 : vector<32x128xf32> to vector<4x8x128xf32>
    %c0_235 = arith.constant 0 : index
    %c0_236 = arith.constant 0 : index
    %444 = vector.load %arg3[%c0_235, %c0_236] : memref<8x128xf32, #tpu.memory_space<vmem>>, vector<8x128xf32>
    %445 = vector.shape_cast %444 : vector<8x128xf32> to vector<1x8x128xf32>
    %446 = vector.broadcast %445 : vector<1x8x128xf32> to vector<4x8x128xf32>
    %447 = arith.addf %443, %446 : vector<4x8x128xf32>
    %cst_237 = arith.constant dense<0xFF800000> : vector<4x128xf32>
    %448 = vector.multi_reduction <maximumf>, %447, %cst_237 [1] : vector<4x8x128xf32> to vector<4x128xf32>
    %449 = vector.shape_cast %448 : vector<4x128xf32> to vector<4x1x128xf32>
    %450 = vector.broadcast %449 : vector<4x1x128xf32> to vector<4x8x128xf32>
    %451 = arith.subf %447, %450 : vector<4x8x128xf32>
    %452 = math.exp %451 : vector<4x8x128xf32>
    %cst_238 = arith.constant dense<0.000000e+00> : vector<4x128xf32>
    %453 = vector.multi_reduction <add>, %452, %cst_238 [1] : vector<4x8x128xf32> to vector<4x128xf32>
    %454 = vector.shape_cast %453 : vector<4x128xf32> to vector<4x1x128xf32>
    %455 = math.log %454 : vector<4x1x128xf32>
    %456 = arith.addf %455, %449 : vector<4x1x128xf32>
    %457 = vector.broadcast %456 : vector<4x1x128xf32> to vector<4x8x128xf32>
    %458 = arith.subf %443, %457 : vector<4x8x128xf32>
    %c0_239 = arith.constant 0 : index
    %c0_240 = arith.constant 0 : index
    %c0_241 = arith.constant 0 : index
    %459 = vector.load %arg10[%c0_239, %c0_240, %c0_241] : memref<4x8x128xf32, #tpu.memory_space<vmem>>, vector<4x8x128xf32>
    tpu.vector_store %arg10[%c0_239, %c0_240, %c0_241], %458 {strides = array<i32>} : memref<4x8x128xf32, #tpu.memory_space<vmem>>, vector<4x8x128xf32>,
    return
  }
  func.func @transform_0(%arg0: i32) -> (i32, i32, i32) {
    %c0_i32 = arith.constant 0 : i32
    %c0_i32_0 = arith.constant 0 : i32
    %c0_i32_1 = arith.constant 0 : i32
    return %arg0, %c0_i32, %c0_i32_0 : i32, i32, i32
  }
  func.func @transform_1(%arg0: i32) -> (i32, i32, i32) {
    %c0_i32 = arith.constant 0 : i32
    %c0_i32_0 = arith.constant 0 : i32
    %c0_i32_1 = arith.constant 0 : i32
    return %arg0, %c0_i32, %c0_i32_0 : i32, i32, i32
  }
  func.func @transform_2(%arg0: i32) -> (i32, i32) {
    %c0_i32 = arith.constant 0 : i32
    %c0_i32_0 = arith.constant 0 : i32
    %c0_i32_1 = arith.constant 0 : i32
    return %c0_i32, %c0_i32_0 : i32, i32
  }
  func.func @transform_3(%arg0: i32) -> (i32, i32) {
    %c0_i32 = arith.constant 0 : i32
    %c0_i32_0 = arith.constant 0 : i32
    %c0_i32_1 = arith.constant 0 : i32
    return %c0_i32, %c0_i32_0 : i32, i32
  }
  func.func @transform_4(%arg0: i32) -> (i32, i32, i32) {
    %c0_i32 = arith.constant 0 : i32
    %c0_i32_0 = arith.constant 0 : i32
    %c0_i32_1 = arith.constant 0 : i32
    %c0_i32_2 = arith.constant 0 : i32
    return %c0_i32, %c0_i32_0, %c0_i32_1 : i32, i32, i32
  }
  func.func @transform_5(%arg0: i32) -> (i32, i32, i32) {
    %c0_i32 = arith.constant 0 : i32
    %c0_i32_0 = arith.constant 0 : i32
    %c0_i32_1 = arith.constant 0 : i32
    %c0_i32_2 = arith.constant 0 : i32
    return %c0_i32, %c0_i32_0, %c0_i32_1 : i32, i32, i32
  }
  func.func @transform_6(%arg0: i32) -> (i32, i32, i32) {
    %c0_i32 = arith.constant 0 : i32
    %c0_i32_0 = arith.constant 0 : i32
    %c0_i32_1 = arith.constant 0 : i32
    %c0_i32_2 = arith.constant 0 : i32
    return %c0_i32, %c0_i32_0, %c0_i32_1 : i32, i32, i32
  }
  func.func @transform_7(%arg0: i32) -> (i32, i32) {
    %c0_i32 = arith.constant 0 : i32
    %c0_i32_0 = arith.constant 0 : i32
    %c0_i32_1 = arith.constant 0 : i32
    return %c0_i32, %c0_i32_0 : i32, i32
  }
  func.func @transform_8(%arg0: i32) -> (i32, i32) {
    %c0_i32 = arith.constant 0 : i32
    %c0_i32_0 = arith.constant 0 : i32
    %c0_i32_1 = arith.constant 0 : i32
    return %c0_i32, %c0_i32_0 : i32, i32
  }
  func.func @transform_9(%arg0: i32) -> (i32, i32, i32) {
    %c0_i32 = arith.constant 0 : i32
    %c0_i32_0 = arith.constant 0 : i32
    %c0_i32_1 = arith.constant 0 : i32
    return %arg0, %c0_i32, %c0_i32_0 : i32, i32, i32
  }
}

</mosaic_0001>

<llo_original>
// kernel: lstm_tagger_forward.1
$region0: #{lstm_tagger_forward.1}
  #allocation0 [shape = 'u32[]', space=smem, size = 0x4, offset = 0x4, fixed_abs, tag = 'smem constant byte address 0x4 - core index']
  #allocation1 [shape = 'u32[144,128]{1,0:T(1,128)}', space=vmem, size = 0x12000, scoped, tag = 'internal scratch']
  #allocation2 [shape = 'f32[4,8,128]{2,1,0:T(8,128)}', space=vmem, size = 0x4000, scoped, tag = 'scratch operand']
  #allocation3 [shape = 'f32[4,8,512]{2,1,0:T(8,128)}', space=vmem, size = 0x10000, scoped, tag = 'scratch operand']
  #allocation4 [shape = 'f32[2,8,128]{2,1,0:T(8,128)}', space=vmem, size = 0x2000, scoped, tag = 'scratch operand']
  #allocation5 [shape = 'f32[2,8,128]{2,1,0:T(8,128)}', space=vmem, size = 0x2000, scoped, tag = 'scratch operand']
  %s0 = inlined_call_operand.vmem [shape: f32[8,8,128], index: 0, kind: input, shape index: {}]
  %s1 = inlined_call_operand.vmem [shape: f32[8,8,128], index: 1, kind: input, shape index: {}]
  %s2 = inlined_call_operand.vmem [shape: f32[8,128], index: 2, kind: input, shape index: {}]
  %s3 = inlined_call_operand.vmem [shape: f32[128,512], index: 3, kind: input, shape index: {}]
  %s4 = inlined_call_operand.hbm [shape: f32[1,128,512], index: 4, kind: input, shape index: {}]
  %s5 = inlined_call_operand.hbm [shape: f32[2,128,512], index: 5, kind: input, shape index: {}]
  %s6 = inlined_call_operand.vmem [shape: f32[2,1,512], index: 6, kind: input, shape index: {}]
  %s7 = inlined_call_operand.vmem [shape: f32[128,128], index: 7, kind: input, shape index: {}]
  %s8 = inlined_call_operand.vmem [shape: f32[1,128], index: 8, kind: input, shape index: {}]
  %s9 = inlined_call_operand.vmem [shape: f32[8,8,128], index: 9, kind: output, shape index: {}]
  %s10 = sld [smem:[#allocation0]]
  $region81: #{lstm_tagger_forward.1} parent=0
    _
  %s12 = ssub.s32 1, %s10
  %s13 = scalar_select 0, %s12, %s10
  $region1: #{lstm_tagger_forward.1} parent=0
    #allocation6 [shape = 'u8[262144]{0}', space=vmem, size = 0x40000, scoped, tag = 'input window, operand 4, single buffered']
    #allocation7 [shape = 's32[2]{0}', space=sflag, size = 0x8, scoped, tag = 'scoped memory for lstm_tagger_forward.1']
    #allocation8 [shape = 'u8[524288]{0}', space=vmem, size = 0x80000, scoped, tag = 'input window, operand 5, single buffered']
    #allocation9 [shape = 's32[1]{0}', space=sflag, size = 0x4, scoped, tag = 'scoped memory for lstm_tagger_forward.1']
    %14 = vsyncpa [#allocation7], 0
    %15 = vsyncpa [#allocation9], 0
    loop: start=0, step=1, limit=4
    $region2: #{lstm_tagger_forward.1} parent=1 // loop_pre_header
      _
    $region3: #{lstm_tagger_forward.1} parent=1 // loop_header
      %s17 = sphi 0, %s21
      %p18 = scmp.ge.s32.totalorder %s17, 4
      %s27 = sphi 0, %s29
      %s30 = sphi 0, %s27
      %s31 = sphi 0, %s30
      %s47 = sphi 0, %s31
      %s53 = sphi 0, %s55
      %s56 = sphi 0, %s53
      %s57 = sphi 0, %s56
      %s73 = sphi 0, %s57
      %s77 = sphi 0, %s77
      %s79 = sphi 0, %s77
      %s80 = sphi 0, %s79
      %s94 = sphi 0, %s80
      %s98 = sphi 0, %s98
      %s100 = sphi 0, %s98
      %s101 = sphi 0, %s100
      %s115 = sphi 0, %s101
      %s119 = sphi 0, %s119
      %s121 = sphi 0, %s119
      %s122 = sphi 0, %s121
      %s136 = sphi 0, %s122
      %s140 = sphi 0, %s140
      %s142 = sphi 0, %s140
      %s143 = sphi 0, %s142
      %s157 = sphi 0, %s143
      %s161 = sphi 0, %s161
      %s163 = sphi 0, %s161
      %s164 = sphi 0, %s163
      %s178 = sphi 0, %s164
      %s182 = sphi 0, %s182
      %s184 = sphi 0, %s182
      %s185 = sphi 0, %s184
      %s199 = sphi 0, %s185
      %s203 = sphi 0, %s203
      %s205 = sphi 0, %s203
      %s206 = sphi 0, %s205
      %s220 = sphi 0, %s206
      %s226 = sphi 0, %s228
      %s229 = sphi 0, %s226
      %s230 = sphi 0, %s229
      %s246 = sphi 0, %s230
    $region4: #{lstm_tagger_forward.1} parent=1 // loop_header_branch
      %20 = sbr.rel (%p18) target = $region8
    $region5: #{lstm_tagger_forward.1} parent=1 // loop_body
      %s22 = ssub.s32 %s17, 1
      %s23 = ssub.s32 %s17, 2
      %s24 = sadd.s32 %s17, 1
      %s25 = ssub.s32 %s17, %s24
      %p26 = scmp.eq.s32.totalorder %s25, 0
      %s28 = sadd.s32 %s27, 1
      %s29 = scalar_select %p26, %s27, %s28
      %p32 = pneg %p26
      %p33 = scmp.eq.s32.totalorder %s17, 1
      %p34 = por %p32, %p33
      %p35 = scmp.ne.s32.totalorder %s27, %s30
      %p36 = scmp.eq.s32.totalorder %s17, 0
      %p37 = por %p35, %p36
      %p38 = scmp.ne.s32.totalorder %s27, %s30
      %p39 = scmp.eq.s32.totalorder %s22, 1
      %p40 = por %p38, %p39
      %p41 = scmp.ne.s32.totalorder %s30, %s31
      %p42 = scmp.eq.s32.totalorder %s22, 0
      %p43 = por %p41, %p42
      %p44 = scmp.ne.s32.totalorder %s30, %s31
      %p45 = scmp.eq.s32.totalorder %s23, 1
      %p46 = por %p44, %p45
      %p48 = scmp.ne.s32.totalorder %s31, %s47
      %p49 = scmp.eq.s32.totalorder %s23, 0
      %p50 = por %p48, %p49
      %s51 = ssub.s32 %s17, %s24
      %p52 = scmp.eq.s32.totalorder %s51, 0
      %s54 = sadd.s32 %s53, 1
      %s55 = scalar_select %p52, %s53, %s54
      %p58 = pneg %p52
      %p59 = scmp.eq.s32.totalorder %s17, 1
      %p60 = por %p58, %p59
      %p61 = scmp.ne.s32.totalorder %s53, %s56
      %p62 = scmp.eq.s32.totalorder %s17, 0
      %p63 = por %p61, %p62
      %p64 = scmp.ne.s32.totalorder %s53, %s56
      %p65 = scmp.eq.s32.totalorder %s22, 1
      %p66 = por %p64, %p65
      %p67 = scmp.ne.s32.totalorder %s56, %s57
      %p68 = scmp.eq.s32.totalorder %s22, 0
      %p69 = por %p67, %p68
      %p70 = scmp.ne.s32.totalorder %s56, %s57
      %p71 = scmp.eq.s32.totalorder %s23, 1
      %p72 = por %p70, %p71
      %p74 = scmp.ne.s32.totalorder %s57, %s73
      %p75 = scmp.eq.s32.totalorder %s23, 0
      %p76 = por %p74, %p75
      %s78 = sadd.s32 %s77, 1
      %p81 = scmp.eq.s32.totalorder %s17, 1
      %p82 = scmp.ne.s32.totalorder %s77, %s79
      %p83 = scmp.eq.s32.totalorder %s17, 0
      %p84 = por %p82, %p83
      %p85 = scmp.ne.s32.totalorder %s77, %s79
      %p86 = scmp.eq.s32.totalorder %s22, 1
      %p87 = por %p85, %p86
      %p88 = scmp.ne.s32.totalorder %s79, %s80
      %p89 = scmp.eq.s32.totalorder %s22, 0
      %p90 = por %p88, %p89
      %p91 = scmp.ne.s32.totalorder %s79, %s80
      %p92 = scmp.eq.s32.totalorder %s23, 1
      %p93 = por %p91, %p92
      %p95 = scmp.ne.s32.totalorder %s80, %s94
      %p96 = scmp.eq.s32.totalorder %s23, 0
      %p97 = por %p95, %p96
      %s99 = sadd.s32 %s98, 1
      %p102 = scmp.eq.s32.totalorder %s17, 1
      %p103 = scmp.ne.s32.totalorder %s98, %s100
      %p104 = scmp.eq.s32.totalorder %s17, 0
      %p105 = por %p103, %p104
      %p106 = scmp.ne.s32.totalorder %s98, %s100
      %p107 = scmp.eq.s32.totalorder %s22, 1
      %p108 = por %p106, %p107
      %p109 = scmp.ne.s32.totalorder %s100, %s101
      %p110 = scmp.eq.s32.totalorder %s22, 0
      %p111 = por %p109, %p110
      %p112 = scmp.ne.s32.totalorder %s100, %s101
      %p113 = scmp.eq.s32.totalorder %s23, 1
      %p114 = por %p112, %p113
      %p116 = scmp.ne.s32.totalorder %s101, %s115
      %p117 = scmp.eq.s32.totalorder %s23, 0
      %p118 = por %p116, %p117
      %s120 = sadd.s32 %s119, 1
      %p123 = scmp.eq.s32.totalorder %s17, 1
      %p124 = scmp.ne.s32.totalorder %s119, %s121
      %p125 = scmp.eq.s32.totalorder %s17, 0
      %p126 = por %p124, %p125
      %p127 = scmp.ne.s32.totalorder %s119, %s121
      %p128 = scmp.eq.s32.totalorder %s22, 1
      %p129 = por %p127, %p128
      %p130 = scmp.ne.s32.totalorder %s121, %s122
      %p131 = scmp.eq.s32.totalorder %s22, 0
      %p132 = por %p130, %p131
      %p133 = scmp.ne.s32.totalorder %s121, %s122
      %p134 = scmp.eq.s32.totalorder %s23, 1
      %p135 = por %p133, %p134
      %p137 = scmp.ne.s32.totalorder %s122, %s136
      %p138 = scmp.eq.s32.totalorder %s23, 0
      %p139 = por %p137, %p138
      %s141 = sadd.s32 %s140, 1
      %p144 = scmp.eq.s32.totalorder %s17, 1
      %p145 = scmp.ne.s32.totalorder %s140, %s142
      %p146 = scmp.eq.s32.totalorder %s17, 0
      %p147 = por %p145, %p146
      %p148 = scmp.ne.s32.totalorder %s140, %s142
      %p149 = scmp.eq.s32.totalorder %s22, 1
      %p150 = por %p148, %p149
      %p151 = scmp.ne.s32.totalorder %s142, %s143
      %p152 = scmp.eq.s32.totalorder %s22, 0
      %p153 = por %p151, %p152
      %p154 = scmp.ne.s32.totalorder %s142, %s143
      %p155 = scmp.eq.s32.totalorder %s23, 1
      %p156 = por %p154, %p155
      %p158 = scmp.ne.s32.totalorder %s143, %s157
      %p159 = scmp.eq.s32.totalorder %s23, 0
      %p160 = por %p158, %p159
      %s162 = sadd.s32 %s161, 1
      %p165 = scmp.eq.s32.totalorder %s17, 1
      %p166 = scmp.ne.s32.totalorder %s161, %s163
      %p167 = scmp.eq.s32.totalorder %s17, 0
      %p168 = por %p166, %p167
      %p169 = scmp.ne.s32.totalorder %s161, %s163
      %p170 = scmp.eq.s32.totalorder %s22, 1
      %p171 = por %p169, %p170
      %p172 = scmp.ne.s32.totalorder %s163, %s164
      %p173 = scmp.eq.s32.totalorder %s22, 0
      %p174 = por %p172, %p173
      %p175 = scmp.ne.s32.totalorder %s163, %s164
      %p176 = scmp.eq.s32.totalorder %s23, 1
      %p177 = por %p175, %p176
      %p179 = scmp.ne.s32.totalorder %s164, %s178
      %p180 = scmp.eq.s32.totalorder %s23, 0
      %p181 = por %p179, %p180
      %s183 = sadd.s32 %s182, 1
      %p186 = scmp.eq.s32.totalorder %s17, 1
      %p187 = scmp.ne.s32.totalorder %s182, %s184
      %p188 = scmp.eq.s32.totalorder %s17, 0
      %p189 = por %p187, %p188
      %p190 = scmp.ne.s32.totalorder %s182, %s184
      %p191 = scmp.eq.s32.totalorder %s22, 1
      %p192 = por %p190, %p191
      %p193 = scmp.ne.s32.totalorder %s184, %s185
      %p194 = scmp.eq.s32.totalorder %s22, 0
      %p195 = por %p193, %p194
      %p196 = scmp.ne.s32.totalorder %s184, %s185
      %p197 = scmp.eq.s32.totalorder %s23, 1
      %p198 = por %p196, %p197
      %p200 = scmp.ne.s32.totalorder %s185, %s199
      %p201 = scmp.eq.s32.totalorder %s23, 0
      %p202 = por %p200, %p201
      %s204 = sadd.s32 %s203, 1
      %p207 = scmp.eq.s32.totalorder %s17, 1
      %p208 = scmp.ne.s32.totalorder %s203, %s205
      %p209 = scmp.eq.s32.totalorder %s17, 0
      %p210 = por %p208, %p209
      %p211 = scmp.ne.s32.totalorder %s203, %s205
      %p212 = scmp.eq.s32.totalorder %s22, 1
      %p213 = por %p211, %p212
      %p214 = scmp.ne.s32.totalorder %s205, %s206
      %p215 = scmp.eq.s32.totalorder %s22, 0
      %p216 = por %p214, %p215
      %p217 = scmp.ne.s32.totalorder %s205, %s206
      %p218 = scmp.eq.s32.totalorder %s23, 1
      %p219 = por %p217, %p218
      %p221 = scmp.ne.s32.totalorder %s206, %s220
      %p222 = scmp.eq.s32.totalorder %s23, 0
      %p223 = por %p221, %p222
      %s224 = ssub.s32 %s17, %s24
      %p225 = scmp.eq.s32.totalorder %s224, 0
      %s227 = sadd.s32 %s226, 1
      %s228 = scalar_select %p225, %s226, %s227
      %p231 = pneg %p225
      %p232 = scmp.eq.s32.totalorder %s17, 1
      %p233 = por %p231, %p232
      %p234 = scmp.ne.s32.totalorder %s226, %s229
      %p235 = scmp.eq.s32.totalorder %s17, 0
      %p236 = por %p234, %p235
      %p237 = scmp.ne.s32.totalorder %s226, %s229
      %p238 = scmp.eq.s32.totalorder %s22, 1
      %p239 = por %p237, %p238
      %p240 = scmp.ne.s32.totalorder %s229, %s230
      %p241 = scmp.eq.s32.totalorder %s22, 0
      %p242 = por %p240, %p241
      %p243 = scmp.ne.s32.totalorder %s229, %s230
      %p244 = scmp.eq.s32.totalorder %s23, 1
      %p245 = por %p243, %p244
      %p247 = scmp.ne.s32.totalorder %s230, %s246
      %p248 = scmp.eq.s32.totalorder %s23, 0
      %p249 = por %p247, %p248
      %p250 = scmp.le.s32.totalorder 1, %s17
      %p251 = scmp.lt.s32.totalorder %s17, 3
      %p252 = pnand %p250, %p251
      %p253 = pneg %p252
      // Predicated region
      $region9: #{lstm_tagger_forward.1} parent=5 // pred_check
        _
      $region10: #{lstm_tagger_forward.1} parent=5 // pred_check_branch
        %255 = sbr.rel (%p252) target = $region12
      $region11: #{lstm_tagger_forward.1} parent=5 // pred_region
        %s256 = ssub.s32 %s17, 1
        // Predicated region
        $region13: #{lstm_tagger_forward.1} parent=11 // pred_check
          %p257 = pneg %p90
        $region14: #{lstm_tagger_forward.1} parent=11 // pred_check_branch
          %259 = sbr.rel (%p257) target = $region16
        $region15: #{lstm_tagger_forward.1} parent=11 // pred_region
          _
        $region16: #{lstm_tagger_forward.1} parent=11 // pred_fallthru
          _
        // Predicated region
        $region17: #{lstm_tagger_forward.1} parent=11 // pred_check
          %p260 = pneg %p111
        $region18: #{lstm_tagger_forward.1} parent=11 // pred_check_branch
          %262 = sbr.rel (%p260) target = $region20
        $region19: #{lstm_tagger_forward.1} parent=11 // pred_region
          _
        $region20: #{lstm_tagger_forward.1} parent=11 // pred_fallthru
          _
        // Predicated region
        $region21: #{lstm_tagger_forward.1} parent=11 // pred_check
          %p263 = pneg %p132
        $region22: #{lstm_tagger_forward.1} parent=11 // pred_check_branch
          %265 = sbr.rel (%p263) target = $region24
        $region23: #{lstm_tagger_forward.1} parent=11 // pred_region
          %s267 = ssub.s32 8192, 8192
          %268 = vsyncadd [#allocation7], %s267
          %s269 = sshll.u32 [#allocation6], 4
          %s270 = int_to_ptr.vmem [resolvable:$true] %s269
          %275 = dma.hbm_to_vmem [thread:$0]  %s4, 8192, %s270, [#allocation7], 512, 512, 32
        $region24: #{lstm_tagger_forward.1} parent=11 // pred_fallthru
          _
        // Predicated region
        $region25: #{lstm_tagger_forward.1} parent=11 // pred_check
          %p276 = pneg %p153
        $region26: #{lstm_tagger_forward.1} parent=11 // pred_check_branch
          %278 = sbr.rel (%p276) target = $region28
        $region27: #{lstm_tagger_forward.1} parent=11 // pred_region
          %s280 = ssub.s32 16384, 16384
          %281 = vsyncadd [#allocation9], %s280
          %s282 = sshll.u32 [#allocation8], 4
          %s283 = int_to_ptr.vmem [resolvable:$true] %s282
          %288 = dma.hbm_to_vmem [thread:$0]  %s5, 16384, %s283, [#allocation9], 512, 512, 32
        $region28: #{lstm_tagger_forward.1} parent=11 // pred_fallthru
          _
        // Predicated region
        $region29: #{lstm_tagger_forward.1} parent=11 // pred_check
          %p289 = pneg %p174
        $region30: #{lstm_tagger_forward.1} parent=11 // pred_check_branch
          %291 = sbr.rel (%p289) target = $region32
        $region31: #{lstm_tagger_forward.1} parent=11 // pred_region
          _
        $region32: #{lstm_tagger_forward.1} parent=11 // pred_fallthru
          _
        // Predicated region
        $region33: #{lstm_tagger_forward.1} parent=11 // pred_check
          %p292 = pneg %p195
        $region34: #{lstm_tagger_forward.1} parent=11 // pred_check_branch
          %294 = sbr.rel (%p292) target = $region36
        $region35: #{lstm_tagger_forward.1} parent=11 // pred_region
          _
        $region36: #{lstm_tagger_forward.1} parent=11 // pred_fallthru
          _
        // Predicated region
        $region37: #{lstm_tagger_forward.1} parent=11 // pred_check
          %p295 = pneg %p216
        $region38: #{lstm_tagger_forward.1} parent=11 // pred_check_branch
          %297 = sbr.rel (%p295) target = $region40
        $region39: #{lstm_tagger_forward.1} parent=11 // pred_region
          _
        $region40: #{lstm_tagger_forward.1} parent=11 // pred_fallthru
          _
      $region12: #{lstm_tagger_forward.1} parent=5 // pred_fallthru
        _
      %p298 = scmp.lt.s32.totalorder %s17, 2
      // Predicated region
      $region41: #{lstm_tagger_forward.1} parent=5 // pred_check
        %p299 = pneg %p298
      $region42: #{lstm_tagger_forward.1} parent=5 // pred_check_branch
        %301 = sbr.rel (%p299) target = $region44
      $region43: #{lstm_tagger_forward.1} parent=5 // pred_region
        // Predicated region
        $region45: #{lstm_tagger_forward.1} parent=43 // pred_check
          %p302 = pneg %p37
        $region46: #{lstm_tagger_forward.1} parent=43 // pred_check_branch
          %304 = sbr.rel (%p302) target = $region48
        $region47: #{lstm_tagger_forward.1} parent=43 // pred_region
          %s305 = smul.u32 4, %s17
          %p306 = scmp.lt.s32.totalorder %s305, 7
          %s307 = scalar_select %p306, %s305, 7
          %s308 = smul.addr %s307, 8
          %s309 = scalar_lea.vmem %s0, %s308
          %s310 = smul.u32 4, %s17
        $region48: #{lstm_tagger_forward.1} parent=43 // pred_fallthru
          _
        // Predicated region
        $region49: #{lstm_tagger_forward.1} parent=43 // pred_check
          %p311 = pneg %p63
        $region50: #{lstm_tagger_forward.1} parent=43 // pred_check_branch
          %313 = sbr.rel (%p311) target = $region52
        $region51: #{lstm_tagger_forward.1} parent=43 // pred_region
          %s314 = smul.u32 4, %s17
          %p315 = scmp.lt.s32.totalorder %s314, 7
          %s316 = scalar_select %p315, %s314, 7
          %s317 = smul.addr %s316, 8
          %s318 = scalar_lea.vmem %s1, %s317
          %s319 = smul.u32 4, %s17
        $region52: #{lstm_tagger_forward.1} parent=43 // pred_fallthru
          _
      $region44: #{lstm_tagger_forward.1} parent=5 // pred_fallthru
        _
      %p320 = scmp.le.s32.totalorder 1, %s17
      %p321 = scmp.lt.s32.totalorder %s17, 3
      %p322 = pnand %p320, %p321
      %p323 = pneg %p322
      // Predicated region
      $region53: #{lstm_tagger_forward.1} parent=5 // pred_check
        _
      $region54: #{lstm_tagger_forward.1} parent=5 // pred_check_branch
        %325 = sbr.rel (%p322) target = $region56
      $region55: #{lstm_tagger_forward.1} parent=5 // pred_region
        %s326 = ssub.s32 %s17, 1
        // Predicated region
        $region57: #{lstm_tagger_forward.1} parent=55 // pred_check
          %p327 = pneg %p132
        $region58: #{lstm_tagger_forward.1} parent=55 // pred_check_branch
          %329 = sbr.rel (%p327) target = $region60
        $region59: #{lstm_tagger_forward.1} parent=55 // pred_region
          %330 = dma.done [#allocation7], 8192
        $region60: #{lstm_tagger_forward.1} parent=55 // pred_fallthru
          _
        // Predicated region
        $region61: #{lstm_tagger_forward.1} parent=55 // pred_check
          %p331 = pneg %p153
        $region62: #{lstm_tagger_forward.1} parent=55 // pred_check_branch
          %333 = sbr.rel (%p331) target = $region64
        $region63: #{lstm_tagger_forward.1} parent=55 // pred_region
          %334 = dma.done [#allocation9], 16384
        $region64: #{lstm_tagger_forward.1} parent=55 // pred_fallthru
          _
        %s335 = smul.u32 4, %s22
        %p336 = scmp.lt.s32.totalorder %s335, 7
        %s337 = scalar_select %p336, %s335, 7
        %s338 = smul.addr %s337, 8
        %s339 = scalar_lea.vmem %s0, %s338
        %p340 = pneg %p43
        %p341 = pneg %p40
        %s342 = smul.u32 4, %s22
        %p343 = scmp.lt.s32.totalorder %s342, 7
        %s344 = scalar_select %p343, %s342, 7
        %s345 = smul.addr %s344, 8
        %s346 = scalar_lea.vmem %s1, %s345
        %p347 = pneg %p69
        %p348 = pneg %p66
        %p349 = pneg %p90
        %p350 = pneg %p87
        %p351 = pneg %p111
        %p352 = pneg %p108
        %p353 = pneg %p132
        %p354 = pneg %p129
        %p355 = pneg %p153
        %p356 = pneg %p150
        %p357 = pneg %p174
        %p358 = pneg %p171
        %p359 = pneg %p195
        %p360 = pneg %p192
        %p361 = pneg %p216
        %p362 = pneg %p213
        %p363 = pneg %p242
        %p364 = pneg %p239
        %s365 = smul.u32 4, %s22
        %p366 = scmp.lt.s32.totalorder %s365, 7
        %s367 = scalar_select %p366, %s365, 7
        %s368 = smul.addr %s367, 8
        %s369 = scalar_lea.vmem %s9, %s368
        %s370 = smul.u32 4, %s22
        %p371 = scmp.lt.s32.totalorder %s370, 7
        %s372 = scalar_select %p371, %s370, 7
        %s373 = smul.addr %s372, 8
        %s374 = scalar_lea.vmem %s0, %s373
        %s375 = smul.u32 4, %s22
        %s376 = smul.u32 4, %s22
        %p377 = scmp.lt.s32.totalorder %s376, 7
        %s378 = scalar_select %p377, %s376, 7
        %s379 = smul.addr %s378, 8
        %s380 = scalar_lea.vmem %s1, %s379
        %s381 = smul.u32 4, %s22
        %s382 = smul.u32 4, %s22
        %p383 = scmp.lt.s32.totalorder %s382, 7
        %s384 = scalar_select %p383, %s382, 7
        %s385 = smul.addr %s384, 8
        %s386 = scalar_lea.vmem %s9, %s385
        %s387 = smul.u32 4, %s22
        %p388 = scmp.eq.s32.totalorder %s22, 0
        // Predicated region
        $region65: #{lstm_tagger_forward.1} parent=55 // pred_check
          %p389 = pneg %p388
        $region66: #{lstm_tagger_forward.1} parent=55 // pred_check_branch
          %391 = sbr.rel (%p389) target = $region68
        $region67: #{lstm_tagger_forward.1} parent=55 // pred_region
          %392 = vst [vmem:[#allocation4] sm:$0xff] 0.0
          %393 = vst [vmem:[#allocation4 + $0x8] sm:$0xff] 0.0
          %394 = vst [vmem:[#allocation5] sm:$0xff] 0.0
          %395 = vst [vmem:[#allocation5 + $0x8] sm:$0xff] 0.0
        $region68: #{lstm_tagger_forward.1} parent=55 // pred_fallthru
          _
        %v396 = vld [vmem:[%s374] sm:$0xff]
        %v397 = vld [vmem:[%s374 + $0x8] sm:$0xff]
        %v398 = vld [vmem:[%s374 + $0x10] sm:$0xff]
        %v399 = vld [vmem:[%s374 + $0x18] sm:$0xff]
        %v400 = vld [vmem:[%s3] sm:$0xff]
        %v401 = vld [vmem:[%s3 + $0x8] sm:$0xff]
        %v402 = vld [vmem:[%s3 + $0x10] sm:$0xff]
        %v403 = vld [vmem:[%s3 + $0x18] sm:$0xff]
        %v404 = vld [vmem:[%s3 + $0x20] sm:$0xff]
        %v405 = vld [vmem:[%s3 + $0x28] sm:$0xff]
        %v406 = vld [vmem:[%s3 + $0x30] sm:$0xff]
        %v407 = vld [vmem:[%s3 + $0x38] sm:$0xff]
        %v408 = vld [vmem:[%s3 + $0x40] sm:$0xff]
        %v409 = vld [vmem:[%s3 + $0x48] sm:$0xff]
        %v410 = vld [vmem:[%s3 + $0x50] sm:$0xff]
        %v411 = vld [vmem:[%s3 + $0x58] sm:$0xff]
        %v412 = vld [vmem:[%s3 + $0x60] sm:$0xff]
        %v413 = vld [vmem:[%s3 + $0x68] sm:$0xff]
        %v414 = vld [vmem:[%s3 + $0x70] sm:$0xff]
        %v415 = vld [vmem:[%s3 + $0x78] sm:$0xff]
        %v416 = vld [vmem:[%s3 + $0x80] sm:$0xff]
        %v417 = vld [vmem:[%s3 + $0x88] sm:$0xff]
        %v418 = vld [vmem:[%s3 + $0x90] sm:$0xff]
        %v419 = vld [vmem:[%s3 + $0x98] sm:$0xff]
        %v420 = vld [vmem:[%s3 + $0xa0] sm:$0xff]
        %v421 = vld [vmem:[%s3 + $0xa8] sm:$0xff]
        %v422 = vld [vmem:[%s3 + $0xb0] sm:$0xff]
        %v423 = vld [vmem:[%s3 + $0xb8] sm:$0xff]
        %v424 = vld [vmem:[%s3 + $0xc0] sm:$0xff]
        %v425 = vld [vmem:[%s3 + $0xc8] sm:$0xff]
        %v426 = vld [vmem:[%s3 + $0xd0] sm:$0xff]
        %v427 = vld [vmem:[%s3 + $0xd8] sm:$0xff]
        %v428 = vld [vmem:[%s3 + $0xe0] sm:$0xff]
        %v429 = vld [vmem:[%s3 + $0xe8] sm:$0xff]
        %v430 = vld [vmem:[%s3 + $0xf0] sm:$0xff]
        %v431 = vld [vmem:[%s3 + $0xf8] sm:$0xff]
        %v432 = vld [vmem:[%s3 + $0x100] sm:$0xff]
        %v433 = vld [vmem:[%s3 + $0x108] sm:$0xff]
        %v434 = vld [vmem:[%s3 + $0x110] sm:$0xff]
        %v435 = vld [vmem:[%s3 + $0x118] sm:$0xff]
        %v436 = vld [vmem:[%s3 + $0x120] sm:$0xff]
        %v437 = vld [vmem:[%s3 + $0x128] sm:$0xff]
        %v438 = vld [vmem:[%s3 + $0x130] sm:$0xff]
        %v439 = vld [vmem:[%s3 + $0x138] sm:$0xff]
        %v440 = vld [vmem:[%s3 + $0x140] sm:$0xff]
        %v441 = vld [vmem:[%s3 + $0x148] sm:$0xff]
        %v442 = vld [vmem:[%s3 + $0x150] sm:$0xff]
        %v443 = vld [vmem:[%s3 + $0x158] sm:$0xff]
        %v444 = vld [vmem:[%s3 + $0x160] sm:$0xff]
        %v445 = vld [vmem:[%s3 + $0x168] sm:$0xff]
        %v446 = vld [vmem:[%s3 + $0x170] sm:$0xff]
        %v447 = vld [vmem:[%s3 + $0x178] sm:$0xff]
        %v448 = vld [vmem:[%s3 + $0x180] sm:$0xff]
        %v449 = vld [vmem:[%s3 + $0x188] sm:$0xff]
        %v450 = vld [vmem:[%s3 + $0x190] sm:$0xff]
        %v451 = vld [vmem:[%s3 + $0x198] sm:$0xff]
        %v452 = vld [vmem:[%s3 + $0x1a0] sm:$0xff]
        %v453 = vld [vmem:[%s3 + $0x1a8] sm:$0xff]
        %v454 = vld [vmem:[%s3 + $0x1b0] sm:$0xff]
        %v455 = vld [vmem:[%s3 + $0x1b8] sm:$0xff]
        %v456 = vld [vmem:[%s3 + $0x1c0] sm:$0xff]
        %v457 = vld [vmem:[%s3 + $0x1c8] sm:$0xff]
        %v458 = vld [vmem:[%s3 + $0x1d0] sm:$0xff]
        %v459 = vld [vmem:[%s3 + $0x1d8] sm:$0xff]
        %v460 = vld [vmem:[%s3 + $0x1e0] sm:$0xff]
        %v461 = vld [vmem:[%s3 + $0x1e8] sm:$0xff]
        %v462 = vld [vmem:[%s3 + $0x1f0] sm:$0xff]
        %v463 = vld [vmem:[%s3 + $0x1f8] sm:$0xff]
        %v464 = vld [vmem:[#allocation8] sm:$0xff]
        %v465 = vld [vmem:[#allocation8 + $0x8] sm:$0xff]
        %v466 = vld [vmem:[#allocation8 + $0x10] sm:$0xff]
        %v467 = vld [vmem:[#allocation8 + $0x18] sm:$0xff]
        %v468 = vld [vmem:[#allocation8 + $0x20] sm:$0xff]
        %v469 = vld [vmem:[#allocation8 + $0x28] sm:$0xff]
        %v470 = vld [vmem:[#allocation8 + $0x30] sm:$0xff]
        %v471 = vld [vmem:[#allocation8 + $0x38] sm:$0xff]
        %v472 = vld [vmem:[#allocation8 + $0x40] sm:$0xff]
        %v473 = vld [vmem:[#allocation8 + $0x48] sm:$0xff]
        %v474 = vld [vmem:[#allocation8 + $0x50] sm:$0xff]
        %v475 = vld [vmem:[#allocation8 + $0x58] sm:$0xff]
        %v476 = vld [vmem:[#allocation8 + $0x60] sm:$0xff]
        %v477 = vld [vmem:[#allocation8 + $0x68] sm:$0xff]
        %v478 = vld [vmem:[#allocation8 + $0x70] sm:$0xff]
        %v479 = vld [vmem:[#allocation8 + $0x78] sm:$0xff]
        %v480 = vld [vmem:[#allocation8 + $0x80] sm:$0xff]
        %v481 = vld [vmem:[#allocation8 + $0x88] sm:$0xff]
        %v482 = vld [vmem:[#allocation8 + $0x90] sm:$0xff]
        %v483 = vld [vmem:[#allocation8 + $0x98] sm:$0xff]
        %v484 = vld [vmem:[#allocation8 + $0xa0] sm:$0xff]
        %v485 = vld [vmem:[#allocation8 + $0xa8] sm:$0xff]
        %v486 = vld [vmem:[#allocation8 + $0xb0] sm:$0xff]
        %v487 = vld [vmem:[#allocation8 + $0xb8] sm:$0xff]
        %v488 = vld [vmem:[#allocation8 + $0xc0] sm:$0xff]
        %v489 = vld [vmem:[#allocation8 + $0xc8] sm:$0xff]
        %v490 = vld [vmem:[#allocation8 + $0xd0] sm:$0xff]
        %v491 = vld [vmem:[#allocation8 + $0xd8] sm:$0xff]
        %v492 = vld [vmem:[#allocation8 + $0xe0] sm:$0xff]
        %v493 = vld [vmem:[#allocation8 + $0xe8] sm:$0xff]
        %v494 = vld [vmem:[#allocation8 + $0xf0] sm:$0xff]
        %v495 = vld [vmem:[#allocation8 + $0xf8] sm:$0xff]
        %v496 = vld [vmem:[#allocation8 + $0x100] sm:$0xff]
        %v497 = vld [vmem:[#allocation8 + $0x108] sm:$0xff]
        %v498 = vld [vmem:[#allocation8 + $0x110] sm:$0xff]
        %v499 = vld [vmem:[#allocation8 + $0x118] sm:$0xff]
        %v500 = vld [vmem:[#allocation8 + $0x120] sm:$0xff]
        %v501 = vld [vmem:[#allocation8 + $0x128] sm:$0xff]
        %v502 = vld [vmem:[#allocation8 + $0x130] sm:$0xff]
        %v503 = vld [vmem:[#allocation8 + $0x138] sm:$0xff]
        %v504 = vld [vmem:[#allocation8 + $0x140] sm:$0xff]
        %v505 = vld [vmem:[#allocation8 + $0x148] sm:$0xff]
        %v506 = vld [vmem:[#allocation8 + $0x150] sm:$0xff]
        %v507 = vld [vmem:[#allocation8 + $0x158] sm:$0xff]
        %v508 = vld [vmem:[#allocation8 + $0x160] sm:$0xff]
        %v509 = vld [vmem:[#allocation8 + $0x168] sm:$0xff]
        %v510 = vld [vmem:[#allocation8 + $0x170] sm:$0xff]
        %v511 = vld [vmem:[#allocation8 + $0x178] sm:$0xff]
        %v512 = vld [vmem:[#allocation8 + $0x180] sm:$0xff]
        %v513 = vld [vmem:[#allocation8 + $0x188] sm:$0xff]
        %v514 = vld [vmem:[#allocation8 + $0x190] sm:$0xff]
        %v515 = vld [vmem:[#allocation8 + $0x198] sm:$0xff]
        %v516 = vld [vmem:[#allocation8 + $0x1a0] sm:$0xff]
        %v517 = vld [vmem:[#allocation8 + $0x1a8] sm:$0xff]
        %v518 = vld [vmem:[#allocation8 + $0x1b0] sm:$0xff]
        %v519 = vld [vmem:[#allocation8 + $0x1b8] sm:$0xff]
        %v520 = vld [vmem:[#allocation8 + $0x1c0] sm:$0xff]
        %v521 = vld [vmem:[#allocation8 + $0x1c8] sm:$0xff]
        %v522 = vld [vmem:[#allocation8 + $0x1d0] sm:$0xff]
        %v523 = vld [vmem:[#allocation8 + $0x1d8] sm:$0xff]
        %v524 = vld [vmem:[#allocation8 + $0x1e0] sm:$0xff]
        %v525 = vld [vmem:[#allocation8 + $0x1e8] sm:$0xff]
        %v526 = vld [vmem:[#allocation8 + $0x1f0] sm:$0xff]
        %v527 = vld [vmem:[#allocation8 + $0x1f8] sm:$0xff]
        %v528 = vld [vmem:[%s6] sm:$0xf]
        %v530 = vlaneseq
        %v531 = vshrl.u32 %v530, 7
        %v532 = vsub.s32 0, %v531
        %v533 = vrot.slane %v528, %v532
        %v534 = vlaneseq
        %v535 = vshrl.u32 %v534, 7
        %v536 = vsub.s32 1, %v535
        %v537 = vrot.slane %v528, %v536
        %v538 = vlaneseq
        %v539 = vshrl.u32 %v538, 7
        %v540 = vsub.s32 2, %v539
        %v541 = vrot.slane %v528, %v540
        %v542 = vlaneseq
        %v543 = vshrl.u32 %v542, 7
        %v544 = vsub.s32 3, %v543
        %v545 = vrot.slane %v528, %v544
        %550 = vmatprep.subr.mxu0 %v401
        %551 = vmatpush1.msra.mxu0 %v400
        %552 = vmatprep.subr.mxu0 %v405
        %553 = vmatpush1.msra.mxu0 %v404
        %554 = vmatprep.subr.mxu0 %v409
        %555 = vmatpush1.msra.mxu0 %v408
        %556 = vmatprep.subr.mxu0 %v413
        %557 = vmatpush1.msra.mxu0 %v412
        %558 = vmatprep.subr.mxu0 %v417
        %559 = vmatpush1.msra.mxu0 %v416
        %560 = vmatprep.subr.mxu0 %v421
        %561 = vmatpush1.msra.mxu0 %v420
        %562 = vmatprep.subr.mxu0 %v425
        %563 = vmatpush1.msra.mxu0 %v424
        %564 = vmatprep.subr.mxu0 %v429
        %565 = vmatpush1.msra.mxu0 %v428
        %566 = vmatprep.subr.mxu0 %v433
        %567 = vmatpush1.msra.mxu0 %v432
        %568 = vmatprep.subr.mxu0 %v437
        %569 = vmatpush1.msra.mxu0 %v436
        %570 = vmatprep.subr.mxu0 %v441
        %571 = vmatpush1.msra.mxu0 %v440
        %572 = vmatprep.subr.mxu0 %v445
        %573 = vmatpush1.msra.mxu0 %v444
        %574 = vmatprep.subr.mxu0 %v449
        %575 = vmatpush1.msra.mxu0 %v448
        %576 = vmatprep.subr.mxu0 %v453
        %577 = vmatpush1.msra.mxu0 %v452
        %578 = vmatprep.subr.mxu0 %v457
        %579 = vmatpush1.msra.mxu0 %v456
        %580 = vmatprep.subr.mxu0 %v461
        %581 = vmatpush1.msra.mxu0 %v460
        %582 = vmatprep.subr.mxu0 0.0
        %583 = vmatpush1.msra.mxu0 0.0
        %584 = vmatprep.subr.mxu0 0.0
        %585 = vmatpush1.msra.mxu0 0.0
        %586 = vmatprep.subr.mxu0 0.0
        %587 = vmatpush1.msra.mxu0 0.0
        %588 = vmatprep.subr.mxu0 0.0
        %589 = vmatpush1.msra.mxu0 0.0
        %590 = vmatprep.subr.mxu0 0.0
        %591 = vmatpush1.msra.mxu0 0.0
        %592 = vmatprep.subr.mxu0 0.0
        %593 = vmatpush1.msra.mxu0 0.0
        %594 = vmatprep.subr.mxu0 0.0
        %595 = vmatpush1.msra.mxu0 0.0
        %596 = vmatprep.subr.mxu0 0.0
        %597 = vmatpush1.msra.mxu0 0.0
        %598 = vmatprep.subr.mxu0 0.0
        %599 = vmatpush1.msra.mxu0 0.0
        %600 = vmatprep.subr.mxu0 0.0
        %601 = vmatpush1.msra.mxu0 0.0
        %602 = vmatprep.subr.mxu0 0.0
        %603 = vmatpush1.msra.mxu0 0.0
        %604 = vmatprep.subr.mxu0 0.0
        %605 = vmatpush1.msra.mxu0 0.0
        %606 = vmatprep.subr.mxu0 0.0
        %607 = vmatpush1.msra.mxu0 0.0
        %608 = vmatprep.subr.mxu0 0.0
        %609 = vmatpush1.msra.mxu0 0.0
        %610 = vmatprep.subr.mxu0 0.0
        %611 = vmatpush1.msra.mxu0 0.0
        %612 = vmatprep.subr.mxu0 0.0
        %613 = vmatpush1.msra.mxu0 0.0
        %614 = vmatprep.mubr.f32.mxu0 0.0
        %615 = vmatmul.mubr.f32.gmra.mrb[0].mxu0 %v396
        %v616 = vpop.f32.mrb[0].mxu0
        %v617 = vadd.f32 %v533, %v616
        %v618 = vpop.f32.mrb[0].mxu0
        %v619 = vadd.f32 %v537, %v618
        %620 = vmatprep.mubr.f32.mxu0 0.0
        %621 = vmatmul.mubr.f32.gmra.mrb[0].mxu0 %v397
        %v622 = vpop.f32.mrb[0].mxu0
        %v623 = vadd.f32 %v533, %v622
        %v624 = vpop.f32.mrb[0].mxu0
        %v625 = vadd.f32 %v537, %v624
        %626 = vmatprep.mubr.f32.mxu0 0.0
        %627 = vmatmul.mubr.f32.gmra.mrb[0].mxu0 %v398
        %v628 = vpop.f32.mrb[0].mxu0
        %v629 = vadd.f32 %v533, %v628
        %v630 = vpop.f32.mrb[0].mxu0
        %v631 = vadd.f32 %v537, %v630
        %632 = vmatprep.mubr.f32.mxu0 0.0
        %633 = vmatmul.mubr.f32.gmra.mrb[0].mxu0 %v399
        %v634 = vpop.f32.mrb[0].mxu0
        %v635 = vadd.f32 %v533, %v634
        %v636 = vpop.f32.mrb[0].mxu0
        %v637 = vadd.f32 %v537, %v636
        %638 = vdwg.mxu0
        %639 = vmatprep.subr.mxu0 %v403
        %640 = vmatpush1.msra.mxu0 %v402
        %641 = vmatprep.subr.mxu0 %v407
        %642 = vmatpush1.msra.mxu0 %v406
        %643 = vmatprep.subr.mxu0 %v411
        %644 = vmatpush1.msra.mxu0 %v410
        %645 = vmatprep.subr.mxu0 %v415
        %646 = vmatpush1.msra.mxu0 %v414
        %647 = vmatprep.subr.mxu0 %v419
        %648 = vmatpush1.msra.mxu0 %v418
        %649 = vmatprep.subr.mxu0 %v423
        %650 = vmatpush1.msra.mxu0 %v422
        %651 = vmatprep.subr.mxu0 %v427
        %652 = vmatpush1.msra.mxu0 %v426
        %653 = vmatprep.subr.mxu0 %v431
        %654 = vmatpush1.msra.mxu0 %v430
        %655 = vmatprep.subr.mxu0 %v435
        %656 = vmatpush1.msra.mxu0 %v434
        %657 = vmatprep.subr.mxu0 %v439
        %658 = vmatpush1.msra.mxu0 %v438
        %659 = vmatprep.subr.mxu0 %v443
        %660 = vmatpush1.msra.mxu0 %v442
        %661 = vmatprep.subr.mxu0 %v447
        %662 = vmatpush1.msra.mxu0 %v446
        %663 = vmatprep.subr.mxu0 %v451
        %664 = vmatpush1.msra.mxu0 %v450
        %665 = vmatprep.subr.mxu0 %v455
        %666 = vmatpush1.msra.mxu0 %v454
        %667 = vmatprep.subr.mxu0 %v459
        %668 = vmatpush1.msra.mxu0 %v458
        %669 = vmatprep.subr.mxu0 %v463
        %670 = vmatpush1.msra.mxu0 %v462
        %671 = vmatprep.subr.mxu0 0.0
        %672 = vmatpush1.msra.mxu0 0.0
        %673 = vmatprep.subr.mxu0 0.0
        %674 = vmatpush1.msra.mxu0 0.0
        %675 = vmatprep.subr.mxu0 0.0
        %676 = vmatpush1.msra.mxu0 0.0
        %677 = vmatprep.subr.mxu0 0.0
        %678 = vmatpush1.msra.mxu0 0.0
        %679 = vmatprep.subr.mxu0 0.0
        %680 = vmatpush1.msra.mxu0 0.0
        %681 = vmatprep.subr.mxu0 0.0
        %682 = vmatpush1.msra.mxu0 0.0
        %683 = vmatprep.subr.mxu0 0.0
        %684 = vmatpush1.msra.mxu0 0.0
        %685 = vmatprep.subr.mxu0 0.0
        %686 = vmatpush1.msra.mxu0 0.0
        %687 = vmatprep.subr.mxu0 0.0
        %688 = vmatpush1.msra.mxu0 0.0
        %689 = vmatprep.subr.mxu0 0.0
        %690 = vmatpush1.msra.mxu0 0.0
        %691 = vmatprep.subr.mxu0 0.0
        %692 = vmatpush1.msra.mxu0 0.0
        %693 = vmatprep.subr.mxu0 0.0
        %694 = vmatpush1.msra.mxu0 0.0
        %695 = vmatprep.subr.mxu0 0.0
        %696 = vmatpush1.msra.mxu0 0.0
        %697 = vmatprep.subr.mxu0 0.0
        %698 = vmatpush1.msra.mxu0 0.0
        %699 = vmatprep.subr.mxu0 0.0
        %700 = vmatpush1.msra.mxu0 0.0
        %701 = vmatprep.subr.mxu0 0.0
        %702 = vmatpush1.msra.mxu0 0.0
        %703 = vmatprep.mubr.f32.mxu0 0.0
        %704 = vmatmul.mubr.f32.gmra.mrb[0].mxu0 %v396
        %v705 = vpop.f32.mrb[0].mxu0
        %v706 = vadd.f32 %v541, %v705
        %v707 = vpop.f32.mrb[0].mxu0
        %v708 = vadd.f32 %v545, %v707
        %709 = vmatprep.mubr.f32.mxu0 0.0
        %710 = vmatmul.mubr.f32.gmra.mrb[0].mxu0 %v397
        %v711 = vpop.f32.mrb[0].mxu0
        %v712 = vadd.f32 %v541, %v711
        %v713 = vpop.f32.mrb[0].mxu0
        %v714 = vadd.f32 %v545, %v713
        %715 = vmatprep.mubr.f32.mxu0 0.0
        %716 = vmatmul.mubr.f32.gmra.mrb[0].mxu0 %v398
        %v717 = vpop.f32.mrb[0].mxu0
        %v718 = vadd.f32 %v541, %v717
        %v719 = vpop.f32.mrb[0].mxu0
        %v720 = vadd.f32 %v545, %v719
        %721 = vmatprep.mubr.f32.mxu0 0.0
        %722 = vmatmul.mubr.f32.gmra.mrb[0].mxu0 %v399
        %v723 = vpop.f32.mrb[0].mxu0
        %v724 = vadd.f32 %v541, %v723
        %v725 = vpop.f32.mrb[0].mxu0
        %v726 = vadd.f32 %v545, %v725
        %727 = vdwg.mxu0
        %728 = vst [vmem:[#allocation3] sm:$0xff] %v617
        %729 = vst [vmem:[#allocation3 + $0x8] sm:$0xff] %v619
        %730 = vst [vmem:[#allocation3 + $0x10] sm:$0xff] %v706
        %731 = vst [vmem:[#allocation3 + $0x18] sm:$0xff] %v708
        %732 = vst [vmem:[#allocation3 + $0x20] sm:$0xff] %v623
        %733 = vst [vmem:[#allocation3 + $0x28] sm:$0xff] %v625
        %734 = vst [vmem:[#allocation3 + $0x30] sm:$0xff] %v712
        %735 = vst [vmem:[#allocation3 + $0x38] sm:$0xff] %v714
        %736 = vst [vmem:[#allocation3 + $0x40] sm:$0xff] %v629
        %737 = vst [vmem:[#allocation3 + $0x48] sm:$0xff] %v631
        %738 = vst [vmem:[#allocation3 + $0x50] sm:$0xff] %v718
        %739 = vst [vmem:[#allocation3 + $0x58] sm:$0xff] %v720
        %740 = vst [vmem:[#allocation3 + $0x60] sm:$0xff] %v635
        %741 = vst [vmem:[#allocation3 + $0x68] sm:$0xff] %v637
        %742 = vst [vmem:[#allocation3 + $0x70] sm:$0xff] %v724
        %743 = vst [vmem:[#allocation3 + $0x78] sm:$0xff] %v726
        %v744 = vld [vmem:[#allocation4] sm:$0xff]
        %v745 = vld [vmem:[#allocation5] sm:$0xff]
        %v746 = vld [vmem:[#allocation3] sm:$0xff]
        %v747 = vld [vmem:[#allocation3 + $0x8] sm:$0xff]
        %v748 = vld [vmem:[#allocation3 + $0x10] sm:$0xff]
        %v749 = vld [vmem:[#allocation3 + $0x18] sm:$0xff]
        %750 = vmatprep.subr.mxu0 %v465
        %751 = vmatpush1.msra.mxu0 %v464
        %752 = vmatprep.subr.mxu0 %v469
        %753 = vmatpush1.msra.mxu0 %v468
        %754 = vmatprep.subr.mxu0 %v473
        %755 = vmatpush1.msra.mxu0 %v472
        %756 = vmatprep.subr.mxu0 %v477
        %757 = vmatpush1.msra.mxu0 %v476
        %758 = vmatprep.subr.mxu0 %v481
        %759 = vmatpush1.msra.mxu0 %v480
        %760 = vmatprep.subr.mxu0 %v485
        %761 = vmatpush1.msra.mxu0 %v484
        %762 = vmatprep.subr.mxu0 %v489
        %763 = vmatpush1.msra.mxu0 %v488
        %764 = vmatprep.subr.mxu0 %v493
        %765 = vmatpush1.msra.mxu0 %v492
        %766 = vmatprep.subr.mxu0 %v497
        %767 = vmatpush1.msra.mxu0 %v496
        %768 = vmatprep.subr.mxu0 %v501
        %769 = vmatpush1.msra.mxu0 %v500
        %770 = vmatprep.subr.mxu0 %v505
        %771 = vmatpush1.msra.mxu0 %v504
        %772 = vmatprep.subr.mxu0 %v509
        %773 = vmatpush1.msra.mxu0 %v508
        %774 = vmatprep.subr.mxu0 %v513
        %775 = vmatpush1.msra.mxu0 %v512
        %776 = vmatprep.subr.mxu0 %v517
        %777 = vmatpush1.msra.mxu0 %v516
        %778 = vmatprep.subr.mxu0 %v521
        %779 = vmatpush1.msra.mxu0 %v520
        %780 = vmatprep.subr.mxu0 %v525
        %781 = vmatpush1.msra.mxu0 %v524
        %782 = vmatprep.subr.mxu0 0.0
        %783 = vmatpush1.msra.mxu0 0.0
        %784 = vmatprep.subr.mxu0 0.0
        %785 = vmatpush1.msra.mxu0 0.0
        %786 = vmatprep.subr.mxu0 0.0
        %787 = vmatpush1.msra.mxu0 0.0
        %788 = vmatprep.subr.mxu0 0.0
        %789 = vmatpush1.msra.mxu0 0.0
        %790 = vmatprep.subr.mxu0 0.0
        %791 = vmatpush1.msra.mxu0 0.0
        %792 = vmatprep.subr.mxu0 0.0
        %793 = vmatpush1.msra.mxu0 0.0
        %794 = vmatprep.subr.mxu0 0.0
        %795 = vmatpush1.msra.mxu0 0.0
        %796 = vmatprep.subr.mxu0 0.0
        %797 = vmatpush1.msra.mxu0 0.0
        %798 = vmatprep.subr.mxu0 0.0
        %799 = vmatpush1.msra.mxu0 0.0
        %800 = vmatprep.subr.mxu0 0.0
        %801 = vmatpush1.msra.mxu0 0.0
        %802 = vmatprep.subr.mxu0 0.0
        %803 = vmatpush1.msra.mxu0 0.0
        %804 = vmatprep.subr.mxu0 0.0
        %805 = vmatpush1.msra.mxu0 0.0
        %806 = vmatprep.subr.mxu0 0.0
        %807 = vmatpush1.msra.mxu0 0.0
        %808 = vmatprep.subr.mxu0 0.0
        %809 = vmatpush1.msra.mxu0 0.0
        %810 = vmatprep.subr.mxu0 0.0
        %811 = vmatpush1.msra.mxu0 0.0
        %812 = vmatprep.subr.mxu0 0.0
        %813 = vmatpush1.msra.mxu0 0.0
        %814 = vmatprep.mubr.f32.mxu0 0.0
        %815 = vmatmul.mubr.f32.gmra.mrb[0].mxu0 %v744
        %v816 = vpop.f32.mrb[0].mxu0
        %v817 = vadd.f32 0.0, %v816
        %v818 = vpop.f32.mrb[0].mxu0
        %v819 = vadd.f32 0.0, %v818
        %820 = vdwg.mxu0
        %821 = vmatprep.subr.mxu0 %v467
        %822 = vmatpush1.msra.mxu0 %v466
        %823 = vmatprep.subr.mxu0 %v471
        %824 = vmatpush1.msra.mxu0 %v470
        %825 = vmatprep.subr.mxu0 %v475
        %826 = vmatpush1.msra.mxu0 %v474
        %827 = vmatprep.subr.mxu0 %v479
        %828 = vmatpush1.msra.mxu0 %v478
        %829 = vmatprep.subr.mxu0 %v483
        %830 = vmatpush1.msra.mxu0 %v482
        %831 = vmatprep.subr.mxu0 %v487
        %832 = vmatpush1.msra.mxu0 %v486
        %833 = vmatprep.subr.mxu0 %v491
        %834 = vmatpush1.msra.mxu0 %v490
        %835 = vmatprep.subr.mxu0 %v495
        %836 = vmatpush1.msra.mxu0 %v494
        %837 = vmatprep.subr.mxu0 %v499
        %838 = vmatpush1.msra.mxu0 %v498
        %839 = vmatprep.subr.mxu0 %v503
        %840 = vmatpush1.msra.mxu0 %v502
        %841 = vmatprep.subr.mxu0 %v507
        %842 = vmatpush1.msra.mxu0 %v506
        %843 = vmatprep.subr.mxu0 %v511
        %844 = vmatpush1.msra.mxu0 %v510
        %845 = vmatprep.subr.mxu0 %v515
        %846 = vmatpush1.msra.mxu0 %v514
        %847 = vmatprep.subr.mxu0 %v519
        %848 = vmatpush1.msra.mxu0 %v518
        %849 = vmatprep.subr.mxu0 %v523
        %850 = vmatpush1.msra.mxu0 %v522
        %851 = vmatprep.subr.mxu0 %v527
        %852 = vmatpush1.msra.mxu0 %v526
        %853 = vmatprep.subr.mxu0 0.0
        %854 = vmatpush1.msra.mxu0 0.0
        %855 = vmatprep.subr.mxu0 0.0
        %856 = vmatpush1.msra.mxu0 0.0
        %857 = vmatprep.subr.mxu0 0.0
        %858 = vmatpush1.msra.mxu0 0.0
        %859 = vmatprep.subr.mxu0 0.0
        %860 = vmatpush1.msra.mxu0 0.0
        %861 = vmatprep.subr.mxu0 0.0
        %862 = vmatpush1.msra.mxu0 0.0
        %863 = vmatprep.subr.mxu0 0.0
        %864 = vmatpush1.msra.mxu0 0.0
        %865 = vmatprep.subr.mxu0 0.0
        %866 = vmatpush1.msra.mxu0 0.0
        %867 = vmatprep.subr.mxu0 0.0
        %868 = vmatpush1.msra.mxu0 0.0
        %869 = vmatprep.subr.mxu0 0.0
        %870 = vmatpush1.msra.mxu0 0.0
        %871 = vmatprep.subr.mxu0 0.0
        %872 = vmatpush1.msra.mxu0 0.0
        %873 = vmatprep.subr.mxu0 0.0
        %874 = vmatpush1.msra.mxu0 0.0
        %875 = vmatprep.subr.mxu0 0.0
        %876 = vmatpush1.msra.mxu0 0.0
        %877 = vmatprep.subr.mxu0 0.0
        %878 = vmatpush1.msra.mxu0 0.0
        %879 = vmatprep.subr.mxu0 0.0
        %880 = vmatpush1.msra.mxu0 0.0
        %881 = vmatprep.subr.mxu0 0.0
        %882 = vmatpush1.msra.mxu0 0.0
        %883 = vmatprep.subr.mxu0 0.0
        %884 = vmatpush1.msra.mxu0 0.0
        %885 = vmatprep.mubr.f32.mxu0 0.0
        %886 = vmatmul.mubr.f32.gmra.mrb[0].mxu0 %v744
        %v887 = vpop.f32.mrb[0].mxu0
        %v888 = vadd.f32 0.0, %v887
        %v889 = vpop.f32.mrb[0].mxu0
        %v890 = vadd.f32 0.0, %v889
        %891 = vdwg.mxu0
        %v892 = vadd.f32 %v746, %v817
        %v893 = vadd.f32 %v747, %v819
        %v894 = vadd.f32 %v748, %v888
        %v895 = vadd.f32 %v749, %v890
        %v896 = vxor.u32 %v892, 2147483648
        %v897 = vmul.f32 %v896, 1.442695
        %v898 = vpow.pop %v897
        %v899 = vadd.f32 %v898, 1.0
        %v900 = vrcp.pop %v899
        %v901 = vmul.f32 1.0, %v900
        %v902 = vxor.u32 %v893, 2147483648
        %v903 = vmul.f32 %v902, 1.442695
        %v904 = vpow.pop %v903
        %v905 = vadd.f32 %v904, 1.0
        %v906 = vrcp.pop %v905
        %v907 = vmul.f32 1.0, %v906
        %v908 = vtanh.pop %v894
        %v909 = vxor.u32 %v895, 2147483648
        %v910 = vmul.f32 %v909, 1.442695
        %v911 = vpow.pop %v910
        %v912 = vadd.f32 %v911, 1.0
        %v913 = vrcp.pop %v912
        %v914 = vmul.f32 1.0, %v913
        %v915 = vmul.f32 %v907, %v745
        %v916 = vmul.f32 %v901, %v908
        %v917 = vadd.f32 %v915, %v916
        %v918 = vtanh.pop %v917
        %v919 = vmul.f32 %v914, %v918
        %v920 = vld [vmem:[%s380] sm:$0xff]
        %v921 = vsub.f32 %v919, %v744
        %v922 = vmul.f32 %v920, %v921
        %v923 = vadd.f32 %v744, %v922
        %924 = vst [vmem:[#allocation4] sm:$0xff] %v923
        %v925 = vsub.f32 %v917, %v745
        %v926 = vmul.f32 %v920, %v925
        %v927 = vadd.f32 %v745, %v926
        %928 = vst [vmem:[#allocation5] sm:$0xff] %v927
        %v929 = vmul.f32 %v920, %v919
        %930 = vst [vmem:[#allocation2] sm:$0xff] %v929
        %v931 = vld [vmem:[#allocation4] sm:$0xff]
        %v932 = vld [vmem:[#allocation5] sm:$0xff]
        %s933 = scalar_lea.vmem [#allocation3], 32
        %v934 = vld [vmem:[%s933] sm:$0xff]
        %v935 = vld [vmem:[%s933 + $0x8] sm:$0xff]
        %v936 = vld [vmem:[%s933 + $0x10] sm:$0xff]
        %v937 = vld [vmem:[%s933 + $0x18] sm:$0xff]
        %938 = vmatprep.subr.mxu0 %v465
        %939 = vmatpush1.msra.mxu0 %v464
        %940 = vmatprep.subr.mxu0 %v469
        %941 = vmatpush1.msra.mxu0 %v468
        %942 = vmatprep.subr.mxu0 %v473
        %943 = vmatpush1.msra.mxu0 %v472
        %944 = vmatprep.subr.mxu0 %v477
        %945 = vmatpush1.msra.mxu0 %v476
        %946 = vmatprep.subr.mxu0 %v481
        %947 = vmatpush1.msra.mxu0 %v480
        %948 = vmatprep.subr.mxu0 %v485
        %949 = vmatpush1.msra.mxu0 %v484
        %950 = vmatprep.subr.mxu0 %v489
        %951 = vmatpush1.msra.mxu0 %v488
        %952 = vmatprep.subr.mxu0 %v493
        %953 = vmatpush1.msra.mxu0 %v492
        %954 = vmatprep.subr.mxu0 %v497
        %955 = vmatpush1.msra.mxu0 %v496
        %956 = vmatprep.subr.mxu0 %v501
        %957 = vmatpush1.msra.mxu0 %v500
        %958 = vmatprep.subr.mxu0 %v505
        %959 = vmatpush1.msra.mxu0 %v504
        %960 = vmatprep.subr.mxu0 %v509
        %961 = vmatpush1.msra.mxu0 %v508
        %962 = vmatprep.subr.mxu0 %v513
        %963 = vmatpush1.msra.mxu0 %v512
        %964 = vmatprep.subr.mxu0 %v517
        %965 = vmatpush1.msra.mxu0 %v516
        %966 = vmatprep.subr.mxu0 %v521
        %967 = vmatpush1.msra.mxu0 %v520
        %968 = vmatprep.subr.mxu0 %v525
        %969 = vmatpush1.msra.mxu0 %v524
        %970 = vmatprep.subr.mxu0 0.0
        %971 = vmatpush1.msra.mxu0 0.0
        %972 = vmatprep.subr.mxu0 0.0
        %973 = vmatpush1.msra.mxu0 0.0
        %974 = vmatprep.subr.mxu0 0.0
        %975 = vmatpush1.msra.mxu0 0.0
        %976 = vmatprep.subr.mxu0 0.0
        %977 = vmatpush1.msra.mxu0 0.0
        %978 = vmatprep.subr.mxu0 0.0
        %979 = vmatpush1.msra.mxu0 0.0
        %980 = vmatprep.subr.mxu0 0.0
        %981 = vmatpush1.msra.mxu0 0.0
        %982 = vmatprep.subr.mxu0 0.0
        %983 = vmatpush1.msra.mxu0 0.0
        %984 = vmatprep.subr.mxu0 0.0
        %985 = vmatpush1.msra.mxu0 0.0
        %986 = vmatprep.subr.mxu0 0.0
        %987 = vmatpush1.msra.mxu0 0.0
        %988 = vmatprep.subr.mxu0 0.0
        %989 = vmatpush1.msra.mxu0 0.0
        %990 = vmatprep.subr.mxu0 0.0
        %991 = vmatpush1.msra.mxu0 0.0
        %992 = vmatprep.subr.mxu0 0.0
        %993 = vmatpush1.msra.mxu0 0.0
        %994 = vmatprep.subr.mxu0 0.0
        %995 = vmatpush1.msra.mxu0 0.0
        %996 = vmatprep.subr.mxu0 0.0
        %997 = vmatpush1.msra.mxu0 0.0
        %998 = vmatprep.subr.mxu0 0.0
        %999 = vmatpush1.msra.mxu0 0.0
        %1000 = vmatprep.subr.mxu0 0.0
        %1001 = vmatpush1.msra.mxu0 0.0
        %1002 = vmatprep.mubr.f32.mxu0 0.0
        %1003 = vmatmul.mubr.f32.gmra.mrb[0].mxu0 %v931
        %v1004 = vpop.f32.mrb[0].mxu0
        %v1005 = vadd.f32 0.0, %v1004
        %v1006 = vpop.f32.mrb[0].mxu0
        %v1007 = vadd.f32 0.0, %v1006
        %1008 = vdwg.mxu0
        %1009 = vmatprep.subr.mxu0 %v467
        %1010 = vmatpush1.msra.mxu0 %v466
        %1011 = vmatprep.subr.mxu0 %v471
        %1012 = vmatpush1.msra.mxu0 %v470
        %1013 = vmatprep.subr.mxu0 %v475
        %1014 = vmatpush1.msra.mxu0 %v474
        %1015 = vmatprep.subr.mxu0 %v479
        %1016 = vmatpush1.msra.mxu0 %v478
        %1017 = vmatprep.subr.mxu0 %v483
        %1018 = vmatpush1.msra.mxu0 %v482
        %1019 = vmatprep.subr.mxu0 %v487
        %1020 = vmatpush1.msra.mxu0 %v486
        %1021 = vmatprep.subr.mxu0 %v491
        %1022 = vmatpush1.msra.mxu0 %v490
        %1023 = vmatprep.subr.mxu0 %v495
        %1024 = vmatpush1.msra.mxu0 %v494
        %1025 = vmatprep.subr.mxu0 %v499
        %1026 = vmatpush1.msra.mxu0 %v498
        %1027 = vmatprep.subr.mxu0 %v503
        %1028 = vmatpush1.msra.mxu0 %v502
        %1029 = vmatprep.subr.mxu0 %v507
        %1030 = vmatpush1.msra.mxu0 %v506
        %1031 = vmatprep.subr.mxu0 %v511
        %1032 = vmatpush1.msra.mxu0 %v510
        %1033 = vmatprep.subr.mxu0 %v515
        %1034 = vmatpush1.msra.mxu0 %v514
        %1035 = vmatprep.subr.mxu0 %v519
        %1036 = vmatpush1.msra.mxu0 %v518
        %1037 = vmatprep.subr.mxu0 %v523
        %1038 = vmatpush1.msra.mxu0 %v522
        %1039 = vmatprep.subr.mxu0 %v527
        %1040 = vmatpush1.msra.mxu0 %v526
        %1041 = vmatprep.subr.mxu0 0.0
        %1042 = vmatpush1.msra.mxu0 0.0
        %1043 = vmatprep.subr.mxu0 0.0
        %1044 = vmatpush1.msra.mxu0 0.0
        %1045 = vmatprep.subr.mxu0 0.0
        %1046 = vmatpush1.msra.mxu0 0.0
        %1047 = vmatprep.subr.mxu0 0.0
        %1048 = vmatpush1.msra.mxu0 0.0
        %1049 = vmatprep.subr.mxu0 0.0
        %1050 = vmatpush1.msra.mxu0 0.0
        %1051 = vmatprep.subr.mxu0 0.0
        %1052 = vmatpush1.msra.mxu0 0.0
        %1053 = vmatprep.subr.mxu0 0.0
        %1054 = vmatpush1.msra.mxu0 0.0
        %1055 = vmatprep.subr.mxu0 0.0
        %1056 = vmatpush1.msra.mxu0 0.0
        %1057 = vmatprep.subr.mxu0 0.0
        %1058 = vmatpush1.msra.mxu0 0.0
        %1059 = vmatprep.subr.mxu0 0.0
        %1060 = vmatpush1.msra.mxu0 0.0
        %1061 = vmatprep.subr.mxu0 0.0
        %1062 = vmatpush1.msra.mxu0 0.0
        %1063 = vmatprep.subr.mxu0 0.0
        %1064 = vmatpush1.msra.mxu0 0.0
        %1065 = vmatprep.subr.mxu0 0.0
        %1066 = vmatpush1.msra.mxu0 0.0
        %1067 = vmatprep.subr.mxu0 0.0
        %1068 = vmatpush1.msra.mxu0 0.0
        %1069 = vmatprep.subr.mxu0 0.0
        %1070 = vmatpush1.msra.mxu0 0.0
        %1071 = vmatprep.subr.mxu0 0.0
        %1072 = vmatpush1.msra.mxu0 0.0
        %1073 = vmatprep.mubr.f32.mxu0 0.0
        %1074 = vmatmul.mubr.f32.gmra.mrb[0].mxu0 %v931
        %v1075 = vpop.f32.mrb[0].mxu0
        %v1076 = vadd.f32 0.0, %v1075
        %v1077 = vpop.f32.mrb[0].mxu0
        %v1078 = vadd.f32 0.0, %v1077
        %1079 = vdwg.mxu0
        %v1080 = vadd.f32 %v934, %v1005
        %v1081 = vadd.f32 %v935, %v1007
        %v1082 = vadd.f32 %v936, %v1076
        %v1083 = vadd.f32 %v937, %v1078
        %v1084 = vxor.u32 %v1080, 2147483648
        %v1085 = vmul.f32 %v1084, 1.442695
        %v1086 = vpow.pop %v1085
        %v1087 = vadd.f32 %v1086, 1.0
        %v1088 = vrcp.pop %v1087
        %v1089 = vmul.f32 1.0, %v1088
        %v1090 = vxor.u32 %v1081, 2147483648
        %v1091 = vmul.f32 %v1090, 1.442695
        %v1092 = vpow.pop %v1091
        %v1093 = vadd.f32 %v1092, 1.0
        %v1094 = vrcp.pop %v1093
        %v1095 = vmul.f32 1.0, %v1094
        %v1096 = vtanh.pop %v1082
        %v1097 = vxor.u32 %v1083, 2147483648
        %v1098 = vmul.f32 %v1097, 1.442695
        %v1099 = vpow.pop %v1098
        %v1100 = vadd.f32 %v1099, 1.0
        %v1101 = vrcp.pop %v1100
        %v1102 = vmul.f32 1.0, %v1101
        %v1103 = vmul.f32 %v1095, %v932
        %v1104 = vmul.f32 %v1089, %v1096
        %v1105 = vadd.f32 %v1103, %v1104
        %v1106 = vtanh.pop %v1105
        %v1107 = vmul.f32 %v1102, %v1106
        %s1108 = scalar_lea.vmem %s380, 8
        %v1109 = vld [vmem:[%s1108] sm:$0xff]
        %v1110 = vsub.f32 %v1107, %v931
        %v1111 = vmul.f32 %v1109, %v1110
        %v1112 = vadd.f32 %v931, %v1111
        %1113 = vst [vmem:[#allocation4] sm:$0xff] %v1112
        %v1114 = vsub.f32 %v1105, %v932
        %v1115 = vmul.f32 %v1109, %v1114
        %v1116 = vadd.f32 %v932, %v1115
        %1117 = vst [vmem:[#allocation5] sm:$0xff] %v1116
        %v1118 = vmul.f32 %v1109, %v1107
        %s1119 = scalar_lea.vmem [#allocation2], 8
        %1120 = vst [vmem:[%s1119] sm:$0xff] %v1118
        %v1121 = vld [vmem:[#allocation4] sm:$0xff]
        %v1122 = vld [vmem:[#allocation5] sm:$0xff]
        %s1123 = scalar_lea.vmem [#allocation3], 64
        %v1124 = vld [vmem:[%s1123] sm:$0xff]
        %v1125 = vld [vmem:[%s1123 + $0x8] sm:$0xff]
        %v1126 = vld [vmem:[%s1123 + $0x10] sm:$0xff]
        %v1127 = vld [vmem:[%s1123 + $0x18] sm:$0xff]
        %1128 = vmatprep.subr.mxu0 %v465
        %1129 = vmatpush1.msra.mxu0 %v464
        %1130 = vmatprep.subr.mxu0 %v469
        %1131 = vmatpush1.msra.mxu0 %v468
        %1132 = vmatprep.subr.mxu0 %v473
        %1133 = vmatpush1.msra.mxu0 %v472
        %1134 = vmatprep.subr.mxu0 %v477
        %1135 = vmatpush1.msra.mxu0 %v476
        %1136 = vmatprep.subr.mxu0 %v481
        %1137 = vmatpush1.msra.mxu0 %v480
        %1138 = vmatprep.subr.mxu0 %v485
        %1139 = vmatpush1.msra.mxu0 %v484
        %1140 = vmatprep.subr.mxu0 %v489
        %1141 = vmatpush1.msra.mxu0 %v488
        %1142 = vmatprep.subr.mxu0 %v493
        %1143 = vmatpush1.msra.mxu0 %v492
        %1144 = vmatprep.subr.mxu0 %v497
        %1145 = vmatpush1.msra.mxu0 %v496
        %1146 = vmatprep.subr.mxu0 %v501
        %1147 = vmatpush1.msra.mxu0 %v500
        %1148 = vmatprep.subr.mxu0 %v505
        %1149 = vmatpush1.msra.mxu0 %v504
        %1150 = vmatprep.subr.mxu0 %v509
        %1151 = vmatpush1.msra.mxu0 %v508
        %1152 = vmatprep.subr.mxu0 %v513
        %1153 = vmatpush1.msra.mxu0 %v512
        %1154 = vmatprep.subr.mxu0 %v517
        %1155 = vmatpush1.msra.mxu0 %v516
        %1156 = vmatprep.subr.mxu0 %v521
        %1157 = vmatpush1.msra.mxu0 %v520
        %1158 = vmatprep.subr.mxu0 %v525
        %1159 = vmatpush1.msra.mxu0 %v524
        %1160 = vmatprep.subr.mxu0 0.0
        %1161 = vmatpush1.msra.mxu0 0.0
        %1162 = vmatprep.subr.mxu0 0.0
        %1163 = vmatpush1.msra.mxu0 0.0
        %1164 = vmatprep.subr.mxu0 0.0
        %1165 = vmatpush1.msra.mxu0 0.0
        %1166 = vmatprep.subr.mxu0 0.0
        %1167 = vmatpush1.msra.mxu0 0.0
        %1168 = vmatprep.subr.mxu0 0.0
        %1169 = vmatpush1.msra.mxu0 0.0
        %1170 = vmatprep.subr.mxu0 0.0
        %1171 = vmatpush1.msra.mxu0 0.0
        %1172 = vmatprep.subr.mxu0 0.0
        %1173 = vmatpush1.msra.mxu0 0.0
        %1174 = vmatprep.subr.mxu0 0.0
        %1175 = vmatpush1.msra.mxu0 0.0
        %1176 = vmatprep.subr.mxu0 0.0
        %1177 = vmatpush1.msra.mxu0 0.0
        %1178 = vmatprep.subr.mxu0 0.0
        %1179 = vmatpush1.msra.mxu0 0.0
        %1180 = vmatprep.subr.mxu0 0.0
        %1181 = vmatpush1.msra.mxu0 0.0
        %1182 = vmatprep.subr.mxu0 0.0
        %1183 = vmatpush1.msra.mxu0 0.0
        %1184 = vmatprep.subr.mxu0 0.0
        %1185 = vmatpush1.msra.mxu0 0.0
        %1186 = vmatprep.subr.mxu0 0.0
        %1187 = vmatpush1.msra.mxu0 0.0
        %1188 = vmatprep.subr.mxu0 0.0
        %1189 = vmatpush1.msra.mxu0 0.0
        %1190 = vmatprep.subr.mxu0 0.0
        %1191 = vmatpush1.msra.mxu0 0.0
        %1192 = vmatprep.mubr.f32.mxu0 0.0
        %1193 = vmatmul.mubr.f32.gmra.mrb[0].mxu0 %v1121
        %v1194 = vpop.f32.mrb[0].mxu0
        %v1195 = vadd.f32 0.0, %v1194
        %v1196 = vpop.f32.mrb[0].mxu0
        %v1197 = vadd.f32 0.0, %v1196
        %1198 = vdwg.mxu0
        %1199 = vmatprep.subr.mxu0 %v467
        %1200 = vmatpush1.msra.mxu0 %v466
        %1201 = vmatprep.subr.mxu0 %v471
        %1202 = vmatpush1.msra.mxu0 %v470
        %1203 = vmatprep.subr.mxu0 %v475
        %1204 = vmatpush1.msra.mxu0 %v474
        %1205 = vmatprep.subr.mxu0 %v479
        %1206 = vmatpush1.msra.mxu0 %v478
        %1207 = vmatprep.subr.mxu0 %v483
        %1208 = vmatpush1.msra.mxu0 %v482
        %1209 = vmatprep.subr.mxu0 %v487
        %1210 = vmatpush1.msra.mxu0 %v486
        %1211 = vmatprep.subr.mxu0 %v491
        %1212 = vmatpush1.msra.mxu0 %v490
        %1213 = vmatprep.subr.mxu0 %v495
        %1214 = vmatpush1.msra.mxu0 %v494
        %1215 = vmatprep.subr.mxu0 %v499
        %1216 = vmatpush1.msra.mxu0 %v498
        %1217 = vmatprep.subr.mxu0 %v503
        %1218 = vmatpush1.msra.mxu0 %v502
        %1219 = vmatprep.subr.mxu0 %v507
        %1220 = vmatpush1.msra.mxu0 %v506
        %1221 = vmatprep.subr.mxu0 %v511
        %1222 = vmatpush1.msra.mxu0 %v510
        %1223 = vmatprep.subr.mxu0 %v515
        %1224 = vmatpush1.msra.mxu0 %v514
        %1225 = vmatprep.subr.mxu0 %v519
        %1226 = vmatpush1.msra.mxu0 %v518
        %1227 = vmatprep.subr.mxu0 %v523
        %1228 = vmatpush1.msra.mxu0 %v522
        %1229 = vmatprep.subr.mxu0 %v527
        %1230 = vmatpush1.msra.mxu0 %v526
        %1231 = vmatprep.subr.mxu0 0.0
        %1232 = vmatpush1.msra.mxu0 0.0
        %1233 = vmatprep.subr.mxu0 0.0
        %1234 = vmatpush1.msra.mxu0 0.0
        %1235 = vmatprep.subr.mxu0 0.0
        %1236 = vmatpush1.msra.mxu0 0.0
        %1237 = vmatprep.subr.mxu0 0.0
        %1238 = vmatpush1.msra.mxu0 0.0
        %1239 = vmatprep.subr.mxu0 0.0
        %1240 = vmatpush1.msra.mxu0 0.0
        %1241 = vmatprep.subr.mxu0 0.0
        %1242 = vmatpush1.msra.mxu0 0.0
        %1243 = vmatprep.subr.mxu0 0.0
        %1244 = vmatpush1.msra.mxu0 0.0
        %1245 = vmatprep.subr.mxu0 0.0
        %1246 = vmatpush1.msra.mxu0 0.0
        %1247 = vmatprep.subr.mxu0 0.0
        %1248 = vmatpush1.msra.mxu0 0.0
        %1249 = vmatprep.subr.mxu0 0.0
        %1250 = vmatpush1.msra.mxu0 0.0
        %1251 = vmatprep.subr.mxu0 0.0
        %1252 = vmatpush1.msra.mxu0 0.0
        %1253 = vmatprep.subr.mxu0 0.0
        %1254 = vmatpush1.msra.mxu0 0.0
        %1255 = vmatprep.subr.mxu0 0.0
        %1256 = vmatpush1.msra.mxu0 0.0
        %1257 = vmatprep.subr.mxu0 0.0
        %1258 = vmatpush1.msra.mxu0 0.0
        %1259 = vmatprep.subr.mxu0 0.0
        %1260 = vmatpush1.msra.mxu0 0.0
        %1261 = vmatprep.subr.mxu0 0.0
        %1262 = vmatpush1.msra.mxu0 0.0
        %1263 = vmatprep.mubr.f32.mxu0 0.0
        %1264 = vmatmul.mubr.f32.gmra.mrb[0].mxu0 %v1121
        %v1265 = vpop.f32.mrb[0].mxu0
        %v1266 = vadd.f32 0.0, %v1265
        %v1267 = vpop.f32.mrb[0].mxu0
        %v1268 = vadd.f32 0.0, %v1267
        %1269 = vdwg.mxu0
        %v1270 = vadd.f32 %v1124, %v1195
        %v1271 = vadd.f32 %v1125, %v1197
        %v1272 = vadd.f32 %v1126, %v1266
        %v1273 = vadd.f32 %v1127, %v1268
        %v1274 = vxor.u32 %v1270, 2147483648
        %v1275 = vmul.f32 %v1274, 1.442695
        %v1276 = vpow.pop %v1275
        %v1277 = vadd.f32 %v1276, 1.0
        %v1278 = vrcp.pop %v1277
        %v1279 = vmul.f32 1.0, %v1278
        %v1280 = vxor.u32 %v1271, 2147483648
        %v1281 = vmul.f32 %v1280, 1.442695
        %v1282 = vpow.pop %v1281
        %v1283 = vadd.f32 %v1282, 1.0
        %v1284 = vrcp.pop %v1283
        %v1285 = vmul.f32 1.0, %v1284
        %v1286 = vtanh.pop %v1272
        %v1287 = vxor.u32 %v1273, 2147483648
        %v1288 = vmul.f32 %v1287, 1.442695
        %v1289 = vpow.pop %v1288
        %v1290 = vadd.f32 %v1289, 1.0
        %v1291 = vrcp.pop %v1290
        %v1292 = vmul.f32 1.0, %v1291
        %v1293 = vmul.f32 %v1285, %v1122
        %v1294 = vmul.f32 %v1279, %v1286
        %v1295 = vadd.f32 %v1293, %v1294
        %v1296 = vtanh.pop %v1295
        %v1297 = vmul.f32 %v1292, %v1296
        %s1298 = scalar_lea.vmem %s380, 16
        %v1299 = vld [vmem:[%s1298] sm:$0xff]
        %v1300 = vsub.f32 %v1297, %v1121
        %v1301 = vmul.f32 %v1299, %v1300
        %v1302 = vadd.f32 %v1121, %v1301
        %1303 = vst [vmem:[#allocation4] sm:$0xff] %v1302
        %v1304 = vsub.f32 %v1295, %v1122
        %v1305 = vmul.f32 %v1299, %v1304
        %v1306 = vadd.f32 %v1122, %v1305
        %1307 = vst [vmem:[#allocation5] sm:$0xff] %v1306
        %v1308 = vmul.f32 %v1299, %v1297
        %s1309 = scalar_lea.vmem [#allocation2], 16
        %1310 = vst [vmem:[%s1309] sm:$0xff] %v1308
        %v1311 = vld [vmem:[#allocation4] sm:$0xff]
        %v1312 = vld [vmem:[#allocation5] sm:$0xff]
        %s1313 = scalar_lea.vmem [#allocation3], 96
        %v1314 = vld [vmem:[%s1313] sm:$0xff]
        %v1315 = vld [vmem:[%s1313 + $0x8] sm:$0xff]
        %v1316 = vld [vmem:[%s1313 + $0x10] sm:$0xff]
        %v1317 = vld [vmem:[%s1313 + $0x18] sm:$0xff]
        %1318 = vmatprep.subr.mxu0 %v465
        %1319 = vmatpush1.msra.mxu0 %v464
        %1320 = vmatprep.subr.mxu0 %v469
        %1321 = vmatpush1.msra.mxu0 %v468
        %1322 = vmatprep.subr.mxu0 %v473
        %1323 = vmatpush1.msra.mxu0 %v472
        %1324 = vmatprep.subr.mxu0 %v477
        %1325 = vmatpush1.msra.mxu0 %v476
        %1326 = vmatprep.subr.mxu0 %v481
        %1327 = vmatpush1.msra.mxu0 %v480
        %1328 = vmatprep.subr.mxu0 %v485
        %1329 = vmatpush1.msra.mxu0 %v484
        %1330 = vmatprep.subr.mxu0 %v489
        %1331 = vmatpush1.msra.mxu0 %v488
        %1332 = vmatprep.subr.mxu0 %v493
        %1333 = vmatpush1.msra.mxu0 %v492
        %1334 = vmatprep.subr.mxu0 %v497
        %1335 = vmatpush1.msra.mxu0 %v496
        %1336 = vmatprep.subr.mxu0 %v501
        %1337 = vmatpush1.msra.mxu0 %v500
        %1338 = vmatprep.subr.mxu0 %v505
        %1339 = vmatpush1.msra.mxu0 %v504
        %1340 = vmatprep.subr.mxu0 %v509
        %1341 = vmatpush1.msra.mxu0 %v508
        %1342 = vmatprep.subr.mxu0 %v513
        %1343 = vmatpush1.msra.mxu0 %v512
        %1344 = vmatprep.subr.mxu0 %v517
        %1345 = vmatpush1.msra.mxu0 %v516
        %1346 = vmatprep.subr.mxu0 %v521
        %1347 = vmatpush1.msra.mxu0 %v520
        %1348 = vmatprep.subr.mxu0 %v525
        %1349 = vmatpush1.msra.mxu0 %v524
        %1350 = vmatprep.subr.mxu0 0.0
        %1351 = vmatpush1.msra.mxu0 0.0
        %1352 = vmatprep.subr.mxu0 0.0
        %1353 = vmatpush1.msra.mxu0 0.0
        %1354 = vmatprep.subr.mxu0 0.0
        %1355 = vmatpush1.msra.mxu0 0.0
        %1356 = vmatprep.subr.mxu0 0.0
        %1357 = vmatpush1.msra.mxu0 0.0
        %1358 = vmatprep.subr.mxu0 0.0
        %1359 = vmatpush1.msra.mxu0 0.0
        %1360 = vmatprep.subr.mxu0 0.0
        %1361 = vmatpush1.msra.mxu0 0.0
        %1362 = vmatprep.subr.mxu0 0.0
        %1363 = vmatpush1.msra.mxu0 0.0
        %1364 = vmatprep.subr.mxu0 0.0
        %1365 = vmatpush1.msra.mxu0 0.0
        %1366 = vmatprep.subr.mxu0 0.0
        %1367 = vmatpush1.msra.mxu0 0.0
        %1368 = vmatprep.subr.mxu0 0.0
        %1369 = vmatpush1.msra.mxu0 0.0
        %1370 = vmatprep.subr.mxu0 0.0
        %1371 = vmatpush1.msra.mxu0 0.0
        %1372 = vmatprep.subr.mxu0 0.0
        %1373 = vmatpush1.msra.mxu0 0.0
        %1374 = vmatprep.subr.mxu0 0.0
        %1375 = vmatpush1.msra.mxu0 0.0
        %1376 = vmatprep.subr.mxu0 0.0
        %1377 = vmatpush1.msra.mxu0 0.0
        %1378 = vmatprep.subr.mxu0 0.0
        %1379 = vmatpush1.msra.mxu0 0.0
        %1380 = vmatprep.subr.mxu0 0.0
        %1381 = vmatpush1.msra.mxu0 0.0
        %1382 = vmatprep.mubr.f32.mxu0 0.0
        %1383 = vmatmul.mubr.f32.gmra.mrb[0].mxu0 %v1311
        %v1384 = vpop.f32.mrb[0].mxu0
        %v1385 = vadd.f32 0.0, %v1384
        %v1386 = vpop.f32.mrb[0].mxu0
        %v1387 = vadd.f32 0.0, %v1386
        %1388 = vdwg.mxu0
        %1389 = vmatprep.subr.mxu0 %v467
        %1390 = vmatpush1.msra.mxu0 %v466
        %1391 = vmatprep.subr.mxu0 %v471
        %1392 = vmatpush1.msra.mxu0 %v470
        %1393 = vmatprep.subr.mxu0 %v475
        %1394 = vmatpush1.msra.mxu0 %v474
        %1395 = vmatprep.subr.mxu0 %v479
        %1396 = vmatpush1.msra.mxu0 %v478
        %1397 = vmatprep.subr.mxu0 %v483
        %1398 = vmatpush1.msra.mxu0 %v482
        %1399 = vmatprep.subr.mxu0 %v487
        %1400 = vmatpush1.msra.mxu0 %v486
        %1401 = vmatprep.subr.mxu0 %v491
        %1402 = vmatpush1.msra.mxu0 %v490
        %1403 = vmatprep.subr.mxu0 %v495
        %1404 = vmatpush1.msra.mxu0 %v494
        %1405 = vmatprep.subr.mxu0 %v499
        %1406 = vmatpush1.msra.mxu0 %v498
        %1407 = vmatprep.subr.mxu0 %v503
        %1408 = vmatpush1.msra.mxu0 %v502
        %1409 = vmatprep.subr.mxu0 %v507
        %1410 = vmatpush1.msra.mxu0 %v506
        %1411 = vmatprep.subr.mxu0 %v511
        %1412 = vmatpush1.msra.mxu0 %v510
        %1413 = vmatprep.subr.mxu0 %v515
        %1414 = vmatpush1.msra.mxu0 %v514
        %1415 = vmatprep.subr.mxu0 %v519
        %1416 = vmatpush1.msra.mxu0 %v518
        %1417 = vmatprep.subr.mxu0 %v523
        %1418 = vmatpush1.msra.mxu0 %v522
        %1419 = vmatprep.subr.mxu0 %v527
        %1420 = vmatpush1.msra.mxu0 %v526
        %1421 = vmatprep.subr.mxu0 0.0
        %1422 = vmatpush1.msra.mxu0 0.0
        %1423 = vmatprep.subr.mxu0 0.0
        %1424 = vmatpush1.msra.mxu0 0.0
        %1425 = vmatprep.subr.mxu0 0.0
        %1426 = vmatpush1.msra.mxu0 0.0
        %1427 = vmatprep.subr.mxu0 0.0
        %1428 = vmatpush1.msra.mxu0 0.0
        %1429 = vmatprep.subr.mxu0 0.0
        %1430 = vmatpush1.msra.mxu0 0.0
        %1431 = vmatprep.subr.mxu0 0.0
        %1432 = vmatpush1.msra.mxu0 0.0
        %1433 = vmatprep.subr.mxu0 0.0
        %1434 = vmatpush1.msra.mxu0 0.0
        %1435 = vmatprep.subr.mxu0 0.0
        %1436 = vmatpush1.msra.mxu0 0.0
        %1437 = vmatprep.subr.mxu0 0.0
        %1438 = vmatpush1.msra.mxu0 0.0
        %1439 = vmatprep.subr.mxu0 0.0
        %1440 = vmatpush1.msra.mxu0 0.0
        %1441 = vmatprep.subr.mxu0 0.0
        %1442 = vmatpush1.msra.mxu0 0.0
        %1443 = vmatprep.subr.mxu0 0.0
        %1444 = vmatpush1.msra.mxu0 0.0
        %1445 = vmatprep.subr.mxu0 0.0
        %1446 = vmatpush1.msra.mxu0 0.0
        %1447 = vmatprep.subr.mxu0 0.0
        %1448 = vmatpush1.msra.mxu0 0.0
        %1449 = vmatprep.subr.mxu0 0.0
        %1450 = vmatpush1.msra.mxu0 0.0
        %1451 = vmatprep.subr.mxu0 0.0
        %1452 = vmatpush1.msra.mxu0 0.0
        %1453 = vmatprep.mubr.f32.mxu0 0.0
        %1454 = vmatmul.mubr.f32.gmra.mrb[0].mxu0 %v1311
        %v1455 = vpop.f32.mrb[0].mxu0
        %v1456 = vadd.f32 0.0, %v1455
        %v1457 = vpop.f32.mrb[0].mxu0
        %v1458 = vadd.f32 0.0, %v1457
        %1459 = vdwg.mxu0
        %v1460 = vadd.f32 %v1314, %v1385
        %v1461 = vadd.f32 %v1315, %v1387
        %v1462 = vadd.f32 %v1316, %v1456
        %v1463 = vadd.f32 %v1317, %v1458
        %v1464 = vxor.u32 %v1460, 2147483648
        %v1465 = vmul.f32 %v1464, 1.442695
        %v1466 = vpow.pop %v1465
        %v1467 = vadd.f32 %v1466, 1.0
        %v1468 = vrcp.pop %v1467
        %v1469 = vmul.f32 1.0, %v1468
        %v1470 = vxor.u32 %v1461, 2147483648
        %v1471 = vmul.f32 %v1470, 1.442695
        %v1472 = vpow.pop %v1471
        %v1473 = vadd.f32 %v1472, 1.0
        %v1474 = vrcp.pop %v1473
        %v1475 = vmul.f32 1.0, %v1474
        %v1476 = vtanh.pop %v1462
        %v1477 = vxor.u32 %v1463, 2147483648
        %v1478 = vmul.f32 %v1477, 1.442695
        %v1479 = vpow.pop %v1478
        %v1480 = vadd.f32 %v1479, 1.0
        %v1481 = vrcp.pop %v1480
        %v1482 = vmul.f32 1.0, %v1481
        %v1483 = vmul.f32 %v1475, %v1312
        %v1484 = vmul.f32 %v1469, %v1476
        %v1485 = vadd.f32 %v1483, %v1484
        %v1486 = vtanh.pop %v1485
        %v1487 = vmul.f32 %v1482, %v1486
        %s1488 = scalar_lea.vmem %s380, 24
        %v1489 = vld [vmem:[%s1488] sm:$0xff]
        %v1490 = vsub.f32 %v1487, %v1311
        %v1491 = vmul.f32 %v1489, %v1490
        %v1492 = vadd.f32 %v1311, %v1491
        %1493 = vst [vmem:[#allocation4] sm:$0xff] %v1492
        %v1494 = vsub.f32 %v1485, %v1312
        %v1495 = vmul.f32 %v1489, %v1494
        %v1496 = vadd.f32 %v1312, %v1495
        %1497 = vst [vmem:[#allocation5] sm:$0xff] %v1496
        %v1498 = vmul.f32 %v1489, %v1487
        %s1499 = scalar_lea.vmem [#allocation2], 24
        %1500 = vst [vmem:[%s1499] sm:$0xff] %v1498
        %v1501 = vld [vmem:[#allocation2] sm:$0xff]
        %v1502 = vld [vmem:[#allocation2 + $0x8] sm:$0xff]
        %v1503 = vld [vmem:[#allocation2 + $0x10] sm:$0xff]
        %v1504 = vld [vmem:[#allocation2 + $0x18] sm:$0xff]
        %v1505 = vld [vmem:[#allocation6] sm:$0xff]
        %v1506 = vld [vmem:[#allocation6 + $0x8] sm:$0xff]
        %v1507 = vld [vmem:[#allocation6 + $0x10] sm:$0xff]
        %v1508 = vld [vmem:[#allocation6 + $0x18] sm:$0xff]
        %v1509 = vld [vmem:[#allocation6 + $0x20] sm:$0xff]
        %v1510 = vld [vmem:[#allocation6 + $0x28] sm:$0xff]
        %v1511 = vld [vmem:[#allocation6 + $0x30] sm:$0xff]
        %v1512 = vld [vmem:[#allocation6 + $0x38] sm:$0xff]
        %v1513 = vld [vmem:[#allocation6 + $0x40] sm:$0xff]
        %v1514 = vld [vmem:[#allocation6 + $0x48] sm:$0xff]
        %v1515 = vld [vmem:[#allocation6 + $0x50] sm:$0xff]
        %v1516 = vld [vmem:[#allocation6 + $0x58] sm:$0xff]
        %v1517 = vld [vmem:[#allocation6 + $0x60] sm:$0xff]
        %v1518 = vld [vmem:[#allocation6 + $0x68] sm:$0xff]
        %v1519 = vld [vmem:[#allocation6 + $0x70] sm:$0xff]
        %v1520 = vld [vmem:[#allocation6 + $0x78] sm:$0xff]
        %v1521 = vld [vmem:[#allocation6 + $0x80] sm:$0xff]
        %v1522 = vld [vmem:[#allocation6 + $0x88] sm:$0xff]
        %v1523 = vld [vmem:[#allocation6 + $0x90] sm:$0xff]
        %v1524 = vld [vmem:[#allocation6 + $0x98] sm:$0xff]
        %v1525 = vld [vmem:[#allocation6 + $0xa0] sm:$0xff]
        %v1526 = vld [vmem:[#allocation6 + $0xa8] sm:$0xff]
        %v1527 = vld [vmem:[#allocation6 + $0xb0] sm:$0xff]
        %v1528 = vld [vmem:[#allocation6 + $0xb8] sm:$0xff]
        %v1529 = vld [vmem:[#allocation6 + $0xc0] sm:$0xff]
        %v1530 = vld [vmem:[#allocation6 + $0xc8] sm:$0xff]
        %v1531 = vld [vmem:[#allocation6 + $0xd0] sm:$0xff]
        %v1532 = vld [vmem:[#allocation6 + $0xd8] sm:$0xff]
        %v1533 = vld [vmem:[#allocation6 + $0xe0] sm:$0xff]
        %v1534 = vld [vmem:[#allocation6 + $0xe8] sm:$0xff]
        %v1535 = vld [vmem:[#allocation6 + $0xf0] sm:$0xff]
        %v1536 = vld [vmem:[#allocation6 + $0xf8] sm:$0xff]
        %v1537 = vld [vmem:[#allocation6 + $0x100] sm:$0xff]
        %v1538 = vld [vmem:[#allocation6 + $0x108] sm:$0xff]
        %v1539 = vld [vmem:[#allocation6 + $0x110] sm:$0xff]
        %v1540 = vld [vmem:[#allocation6 + $0x118] sm:$0xff]
        %v1541 = vld [vmem:[#allocation6 + $0x120] sm:$0xff]
        %v1542 = vld [vmem:[#allocation6 + $0x128] sm:$0xff]
        %v1543 = vld [vmem:[#allocation6 + $0x130] sm:$0xff]
        %v1544 = vld [vmem:[#allocation6 + $0x138] sm:$0xff]
        %v1545 = vld [vmem:[#allocation6 + $0x140] sm:$0xff]
        %v1546 = vld [vmem:[#allocation6 + $0x148] sm:$0xff]
        %v1547 = vld [vmem:[#allocation6 + $0x150] sm:$0xff]
        %v1548 = vld [vmem:[#allocation6 + $0x158] sm:$0xff]
        %v1549 = vld [vmem:[#allocation6 + $0x160] sm:$0xff]
        %v1550 = vld [vmem:[#allocation6 + $0x168] sm:$0xff]
        %v1551 = vld [vmem:[#allocation6 + $0x170] sm:$0xff]
        %v1552 = vld [vmem:[#allocation6 + $0x178] sm:$0xff]
        %v1553 = vld [vmem:[#allocation6 + $0x180] sm:$0xff]
        %v1554 = vld [vmem:[#allocation6 + $0x188] sm:$0xff]
        %v1555 = vld [vmem:[#allocation6 + $0x190] sm:$0xff]
        %v1556 = vld [vmem:[#allocation6 + $0x198] sm:$0xff]
        %v1557 = vld [vmem:[#allocation6 + $0x1a0] sm:$0xff]
        %v1558 = vld [vmem:[#allocation6 + $0x1a8] sm:$0xff]
        %v1559 = vld [vmem:[#allocation6 + $0x1b0] sm:$0xff]
        %v1560 = vld [vmem:[#allocation6 + $0x1b8] sm:$0xff]
        %v1561 = vld [vmem:[#allocation6 + $0x1c0] sm:$0xff]
        %v1562 = vld [vmem:[#allocation6 + $0x1c8] sm:$0xff]
        %v1563 = vld [vmem:[#allocation6 + $0x1d0] sm:$0xff]
        %v1564 = vld [vmem:[#allocation6 + $0x1d8] sm:$0xff]
        %v1565 = vld [vmem:[#allocation6 + $0x1e0] sm:$0xff]
        %v1566 = vld [vmem:[#allocation6 + $0x1e8] sm:$0xff]
        %v1567 = vld [vmem:[#allocation6 + $0x1f0] sm:$0xff]
        %v1568 = vld [vmem:[#allocation6 + $0x1f8] sm:$0xff]
        %s1569 = scalar_lea.vmem [#allocation8], 512
        %v1570 = vld [vmem:[%s1569] sm:$0xff]
        %v1571 = vld [vmem:[%s1569 + $0x8] sm:$0xff]
        %v1572 = vld [vmem:[%s1569 + $0x10] sm:$0xff]
        %v1573 = vld [vmem:[%s1569 + $0x18] sm:$0xff]
        %v1574 = vld [vmem:[%s1569 + $0x20] sm:$0xff]
        %v1575 = vld [vmem:[%s1569 + $0x28] sm:$0xff]
        %v1576 = vld [vmem:[%s1569 + $0x30] sm:$0xff]
        %v1577 = vld [vmem:[%s1569 + $0x38] sm:$0xff]
        %v1578 = vld [vmem:[%s1569 + $0x40] sm:$0xff]
        %v1579 = vld [vmem:[%s1569 + $0x48] sm:$0xff]
        %v1580 = vld [vmem:[%s1569 + $0x50] sm:$0xff]
        %v1581 = vld [vmem:[%s1569 + $0x58] sm:$0xff]
        %v1582 = vld [vmem:[%s1569 + $0x60] sm:$0xff]
        %v1583 = vld [vmem:[%s1569 + $0x68] sm:$0xff]
        %v1584 = vld [vmem:[%s1569 + $0x70] sm:$0xff]
        %v1585 = vld [vmem:[%s1569 + $0x78] sm:$0xff]
        %v1586 = vld [vmem:[%s1569 + $0x80] sm:$0xff]
        %v1587 = vld [vmem:[%s1569 + $0x88] sm:$0xff]
        %v1588 = vld [vmem:[%s1569 + $0x90] sm:$0xff]
        %v1589 = vld [vmem:[%s1569 + $0x98] sm:$0xff]
        %v1590 = vld [vmem:[%s1569 + $0xa0] sm:$0xff]
        %v1591 = vld [vmem:[%s1569 + $0xa8] sm:$0xff]
        %v1592 = vld [vmem:[%s1569 + $0xb0] sm:$0xff]
        %v1593 = vld [vmem:[%s1569 + $0xb8] sm:$0xff]
        %v1594 = vld [vmem:[%s1569 + $0xc0] sm:$0xff]
        %v1595 = vld [vmem:[%s1569 + $0xc8] sm:$0xff]
        %v1596 = vld [vmem:[%s1569 + $0xd0] sm:$0xff]
        %v1597 = vld [vmem:[%s1569 + $0xd8] sm:$0xff]
        %v1598 = vld [vmem:[%s1569 + $0xe0] sm:$0xff]
        %v1599 = vld [vmem:[%s1569 + $0xe8] sm:$0xff]
        %v1600 = vld [vmem:[%s1569 + $0xf0] sm:$0xff]
        %v1601 = vld [vmem:[%s1569 + $0xf8] sm:$0xff]
        %v1602 = vld [vmem:[%s1569 + $0x100] sm:$0xff]
        %v1603 = vld [vmem:[%s1569 + $0x108] sm:$0xff]
        %v1604 = vld [vmem:[%s1569 + $0x110] sm:$0xff]
        %v1605 = vld [vmem:[%s1569 + $0x118] sm:$0xff]
        %v1606 = vld [vmem:[%s1569 + $0x120] sm:$0xff]
        %v1607 = vld [vmem:[%s1569 + $0x128] sm:$0xff]
        %v1608 = vld [vmem:[%s1569 + $0x130] sm:$0xff]
        %v1609 = vld [vmem:[%s1569 + $0x138] sm:$0xff]
        %v1610 = vld [vmem:[%s1569 + $0x140] sm:$0xff]
        %v1611 = vld [vmem:[%s1569 + $0x148] sm:$0xff]
        %v1612 = vld [vmem:[%s1569 + $0x150] sm:$0xff]
        %v1613 = vld [vmem:[%s1569 + $0x158] sm:$0xff]
        %v1614 = vld [vmem:[%s1569 + $0x160] sm:$0xff]
        %v1615 = vld [vmem:[%s1569 + $0x168] sm:$0xff]
        %v1616 = vld [vmem:[%s1569 + $0x170] sm:$0xff]
        %v1617 = vld [vmem:[%s1569 + $0x178] sm:$0xff]
        %v1618 = vld [vmem:[%s1569 + $0x180] sm:$0xff]
        %v1619 = vld [vmem:[%s1569 + $0x188] sm:$0xff]
        %v1620 = vld [vmem:[%s1569 + $0x190] sm:$0xff]
        %v1621 = vld [vmem:[%s1569 + $0x198] sm:$0xff]
        %v1622 = vld [vmem:[%s1569 + $0x1a0] sm:$0xff]
        %v1623 = vld [vmem:[%s1569 + $0x1a8] sm:$0xff]
        %v1624 = vld [vmem:[%s1569 + $0x1b0] sm:$0xff]
        %v1625 = vld [vmem:[%s1569 + $0x1b8] sm:$0xff]
        %v1626 = vld [vmem:[%s1569 + $0x1c0] sm:$0xff]
        %v1627 = vld [vmem:[%s1569 + $0x1c8] sm:$0xff]
        %v1628 = vld [vmem:[%s1569 + $0x1d0] sm:$0xff]
        %v1629 = vld [vmem:[%s1569 + $0x1d8] sm:$0xff]
        %v1630 = vld [vmem:[%s1569 + $0x1e0] sm:$0xff]
        %v1631 = vld [vmem:[%s1569 + $0x1e8] sm:$0xff]
        %v1632 = vld [vmem:[%s1569 + $0x1f0] sm:$0xff]
        %v1633 = vld [vmem:[%s1569 + $0x1f8] sm:$0xff]
        %s1634 = scalar_lea.vmem %s6, 4
        %v1635 = vld [vmem:[%s1634] sm:$0xf]
        %v1637 = vlaneseq
        %v1638 = vshrl.u32 %v1637, 7
        %v1639 = vsub.s32 0, %v1638
        %v1640 = vrot.slane %v1635, %v1639
        %v1641 = vlaneseq
        %v1642 = vshrl.u32 %v1641, 7
        %v1643 = vsub.s32 1, %v1642
        %v1644 = vrot.slane %v1635, %v1643
        %v1645 = vlaneseq
        %v1646 = vshrl.u32 %v1645, 7
        %v1647 = vsub.s32 2, %v1646
        %v1648 = vrot.slane %v1635, %v1647
        %v1649 = vlaneseq
        %v1650 = vshrl.u32 %v1649, 7
        %v1651 = vsub.s32 3, %v1650
        %v1652 = vrot.slane %v1635, %v1651
        %1657 = vmatprep.subr.mxu0 %v1506
        %1658 = vmatpush1.msra.mxu0 %v1505
        %1659 = vmatprep.subr.mxu0 %v1510
        %1660 = vmatpush1.msra.mxu0 %v1509
        %1661 = vmatprep.subr.mxu0 %v1514
        %1662 = vmatpush1.msra.mxu0 %v1513
        %1663 = vmatprep.subr.mxu0 %v1518
        %1664 = vmatpush1.msra.mxu0 %v1517
        %1665 = vmatprep.subr.mxu0 %v1522
        %1666 = vmatpush1.msra.mxu0 %v1521
        %1667 = vmatprep.subr.mxu0 %v1526
        %1668 = vmatpush1.msra.mxu0 %v1525
        %1669 = vmatprep.subr.mxu0 %v1530
        %1670 = vmatpush1.msra.mxu0 %v1529
        %1671 = vmatprep.subr.mxu0 %v1534
        %1672 = vmatpush1.msra.mxu0 %v1533
        %1673 = vmatprep.subr.mxu0 %v1538
        %1674 = vmatpush1.msra.mxu0 %v1537
        %1675 = vmatprep.subr.mxu0 %v1542
        %1676 = vmatpush1.msra.mxu0 %v1541
        %1677 = vmatprep.subr.mxu0 %v1546
        %1678 = vmatpush1.msra.mxu0 %v1545
        %1679 = vmatprep.subr.mxu0 %v1550
        %1680 = vmatpush1.msra.mxu0 %v1549
        %1681 = vmatprep.subr.mxu0 %v1554
        %1682 = vmatpush1.msra.mxu0 %v1553
        %1683 = vmatprep.subr.mxu0 %v1558
        %1684 = vmatpush1.msra.mxu0 %v1557
        %1685 = vmatprep.subr.mxu0 %v1562
        %1686 = vmatpush1.msra.mxu0 %v1561
        %1687 = vmatprep.subr.mxu0 %v1566
        %1688 = vmatpush1.msra.mxu0 %v1565
        %1689 = vmatprep.subr.mxu0 0.0
        %1690 = vmatpush1.msra.mxu0 0.0
        %1691 = vmatprep.subr.mxu0 0.0
        %1692 = vmatpush1.msra.mxu0 0.0
        %1693 = vmatprep.subr.mxu0 0.0
        %1694 = vmatpush1.msra.mxu0 0.0
        %1695 = vmatprep.subr.mxu0 0.0
        %1696 = vmatpush1.msra.mxu0 0.0
        %1697 = vmatprep.subr.mxu0 0.0
        %1698 = vmatpush1.msra.mxu0 0.0
        %1699 = vmatprep.subr.mxu0 0.0
        %1700 = vmatpush1.msra.mxu0 0.0
        %1701 = vmatprep.subr.mxu0 0.0
        %1702 = vmatpush1.msra.mxu0 0.0
        %1703 = vmatprep.subr.mxu0 0.0
        %1704 = vmatpush1.msra.mxu0 0.0
        %1705 = vmatprep.subr.mxu0 0.0
        %1706 = vmatpush1.msra.mxu0 0.0
        %1707 = vmatprep.subr.mxu0 0.0
        %1708 = vmatpush1.msra.mxu0 0.0
        %1709 = vmatprep.subr.mxu0 0.0
        %1710 = vmatpush1.msra.mxu0 0.0
        %1711 = vmatprep.subr.mxu0 0.0
        %1712 = vmatpush1.msra.mxu0 0.0
        %1713 = vmatprep.subr.mxu0 0.0
        %1714 = vmatpush1.msra.mxu0 0.0
        %1715 = vmatprep.subr.mxu0 0.0
        %1716 = vmatpush1.msra.mxu0 0.0
        %1717 = vmatprep.subr.mxu0 0.0
        %1718 = vmatpush1.msra.mxu0 0.0
        %1719 = vmatprep.subr.mxu0 0.0
        %1720 = vmatpush1.msra.mxu0 0.0
        %1721 = vmatprep.mubr.f32.mxu0 0.0
        %1722 = vmatmul.mubr.f32.gmra.mrb[0].mxu0 %v1501
        %v1723 = vpop.f32.mrb[0].mxu0
        %v1724 = vadd.f32 %v1640, %v1723
        %v1725 = vpop.f32.mrb[0].mxu0
        %v1726 = vadd.f32 %v1644, %v1725
        %1727 = vmatprep.mubr.f32.mxu0 0.0
        %1728 = vmatmul.mubr.f32.gmra.mrb[0].mxu0 %v1502
        %v1729 = vpop.f32.mrb[0].mxu0
        %v1730 = vadd.f32 %v1640, %v1729
        %v1731 = vpop.f32.mrb[0].mxu0
        %v1732 = vadd.f32 %v1644, %v1731
        %1733 = vmatprep.mubr.f32.mxu0 0.0
        %1734 = vmatmul.mubr.f32.gmra.mrb[0].mxu0 %v1503
        %v1735 = vpop.f32.mrb[0].mxu0
        %v1736 = vadd.f32 %v1640, %v1735
        %v1737 = vpop.f32.mrb[0].mxu0
        %v1738 = vadd.f32 %v1644, %v1737
        %1739 = vmatprep.mubr.f32.mxu0 0.0
        %1740 = vmatmul.mubr.f32.gmra.mrb[0].mxu0 %v1504
        %v1741 = vpop.f32.mrb[0].mxu0
        %v1742 = vadd.f32 %v1640, %v1741
        %v1743 = vpop.f32.mrb[0].mxu0
        %v1744 = vadd.f32 %v1644, %v1743
        %1745 = vdwg.mxu0
        %1746 = vmatprep.subr.mxu0 %v1508
        %1747 = vmatpush1.msra.mxu0 %v1507
        %1748 = vmatprep.subr.mxu0 %v1512
        %1749 = vmatpush1.msra.mxu0 %v1511
        %1750 = vmatprep.subr.mxu0 %v1516
        %1751 = vmatpush1.msra.mxu0 %v1515
        %1752 = vmatprep.subr.mxu0 %v1520
        %1753 = vmatpush1.msra.mxu0 %v1519
        %1754 = vmatprep.subr.mxu0 %v1524
        %1755 = vmatpush1.msra.mxu0 %v1523
        %1756 = vmatprep.subr.mxu0 %v1528
        %1757 = vmatpush1.msra.mxu0 %v1527
        %1758 = vmatprep.subr.mxu0 %v1532
        %1759 = vmatpush1.msra.mxu0 %v1531
        %1760 = vmatprep.subr.mxu0 %v1536
        %1761 = vmatpush1.msra.mxu0 %v1535
        %1762 = vmatprep.subr.mxu0 %v1540
        %1763 = vmatpush1.msra.mxu0 %v1539
        %1764 = vmatprep.subr.mxu0 %v1544
        %1765 = vmatpush1.msra.mxu0 %v1543
        %1766 = vmatprep.subr.mxu0 %v1548
        %1767 = vmatpush1.msra.mxu0 %v1547
        %1768 = vmatprep.subr.mxu0 %v1552
        %1769 = vmatpush1.msra.mxu0 %v1551
        %1770 = vmatprep.subr.mxu0 %v1556
        %1771 = vmatpush1.msra.mxu0 %v1555
        %1772 = vmatprep.subr.mxu0 %v1560
        %1773 = vmatpush1.msra.mxu0 %v1559
        %1774 = vmatprep.subr.mxu0 %v1564
        %1775 = vmatpush1.msra.mxu0 %v1563
        %1776 = vmatprep.subr.mxu0 %v1568
        %1777 = vmatpush1.msra.mxu0 %v1567
        %1778 = vmatprep.subr.mxu0 0.0
        %1779 = vmatpush1.msra.mxu0 0.0
        %1780 = vmatprep.subr.mxu0 0.0
        %1781 = vmatpush1.msra.mxu0 0.0
        %1782 = vmatprep.subr.mxu0 0.0
        %1783 = vmatpush1.msra.mxu0 0.0
        %1784 = vmatprep.subr.mxu0 0.0
        %1785 = vmatpush1.msra.mxu0 0.0
        %1786 = vmatprep.subr.mxu0 0.0
        %1787 = vmatpush1.msra.mxu0 0.0
        %1788 = vmatprep.subr.mxu0 0.0
        %1789 = vmatpush1.msra.mxu0 0.0
        %1790 = vmatprep.subr.mxu0 0.0
        %1791 = vmatpush1.msra.mxu0 0.0
        %1792 = vmatprep.subr.mxu0 0.0
        %1793 = vmatpush1.msra.mxu0 0.0
        %1794 = vmatprep.subr.mxu0 0.0
        %1795 = vmatpush1.msra.mxu0 0.0
        %1796 = vmatprep.subr.mxu0 0.0
        %1797 = vmatpush1.msra.mxu0 0.0
        %1798 = vmatprep.subr.mxu0 0.0
        %1799 = vmatpush1.msra.mxu0 0.0
        %1800 = vmatprep.subr.mxu0 0.0
        %1801 = vmatpush1.msra.mxu0 0.0
        %1802 = vmatprep.subr.mxu0 0.0
        %1803 = vmatpush1.msra.mxu0 0.0
        %1804 = vmatprep.subr.mxu0 0.0
        %1805 = vmatpush1.msra.mxu0 0.0
        %1806 = vmatprep.subr.mxu0 0.0
        %1807 = vmatpush1.msra.mxu0 0.0
        %1808 = vmatprep.subr.mxu0 0.0
        %1809 = vmatpush1.msra.mxu0 0.0
        %1810 = vmatprep.mubr.f32.mxu0 0.0
        %1811 = vmatmul.mubr.f32.gmra.mrb[0].mxu0 %v1501
        %v1812 = vpop.f32.mrb[0].mxu0
        %v1813 = vadd.f32 %v1648, %v1812
        %v1814 = vpop.f32.mrb[0].mxu0
        %v1815 = vadd.f32 %v1652, %v1814
        %1816 = vmatprep.mubr.f32.mxu0 0.0
        %1817 = vmatmul.mubr.f32.gmra.mrb[0].mxu0 %v1502
        %v1818 = vpop.f32.mrb[0].mxu0
        %v1819 = vadd.f32 %v1648, %v1818
        %v1820 = vpop.f32.mrb[0].mxu0
        %v1821 = vadd.f32 %v1652, %v1820
        %1822 = vmatprep.mubr.f32.mxu0 0.0
        %1823 = vmatmul.mubr.f32.gmra.mrb[0].mxu0 %v1503
        %v1824 = vpop.f32.mrb[0].mxu0
        %v1825 = vadd.f32 %v1648, %v1824
        %v1826 = vpop.f32.mrb[0].mxu0
        %v1827 = vadd.f32 %v1652, %v1826
        %1828 = vmatprep.mubr.f32.mxu0 0.0
        %1829 = vmatmul.mubr.f32.gmra.mrb[0].mxu0 %v1504
        %v1830 = vpop.f32.mrb[0].mxu0
        %v1831 = vadd.f32 %v1648, %v1830
        %v1832 = vpop.f32.mrb[0].mxu0
        %v1833 = vadd.f32 %v1652, %v1832
        %1834 = vdwg.mxu0
        %1835 = vst [vmem:[#allocation3] sm:$0xff] %v1724
        %1836 = vst [vmem:[#allocation3 + $0x8] sm:$0xff] %v1726
        %1837 = vst [vmem:[#allocation3 + $0x10] sm:$0xff] %v1813
        %1838 = vst [vmem:[#allocation3 + $0x18] sm:$0xff] %v1815
        %1839 = vst [vmem:[#allocation3 + $0x20] sm:$0xff] %v1730
        %1840 = vst [vmem:[#allocation3 + $0x28] sm:$0xff] %v1732
        %1841 = vst [vmem:[#allocation3 + $0x30] sm:$0xff] %v1819
        %1842 = vst [vmem:[#allocation3 + $0x38] sm:$0xff] %v1821
        %1843 = vst [vmem:[#allocation3 + $0x40] sm:$0xff] %v1736
        %1844 = vst [vmem:[#allocation3 + $0x48] sm:$0xff] %v1738
        %1845 = vst [vmem:[#allocation3 + $0x50] sm:$0xff] %v1825
        %1846 = vst [vmem:[#allocation3 + $0x58] sm:$0xff] %v1827
        %1847 = vst [vmem:[#allocation3 + $0x60] sm:$0xff] %v1742
        %1848 = vst [vmem:[#allocation3 + $0x68] sm:$0xff] %v1744
        %1849 = vst [vmem:[#allocation3 + $0x70] sm:$0xff] %v1831
        %1850 = vst [vmem:[#allocation3 + $0x78] sm:$0xff] %v1833
        %s1851 = scalar_lea.vmem [#allocation4], 8
        %v1852 = vld [vmem:[%s1851] sm:$0xff]
        %s1853 = scalar_lea.vmem [#allocation5], 8
        %v1854 = vld [vmem:[%s1853] sm:$0xff]
        %v1855 = vld [vmem:[#allocation3] sm:$0xff]
        %v1856 = vld [vmem:[#allocation3 + $0x8] sm:$0xff]
        %v1857 = vld [vmem:[#allocation3 + $0x10] sm:$0xff]
        %v1858 = vld [vmem:[#allocation3 + $0x18] sm:$0xff]
        %1859 = vmatprep.subr.mxu0 %v1571
        %1860 = vmatpush1.msra.mxu0 %v1570
        %1861 = vmatprep.subr.mxu0 %v1575
        %1862 = vmatpush1.msra.mxu0 %v1574
        %1863 = vmatprep.subr.mxu0 %v1579
        %1864 = vmatpush1.msra.mxu0 %v1578
        %1865 = vmatprep.subr.mxu0 %v1583
        %1866 = vmatpush1.msra.mxu0 %v1582
        %1867 = vmatprep.subr.mxu0 %v1587
        %1868 = vmatpush1.msra.mxu0 %v1586
        %1869 = vmatprep.subr.mxu0 %v1591
        %1870 = vmatpush1.msra.mxu0 %v1590
        %1871 = vmatprep.subr.mxu0 %v1595
        %1872 = vmatpush1.msra.mxu0 %v1594
        %1873 = vmatprep.subr.mxu0 %v1599
        %1874 = vmatpush1.msra.mxu0 %v1598
        %1875 = vmatprep.subr.mxu0 %v1603
        %1876 = vmatpush1.msra.mxu0 %v1602
        %1877 = vmatprep.subr.mxu0 %v1607
        %1878 = vmatpush1.msra.mxu0 %v1606
        %1879 = vmatprep.subr.mxu0 %v1611
        %1880 = vmatpush1.msra.mxu0 %v1610
        %1881 = vmatprep.subr.mxu0 %v1615
        %1882 = vmatpush1.msra.mxu0 %v1614
        %1883 = vmatprep.subr.mxu0 %v1619
        %1884 = vmatpush1.msra.mxu0 %v1618
        %1885 = vmatprep.subr.mxu0 %v1623
        %1886 = vmatpush1.msra.mxu0 %v1622
        %1887 = vmatprep.subr.mxu0 %v1627
        %1888 = vmatpush1.msra.mxu0 %v1626
        %1889 = vmatprep.subr.mxu0 %v1631
        %1890 = vmatpush1.msra.mxu0 %v1630
        %1891 = vmatprep.subr.mxu0 0.0
        %1892 = vmatpush1.msra.mxu0 0.0
        %1893 = vmatprep.subr.mxu0 0.0
        %1894 = vmatpush1.msra.mxu0 0.0
        %1895 = vmatprep.subr.mxu0 0.0
        %1896 = vmatpush1.msra.mxu0 0.0
        %1897 = vmatprep.subr.mxu0 0.0
        %1898 = vmatpush1.msra.mxu0 0.0
        %1899 = vmatprep.subr.mxu0 0.0
        %1900 = vmatpush1.msra.mxu0 0.0
        %1901 = vmatprep.subr.mxu0 0.0
        %1902 = vmatpush1.msra.mxu0 0.0
        %1903 = vmatprep.subr.mxu0 0.0
        %1904 = vmatpush1.msra.mxu0 0.0
        %1905 = vmatprep.subr.mxu0 0.0
        %1906 = vmatpush1.msra.mxu0 0.0
        %1907 = vmatprep.subr.mxu0 0.0
        %1908 = vmatpush1.msra.mxu0 0.0
        %1909 = vmatprep.subr.mxu0 0.0
        %1910 = vmatpush1.msra.mxu0 0.0
        %1911 = vmatprep.subr.mxu0 0.0
        %1912 = vmatpush1.msra.mxu0 0.0
        %1913 = vmatprep.subr.mxu0 0.0
        %1914 = vmatpush1.msra.mxu0 0.0
        %1915 = vmatprep.subr.mxu0 0.0
        %1916 = vmatpush1.msra.mxu0 0.0
        %1917 = vmatprep.subr.mxu0 0.0
        %1918 = vmatpush1.msra.mxu0 0.0
        %1919 = vmatprep.subr.mxu0 0.0
        %1920 = vmatpush1.msra.mxu0 0.0
        %1921 = vmatprep.subr.mxu0 0.0
        %1922 = vmatpush1.msra.mxu0 0.0
        %1923 = vmatprep.mubr.f32.mxu0 0.0
        %1924 = vmatmul.mubr.f32.gmra.mrb[0].mxu0 %v1852
        %v1925 = vpop.f32.mrb[0].mxu0
        %v1926 = vadd.f32 0.0, %v1925
        %v1927 = vpop.f32.mrb[0].mxu0
        %v1928 = vadd.f32 0.0, %v1927
        %1929 = vdwg.mxu0
        %1930 = vmatprep.subr.mxu0 %v1573
        %1931 = vmatpush1.msra.mxu0 %v1572
        %1932 = vmatprep.subr.mxu0 %v1577
        %1933 = vmatpush1.msra.mxu0 %v1576
        %1934 = vmatprep.subr.mxu0 %v1581
        %1935 = vmatpush1.msra.mxu0 %v1580
        %1936 = vmatprep.subr.mxu0 %v1585
        %1937 = vmatpush1.msra.mxu0 %v1584
        %1938 = vmatprep.subr.mxu0 %v1589
        %1939 = vmatpush1.msra.mxu0 %v1588
        %1940 = vmatprep.subr.mxu0 %v1593
        %1941 = vmatpush1.msra.mxu0 %v1592
        %1942 = vmatprep.subr.mxu0 %v1597
        %1943 = vmatpush1.msra.mxu0 %v1596
        %1944 = vmatprep.subr.mxu0 %v1601
        %1945 = vmatpush1.msra.mxu0 %v1600
        %1946 = vmatprep.subr.mxu0 %v1605
        %1947 = vmatpush1.msra.mxu0 %v1604
        %1948 = vmatprep.subr.mxu0 %v1609
        %1949 = vmatpush1.msra.mxu0 %v1608
        %1950 = vmatprep.subr.mxu0 %v1613
        %1951 = vmatpush1.msra.mxu0 %v1612
        %1952 = vmatprep.subr.mxu0 %v1617
        %1953 = vmatpush1.msra.mxu0 %v1616
        %1954 = vmatprep.subr.mxu0 %v1621
        %1955 = vmatpush1.msra.mxu0 %v1620
        %1956 = vmatprep.subr.mxu0 %v1625
        %1957 = vmatpush1.msra.mxu0 %v1624
        %1958 = vmatprep.subr.mxu0 %v1629
        %1959 = vmatpush1.msra.mxu0 %v1628
        %1960 = vmatprep.subr.mxu0 %v1633
        %1961 = vmatpush1.msra.mxu0 %v1632
        %1962 = vmatprep.subr.mxu0 0.0
        %1963 = vmatpush1.msra.mxu0 0.0
        %1964 = vmatprep.subr.mxu0 0.0
        %1965 = vmatpush1.msra.mxu0 0.0
        %1966 = vmatprep.subr.mxu0 0.0
        %1967 = vmatpush1.msra.mxu0 0.0
        %1968 = vmatprep.subr.mxu0 0.0
        %1969 = vmatpush1.msra.mxu0 0.0
        %1970 = vmatprep.subr.mxu0 0.0
        %1971 = vmatpush1.msra.mxu0 0.0
        %1972 = vmatprep.subr.mxu0 0.0
        %1973 = vmatpush1.msra.mxu0 0.0
        %1974 = vmatprep.subr.mxu0 0.0
        %1975 = vmatpush1.msra.mxu0 0.0
        %1976 = vmatprep.subr.mxu0 0.0
        %1977 = vmatpush1.msra.mxu0 0.0
        %1978 = vmatprep.subr.mxu0 0.0
        %1979 = vmatpush1.msra.mxu0 0.0
        %1980 = vmatprep.subr.mxu0 0.0
        %1981 = vmatpush1.msra.mxu0 0.0
        %1982 = vmatprep.subr.mxu0 0.0
        %1983 = vmatpush1.msra.mxu0 0.0
        %1984 = vmatprep.subr.mxu0 0.0
        %1985 = vmatpush1.msra.mxu0 0.0
        %1986 = vmatprep.subr.mxu0 0.0
        %1987 = vmatpush1.msra.mxu0 0.0
        %1988 = vmatprep.subr.mxu0 0.0
        %1989 = vmatpush1.msra.mxu0 0.0
        %1990 = vmatprep.subr.mxu0 0.0
        %1991 = vmatpush1.msra.mxu0 0.0
        %1992 = vmatprep.subr.mxu0 0.0
        %1993 = vmatpush1.msra.mxu0 0.0
        %1994 = vmatprep.mubr.f32.mxu0 0.0
        %1995 = vmatmul.mubr.f32.gmra.mrb[0].mxu0 %v1852
        %v1996 = vpop.f32.mrb[0].mxu0
        %v1997 = vadd.f32 0.0, %v1996
        %v1998 = vpop.f32.mrb[0].mxu0
        %v1999 = vadd.f32 0.0, %v1998
        %2000 = vdwg.mxu0
        %v2001 = vadd.f32 %v1855, %v1926
        %v2002 = vadd.f32 %v1856, %v1928
        %v2003 = vadd.f32 %v1857, %v1997
        %v2004 = vadd.f32 %v1858, %v1999
        %v2005 = vxor.u32 %v2001, 2147483648
        %v2006 = vmul.f32 %v2005, 1.442695
        %v2007 = vpow.pop %v2006
        %v2008 = vadd.f32 %v2007, 1.0
        %v2009 = vrcp.pop %v2008
        %v2010 = vmul.f32 1.0, %v2009
        %v2011 = vxor.u32 %v2002, 2147483648
        %v2012 = vmul.f32 %v2011, 1.442695
        %v2013 = vpow.pop %v2012
        %v2014 = vadd.f32 %v2013, 1.0
        %v2015 = vrcp.pop %v2014
        %v2016 = vmul.f32 1.0, %v2015
        %v2017 = vtanh.pop %v2003
        %v2018 = vxor.u32 %v2004, 2147483648
        %v2019 = vmul.f32 %v2018, 1.442695
        %v2020 = vpow.pop %v2019
        %v2021 = vadd.f32 %v2020, 1.0
        %v2022 = vrcp.pop %v2021
        %v2023 = vmul.f32 1.0, %v2022
        %v2024 = vmul.f32 %v2016, %v1854
        %v2025 = vmul.f32 %v2010, %v2017
        %v2026 = vadd.f32 %v2024, %v2025
        %v2027 = vtanh.pop %v2026
        %v2028 = vmul.f32 %v2023, %v2027
        %v2029 = vld [vmem:[%s380] sm:$0xff]
        %v2030 = vsub.f32 %v2028, %v1852
        %v2031 = vmul.f32 %v2029, %v2030
        %v2032 = vadd.f32 %v1852, %v2031
        %2033 = vst [vmem:[%s1851] sm:$0xff] %v2032
        %v2034 = vsub.f32 %v2026, %v1854
        %v2035 = vmul.f32 %v2029, %v2034
        %v2036 = vadd.f32 %v1854, %v2035
        %2037 = vst [vmem:[%s1853] sm:$0xff] %v2036
        %v2038 = vmul.f32 %v2029, %v2028
        %2039 = vst [vmem:[#allocation2] sm:$0xff] %v2038
        %v2040 = vld [vmem:[%s1851] sm:$0xff]
        %v2041 = vld [vmem:[%s1853] sm:$0xff]
        %v2042 = vld [vmem:[%s933] sm:$0xff]
        %v2043 = vld [vmem:[%s933 + $0x8] sm:$0xff]
        %v2044 = vld [vmem:[%s933 + $0x10] sm:$0xff]
        %v2045 = vld [vmem:[%s933 + $0x18] sm:$0xff]
        %2046 = vmatprep.subr.mxu0 %v1571
        %2047 = vmatpush1.msra.mxu0 %v1570
        %2048 = vmatprep.subr.mxu0 %v1575
        %2049 = vmatpush1.msra.mxu0 %v1574
        %2050 = vmatprep.subr.mxu0 %v1579
        %2051 = vmatpush1.msra.mxu0 %v1578
        %2052 = vmatprep.subr.mxu0 %v1583
        %2053 = vmatpush1.msra.mxu0 %v1582
        %2054 = vmatprep.subr.mxu0 %v1587
        %2055 = vmatpush1.msra.mxu0 %v1586
        %2056 = vmatprep.subr.mxu0 %v1591
        %2057 = vmatpush1.msra.mxu0 %v1590
        %2058 = vmatprep.subr.mxu0 %v1595
        %2059 = vmatpush1.msra.mxu0 %v1594
        %2060 = vmatprep.subr.mxu0 %v1599
        %2061 = vmatpush1.msra.mxu0 %v1598
        %2062 = vmatprep.subr.mxu0 %v1603
        %2063 = vmatpush1.msra.mxu0 %v1602
        %2064 = vmatprep.subr.mxu0 %v1607
        %2065 = vmatpush1.msra.mxu0 %v1606
        %2066 = vmatprep.subr.mxu0 %v1611
        %2067 = vmatpush1.msra.mxu0 %v1610
        %2068 = vmatprep.subr.mxu0 %v1615
        %2069 = vmatpush1.msra.mxu0 %v1614
        %2070 = vmatprep.subr.mxu0 %v1619
        %2071 = vmatpush1.msra.mxu0 %v1618
        %2072 = vmatprep.subr.mxu0 %v1623
        %2073 = vmatpush1.msra.mxu0 %v1622
        %2074 = vmatprep.subr.mxu0 %v1627
        %2075 = vmatpush1.msra.mxu0 %v1626
        %2076 = vmatprep.subr.mxu0 %v1631
        %2077 = vmatpush1.msra.mxu0 %v1630
        %2078 = vmatprep.subr.mxu0 0.0
        %2079 = vmatpush1.msra.mxu0 0.0
        %2080 = vmatprep.subr.mxu0 0.0
        %2081 = vmatpush1.msra.mxu0 0.0
        %2082 = vmatprep.subr.mxu0 0.0
        %2083 = vmatpush1.msra.mxu0 0.0
        %2084 = vmatprep.subr.mxu0 0.0
        %2085 = vmatpush1.msra.mxu0 0.0
        %2086 = vmatprep.subr.mxu0 0.0
        %2087 = vmatpush1.msra.mxu0 0.0
        %2088 = vmatprep.subr.mxu0 0.0
        %2089 = vmatpush1.msra.mxu0 0.0
        %2090 = vmatprep.subr.mxu0 0.0
        %2091 = vmatpush1.msra.mxu0 0.0
        %2092 = vmatprep.subr.mxu0 0.0
        %2093 = vmatpush1.msra.mxu0 0.0
        %2094 = vmatprep.subr.mxu0 0.0
        %2095 = vmatpush1.msra.mxu0 0.0
        %2096 = vmatprep.subr.mxu0 0.0
        %2097 = vmatpush1.msra.mxu0 0.0
        %2098 = vmatprep.subr.mxu0 0.0
        %2099 = vmatpush1.msra.mxu0 0.0
        %2100 = vmatprep.subr.mxu0 0.0
        %2101 = vmatpush1.msra.mxu0 0.0
        %2102 = vmatprep.subr.mxu0 0.0
        %2103 = vmatpush1.msra.mxu0 0.0
        %2104 = vmatprep.subr.mxu0 0.0
        %2105 = vmatpush1.msra.mxu0 0.0
        %2106 = vmatprep.subr.mxu0 0.0
        %2107 = vmatpush1.msra.mxu0 0.0
        %2108 = vmatprep.subr.mxu0 0.0
        %2109 = vmatpush1.msra.mxu0 0.0
        %2110 = vmatprep.mubr.f32.mxu0 0.0
        %2111 = vmatmul.mubr.f32.gmra.mrb[0].mxu0 %v2040
        %v2112 = vpop.f32.mrb[0].mxu0
        %v2113 = vadd.f32 0.0, %v2112
        %v2114 = vpop.f32.mrb[0].mxu0
        %v2115 = vadd.f32 0.0, %v2114
        %2116 = vdwg.mxu0
        %2117 = vmatprep.subr.mxu0 %v1573
        %2118 = vmatpush1.msra.mxu0 %v1572
        %2119 = vmatprep.subr.mxu0 %v1577
        %2120 = vmatpush1.msra.mxu0 %v1576
        %2121 = vmatprep.subr.mxu0 %v1581
        %2122 = vmatpush1.msra.mxu0 %v1580
        %2123 = vmatprep.subr.mxu0 %v1585
        %2124 = vmatpush1.msra.mxu0 %v1584
        %2125 = vmatprep.subr.mxu0 %v1589
        %2126 = vmatpush1.msra.mxu0 %v1588
        %2127 = vmatprep.subr.mxu0 %v1593
        %2128 = vmatpush1.msra.mxu0 %v1592
        %2129 = vmatprep.subr.mxu0 %v1597
        %2130 = vmatpush1.msra.mxu0 %v1596
        %2131 = vmatprep.subr.mxu0 %v1601
        %2132 = vmatpush1.msra.mxu0 %v1600
        %2133 = vmatprep.subr.mxu0 %v1605
        %2134 = vmatpush1.msra.mxu0 %v1604
        %2135 = vmatprep.subr.mxu0 %v1609
        %2136 = vmatpush1.msra.mxu0 %v1608
        %2137 = vmatprep.subr.mxu0 %v1613
        %2138 = vmatpush1.msra.mxu0 %v1612
        %2139 = vmatprep.subr.mxu0 %v1617
        %2140 = vmatpush1.msra.mxu0 %v1616
        %2141 = vmatprep.subr.mxu0 %v1621
        %2142 = vmatpush1.msra.mxu0 %v1620
        %2143 = vmatprep.subr.mxu0 %v1625
        %2144 = vmatpush1.msra.mxu0 %v1624
        %2145 = vmatprep.subr.mxu0 %v1629
        %2146 = vmatpush1.msra.mxu0 %v1628
        %2147 = vmatprep.subr.mxu0 %v1633
        %2148 = vmatpush1.msra.mxu0 %v1632
        %2149 = vmatprep.subr.mxu0 0.0
        %2150 = vmatpush1.msra.mxu0 0.0
        %2151 = vmatprep.subr.mxu0 0.0
        %2152 = vmatpush1.msra.mxu0 0.0
        %2153 = vmatprep.subr.mxu0 0.0
        %2154 = vmatpush1.msra.mxu0 0.0
        %2155 = vmatprep.subr.mxu0 0.0
        %2156 = vmatpush1.msra.mxu0 0.0
        %2157 = vmatprep.subr.mxu0 0.0
        %2158 = vmatpush1.msra.mxu0 0.0
        %2159 = vmatprep.subr.mxu0 0.0
        %2160 = vmatpush1.msra.mxu0 0.0
        %2161 = vmatprep.subr.mxu0 0.0
        %2162 = vmatpush1.msra.mxu0 0.0
        %2163 = vmatprep.subr.mxu0 0.0
        %2164 = vmatpush1.msra.mxu0 0.0
        %2165 = vmatprep.subr.mxu0 0.0
        %2166 = vmatpush1.msra.mxu0 0.0
        %2167 = vmatprep.subr.mxu0 0.0
        %2168 = vmatpush1.msra.mxu0 0.0
        %2169 = vmatprep.subr.mxu0 0.0
        %2170 = vmatpush1.msra.mxu0 0.0
        %2171 = vmatprep.subr.mxu0 0.0
        %2172 = vmatpush1.msra.mxu0 0.0
        %2173 = vmatprep.subr.mxu0 0.0
        %2174 = vmatpush1.msra.mxu0 0.0
        %2175 = vmatprep.subr.mxu0 0.0
        %2176 = vmatpush1.msra.mxu0 0.0
        %2177 = vmatprep.subr.mxu0 0.0
        %2178 = vmatpush1.msra.mxu0 0.0
        %2179 = vmatprep.subr.mxu0 0.0
        %2180 = vmatpush1.msra.mxu0 0.0
        %2181 = vmatprep.mubr.f32.mxu0 0.0
        %2182 = vmatmul.mubr.f32.gmra.mrb[0].mxu0 %v2040
        %v2183 = vpop.f32.mrb[0].mxu0
        %v2184 = vadd.f32 0.0, %v2183
        %v2185 = vpop.f32.mrb[0].mxu0
        %v2186 = vadd.f32 0.0, %v2185
        %2187 = vdwg.mxu0
        %v2188 = vadd.f32 %v2042, %v2113
        %v2189 = vadd.f32 %v2043, %v2115
        %v2190 = vadd.f32 %v2044, %v2184
        %v2191 = vadd.f32 %v2045, %v2186
        %v2192 = vxor.u32 %v2188, 2147483648
        %v2193 = vmul.f32 %v2192, 1.442695
        %v2194 = vpow.pop %v2193
        %v2195 = vadd.f32 %v2194, 1.0
        %v2196 = vrcp.pop %v2195
        %v2197 = vmul.f32 1.0, %v2196
        %v2198 = vxor.u32 %v2189, 2147483648
        %v2199 = vmul.f32 %v2198, 1.442695
        %v2200 = vpow.pop %v2199
        %v2201 = vadd.f32 %v2200, 1.0
        %v2202 = vrcp.pop %v2201
        %v2203 = vmul.f32 1.0, %v2202
        %v2204 = vtanh.pop %v2190
        %v2205 = vxor.u32 %v2191, 2147483648
        %v2206 = vmul.f32 %v2205, 1.442695
        %v2207 = vpow.pop %v2206
        %v2208 = vadd.f32 %v2207, 1.0
        %v2209 = vrcp.pop %v2208
        %v2210 = vmul.f32 1.0, %v2209
        %v2211 = vmul.f32 %v2203, %v2041
        %v2212 = vmul.f32 %v2197, %v2204
        %v2213 = vadd.f32 %v2211, %v2212
        %v2214 = vtanh.pop %v2213
        %v2215 = vmul.f32 %v2210, %v2214
        %v2216 = vld [vmem:[%s1108] sm:$0xff]
        %v2217 = vsub.f32 %v2215, %v2040
        %v2218 = vmul.f32 %v2216, %v2217
        %v2219 = vadd.f32 %v2040, %v2218
        %2220 = vst [vmem:[%s1851] sm:$0xff] %v2219
        %v2221 = vsub.f32 %v2213, %v2041
        %v2222 = vmul.f32 %v2216, %v2221
        %v2223 = vadd.f32 %v2041, %v2222
        %2224 = vst [vmem:[%s1853] sm:$0xff] %v2223
        %v2225 = vmul.f32 %v2216, %v2215
        %2226 = vst [vmem:[%s1119] sm:$0xff] %v2225
        %v2227 = vld [vmem:[%s1851] sm:$0xff]
        %v2228 = vld [vmem:[%s1853] sm:$0xff]
        %v2229 = vld [vmem:[%s1123] sm:$0xff]
        %v2230 = vld [vmem:[%s1123 + $0x8] sm:$0xff]
        %v2231 = vld [vmem:[%s1123 + $0x10] sm:$0xff]
        %v2232 = vld [vmem:[%s1123 + $0x18] sm:$0xff]
        %2233 = vmatprep.subr.mxu0 %v1571
        %2234 = vmatpush1.msra.mxu0 %v1570
        %2235 = vmatprep.subr.mxu0 %v1575
        %2236 = vmatpush1.msra.mxu0 %v1574
        %2237 = vmatprep.subr.mxu0 %v1579
        %2238 = vmatpush1.msra.mxu0 %v1578
        %2239 = vmatprep.subr.mxu0 %v1583
        %2240 = vmatpush1.msra.mxu0 %v1582
        %2241 = vmatprep.subr.mxu0 %v1587
        %2242 = vmatpush1.msra.mxu0 %v1586
        %2243 = vmatprep.subr.mxu0 %v1591
        %2244 = vmatpush1.msra.mxu0 %v1590
        %2245 = vmatprep.subr.mxu0 %v1595
        %2246 = vmatpush1.msra.mxu0 %v1594
        %2247 = vmatprep.subr.mxu0 %v1599
        %2248 = vmatpush1.msra.mxu0 %v1598
        %2249 = vmatprep.subr.mxu0 %v1603
        %2250 = vmatpush1.msra.mxu0 %v1602
        %2251 = vmatprep.subr.mxu0 %v1607
        %2252 = vmatpush1.msra.mxu0 %v1606
        %2253 = vmatprep.subr.mxu0 %v1611
        %2254 = vmatpush1.msra.mxu0 %v1610
        %2255 = vmatprep.subr.mxu0 %v1615
        %2256 = vmatpush1.msra.mxu0 %v1614
        %2257 = vmatprep.subr.mxu0 %v1619
        %2258 = vmatpush1.msra.mxu0 %v1618
        %2259 = vmatprep.subr.mxu0 %v1623
        %2260 = vmatpush1.msra.mxu0 %v1622
        %2261 = vmatprep.subr.mxu0 %v1627
        %2262 = vmatpush1.msra.mxu0 %v1626
        %2263 = vmatprep.subr.mxu0 %v1631
        %2264 = vmatpush1.msra.mxu0 %v1630
        %2265 = vmatprep.subr.mxu0 0.0
        %2266 = vmatpush1.msra.mxu0 0.0
        %2267 = vmatprep.subr.mxu0 0.0
        %2268 = vmatpush1.msra.mxu0 0.0
        %2269 = vmatprep.subr.mxu0 0.0
        %2270 = vmatpush1.msra.mxu0 0.0
        %2271 = vmatprep.subr.mxu0 0.0
        %2272 = vmatpush1.msra.mxu0 0.0
        %2273 = vmatprep.subr.mxu0 0.0
        %2274 = vmatpush1.msra.mxu0 0.0
        %2275 = vmatprep.subr.mxu0 0.0
        %2276 = vmatpush1.msra.mxu0 0.0
        %2277 = vmatprep.subr.mxu0 0.0
        %2278 = vmatpush1.msra.mxu0 0.0
        %2279 = vmatprep.subr.mxu0 0.0
        %2280 = vmatpush1.msra.mxu0 0.0
        %2281 = vmatprep.subr.mxu0 0.0
        %2282 = vmatpush1.msra.mxu0 0.0
        %2283 = vmatprep.subr.mxu0 0.0
        %2284 = vmatpush1.msra.mxu0 0.0
        %2285 = vmatprep.subr.mxu0 0.0
        %2286 = vmatpush1.msra.mxu0 0.0
        %2287 = vmatprep.subr.mxu0 0.0
        %2288 = vmatpush1.msra.mxu0 0.0
        %2289 = vmatprep.subr.mxu0 0.0
        %2290 = vmatpush1.msra.mxu0 0.0
        %2291 = vmatprep.subr.mxu0 0.0
        %2292 = vmatpush1.msra.mxu0 0.0
        %2293 = vmatprep.subr.mxu0 0.0
        %2294 = vmatpush1.msra.mxu0 0.0
        %2295 = vmatprep.subr.mxu0 0.0
        %2296 = vmatpush1.msra.mxu0 0.0
        %2297 = vmatprep.mubr.f32.mxu0 0.0
        %2298 = vmatmul.mubr.f32.gmra.mrb[0].mxu0 %v2227
        %v2299 = vpop.f32.mrb[0].mxu0
        %v2300 = vadd.f32 0.0, %v2299
        %v2301 = vpop.f32.mrb[0].mxu0
        %v2302 = vadd.f32 0.0, %v2301
        %2303 = vdwg.mxu0
        %2304 = vmatprep.subr.mxu0 %v1573
        %2305 = vmatpush1.msra.mxu0 %v1572
        %2306 = vmatprep.subr.mxu0 %v1577
        %2307 = vmatpush1.msra.mxu0 %v1576
        %2308 = vmatprep.subr.mxu0 %v1581
        %2309 = vmatpush1.msra.mxu0 %v1580
        %2310 = vmatprep.subr.mxu0 %v1585
        %2311 = vmatpush1.msra.mxu0 %v1584
        %2312 = vmatprep.subr.mxu0 %v1589
        %2313 = vmatpush1.msra.mxu0 %v1588
        %2314 = vmatprep.subr.mxu0 %v1593
        %2315 = vmatpush1.msra.mxu0 %v1592
        %2316 = vmatprep.subr.mxu0 %v1597
        %2317 = vmatpush1.msra.mxu0 %v1596
        %2318 = vmatprep.subr.mxu0 %v1601
        %2319 = vmatpush1.msra.mxu0 %v1600
        %2320 = vmatprep.subr.mxu0 %v1605
        %2321 = vmatpush1.msra.mxu0 %v1604
        %2322 = vmatprep.subr.mxu0 %v1609
        %2323 = vmatpush1.msra.mxu0 %v1608
        %2324 = vmatprep.subr.mxu0 %v1613
        %2325 = vmatpush1.msra.mxu0 %v1612
        %2326 = vmatprep.subr.mxu0 %v1617
        %2327 = vmatpush1.msra.mxu0 %v1616
        %2328 = vmatprep.subr.mxu0 %v1621
        %2329 = vmatpush1.msra.mxu0 %v1620
        %2330 = vmatprep.subr.mxu0 %v1625
        %2331 = vmatpush1.msra.mxu0 %v1624
        %2332 = vmatprep.subr.mxu0 %v1629
        %2333 = vmatpush1.msra.mxu0 %v1628
        %2334 = vmatprep.subr.mxu0 %v1633
        %2335 = vmatpush1.msra.mxu0 %v1632
        %2336 = vmatprep.subr.mxu0 0.0
        %2337 = vmatpush1.msra.mxu0 0.0
        %2338 = vmatprep.subr.mxu0 0.0
        %2339 = vmatpush1.msra.mxu0 0.0
        %2340 = vmatprep.subr.mxu0 0.0
        %2341 = vmatpush1.msra.mxu0 0.0
        %2342 = vmatprep.subr.mxu0 0.0
        %2343 = vmatpush1.msra.mxu0 0.0
        %2344 = vmatprep.subr.mxu0 0.0
        %2345 = vmatpush1.msra.mxu0 0.0
        %2346 = vmatprep.subr.mxu0 0.0
        %2347 = vmatpush1.msra.mxu0 0.0
        %2348 = vmatprep.subr.mxu0 0.0
        %2349 = vmatpush1.msra.mxu0 0.0
        %2350 = vmatprep.subr.mxu0 0.0
        %2351 = vmatpush1.msra.mxu0 0.0
        %2352 = vmatprep.subr.mxu0 0.0
        %2353 = vmatpush1.msra.mxu0 0.0
        %2354 = vmatprep.subr.mxu0 0.0
        %2355 = vmatpush1.msra.mxu0 0.0
        %2356 = vmatprep.subr.mxu0 0.0
        %2357 = vmatpush1.msra.mxu0 0.0
        %2358 = vmatprep.subr.mxu0 0.0
        %2359 = vmatpush1.msra.mxu0 0.0
        %2360 = vmatprep.subr.mxu0 0.0
        %2361 = vmatpush1.msra.mxu0 0.0
        %2362 = vmatprep.subr.mxu0 0.0
        %2363 = vmatpush1.msra.mxu0 0.0
        %2364 = vmatprep.subr.mxu0 0.0
        %2365 = vmatpush1.msra.mxu0 0.0
        %2366 = vmatprep.subr.mxu0 0.0
        %2367 = vmatpush1.msra.mxu0 0.0
        %2368 = vmatprep.mubr.f32.mxu0 0.0
        %2369 = vmatmul.mubr.f32.gmra.mrb[0].mxu0 %v2227
        %v2370 = vpop.f32.mrb[0].mxu0
        %v2371 = vadd.f32 0.0, %v2370
        %v2372 = vpop.f32.mrb[0].mxu0
        %v2373 = vadd.f32 0.0, %v2372
        %2374 = vdwg.mxu0
        %v2375 = vadd.f32 %v2229, %v2300
        %v2376 = vadd.f32 %v2230, %v2302
        %v2377 = vadd.f32 %v2231, %v2371
        %v2378 = vadd.f32 %v2232, %v2373
        %v2379 = vxor.u32 %v2375, 2147483648
        %v2380 = vmul.f32 %v2379, 1.442695
        %v2381 = vpow.pop %v2380
        %v2382 = vadd.f32 %v2381, 1.0
        %v2383 = vrcp.pop %v2382
        %v2384 = vmul.f32 1.0, %v2383
        %v2385 = vxor.u32 %v2376, 2147483648
        %v2386 = vmul.f32 %v2385, 1.442695
        %v2387 = vpow.pop %v2386
        %v2388 = vadd.f32 %v2387, 1.0
        %v2389 = vrcp.pop %v2388
        %v2390 = vmul.f32 1.0, %v2389
        %v2391 = vtanh.pop %v2377
        %v2392 = vxor.u32 %v2378, 2147483648
        %v2393 = vmul.f32 %v2392, 1.442695
        %v2394 = vpow.pop %v2393
        %v2395 = vadd.f32 %v2394, 1.0
        %v2396 = vrcp.pop %v2395
        %v2397 = vmul.f32 1.0, %v2396
        %v2398 = vmul.f32 %v2390, %v2228
        %v2399 = vmul.f32 %v2384, %v2391
        %v2400 = vadd.f32 %v2398, %v2399
        %v2401 = vtanh.pop %v2400
        %v2402 = vmul.f32 %v2397, %v2401
        %v2403 = vld [vmem:[%s1298] sm:$0xff]
        %v2404 = vsub.f32 %v2402, %v2227
        %v2405 = vmul.f32 %v2403, %v2404
        %v2406 = vadd.f32 %v2227, %v2405
        %2407 = vst [vmem:[%s1851] sm:$0xff] %v2406
        %v2408 = vsub.f32 %v2400, %v2228
        %v2409 = vmul.f32 %v2403, %v2408
        %v2410 = vadd.f32 %v2228, %v2409
        %2411 = vst [vmem:[%s1853] sm:$0xff] %v2410
        %v2412 = vmul.f32 %v2403, %v2402
        %2413 = vst [vmem:[%s1309] sm:$0xff] %v2412
        %v2414 = vld [vmem:[%s1851] sm:$0xff]
        %v2415 = vld [vmem:[%s1853] sm:$0xff]
        %v2416 = vld [vmem:[%s1313] sm:$0xff]
        %v2417 = vld [vmem:[%s1313 + $0x8] sm:$0xff]
        %v2418 = vld [vmem:[%s1313 + $0x10] sm:$0xff]
        %v2419 = vld [vmem:[%s1313 + $0x18] sm:$0xff]
        %2420 = vmatprep.subr.mxu0 %v1571
        %2421 = vmatpush1.msra.mxu0 %v1570
        %2422 = vmatprep.subr.mxu0 %v1575
        %2423 = vmatpush1.msra.mxu0 %v1574
        %2424 = vmatprep.subr.mxu0 %v1579
        %2425 = vmatpush1.msra.mxu0 %v1578
        %2426 = vmatprep.subr.mxu0 %v1583
        %2427 = vmatpush1.msra.mxu0 %v1582
        %2428 = vmatprep.subr.mxu0 %v1587
        %2429 = vmatpush1.msra.mxu0 %v1586
        %2430 = vmatprep.subr.mxu0 %v1591
        %2431 = vmatpush1.msra.mxu0 %v1590
        %2432 = vmatprep.subr.mxu0 %v1595
        %2433 = vmatpush1.msra.mxu0 %v1594
        %2434 = vmatprep.subr.mxu0 %v1599
        %2435 = vmatpush1.msra.mxu0 %v1598
        %2436 = vmatprep.subr.mxu0 %v1603
        %2437 = vmatpush1.msra.mxu0 %v1602
        %2438 = vmatprep.subr.mxu0 %v1607
        %2439 = vmatpush1.msra.mxu0 %v1606
        %2440 = vmatprep.subr.mxu0 %v1611
        %2441 = vmatpush1.msra.mxu0 %v1610
        %2442 = vmatprep.subr.mxu0 %v1615
        %2443 = vmatpush1.msra.mxu0 %v1614
        %2444 = vmatprep.subr.mxu0 %v1619
        %2445 = vmatpush1.msra.mxu0 %v1618
        %2446 = vmatprep.subr.mxu0 %v1623
        %2447 = vmatpush1.msra.mxu0 %v1622
        %2448 = vmatprep.subr.mxu0 %v1627
        %2449 = vmatpush1.msra.mxu0 %v1626
        %2450 = vmatprep.subr.mxu0 %v1631
        %2451 = vmatpush1.msra.mxu0 %v1630
        %2452 = vmatprep.subr.mxu0 0.0
        %2453 = vmatpush1.msra.mxu0 0.0
        %2454 = vmatprep.subr.mxu0 0.0
        %2455 = vmatpush1.msra.mxu0 0.0
        %2456 = vmatprep.subr.mxu0 0.0
        %2457 = vmatpush1.msra.mxu0 0.0
        %2458 = vmatprep.subr.mxu0 0.0
        %2459 = vmatpush1.msra.mxu0 0.0
        %2460 = vmatprep.subr.mxu0 0.0
        %2461 = vmatpush1.msra.mxu0 0.0
        %2462 = vmatprep.subr.mxu0 0.0
        %2463 = vmatpush1.msra.mxu0 0.0
        %2464 = vmatprep.subr.mxu0 0.0
        %2465 = vmatpush1.msra.mxu0 0.0
        %2466 = vmatprep.subr.mxu0 0.0
        %2467 = vmatpush1.msra.mxu0 0.0
        %2468 = vmatprep.subr.mxu0 0.0
        %2469 = vmatpush1.msra.mxu0 0.0
        %2470 = vmatprep.subr.mxu0 0.0
        %2471 = vmatpush1.msra.mxu0 0.0
        %2472 = vmatprep.subr.mxu0 0.0
        %2473 = vmatpush1.msra.mxu0 0.0
        %2474 = vmatprep.subr.mxu0 0.0
        %2475 = vmatpush1.msra.mxu0 0.0
        %2476 = vmatprep.subr.mxu0 0.0
        %2477 = vmatpush1.msra.mxu0 0.0
        %2478 = vmatprep.subr.mxu0 0.0
        %2479 = vmatpush1.msra.mxu0 0.0
        %2480 = vmatprep.subr.mxu0 0.0
        %2481 = vmatpush1.msra.mxu0 0.0
        %2482 = vmatprep.subr.mxu0 0.0
        %2483 = vmatpush1.msra.mxu0 0.0
        %2484 = vmatprep.mubr.f32.mxu0 0.0
        %2485 = vmatmul.mubr.f32.gmra.mrb[0].mxu0 %v2414
        %v2486 = vpop.f32.mrb[0].mxu0
        %v2487 = vadd.f32 0.0, %v2486
        %v2488 = vpop.f32.mrb[0].mxu0
        %v2489 = vadd.f32 0.0, %v2488
        %2490 = vdwg.mxu0
        %2491 = vmatprep.subr.mxu0 %v1573
        %2492 = vmatpush1.msra.mxu0 %v1572
        %2493 = vmatprep.subr.mxu0 %v1577
        %2494 = vmatpush1.msra.mxu0 %v1576
        %2495 = vmatprep.subr.mxu0 %v1581
        %2496 = vmatpush1.msra.mxu0 %v1580
        %2497 = vmatprep.subr.mxu0 %v1585
        %2498 = vmatpush1.msra.mxu0 %v1584
        %2499 = vmatprep.subr.mxu0 %v1589
        %2500 = vmatpush1.msra.mxu0 %v1588
        %2501 = vmatprep.subr.mxu0 %v1593
        %2502 = vmatpush1.msra.mxu0 %v1592
        %2503 = vmatprep.subr.mxu0 %v1597
        %2504 = vmatpush1.msra.mxu0 %v1596
        %2505 = vmatprep.subr.mxu0 %v1601
        %2506 = vmatpush1.msra.mxu0 %v1600
        %2507 = vmatprep.subr.mxu0 %v1605
        %2508 = vmatpush1.msra.mxu0 %v1604
        %2509 = vmatprep.subr.mxu0 %v1609
        %2510 = vmatpush1.msra.mxu0 %v1608
        %2511 = vmatprep.subr.mxu0 %v1613
        %2512 = vmatpush1.msra.mxu0 %v1612
        %2513 = vmatprep.subr.mxu0 %v1617
        %2514 = vmatpush1.msra.mxu0 %v1616
        %2515 = vmatprep.subr.mxu0 %v1621
        %2516 = vmatpush1.msra.mxu0 %v1620
        %2517 = vmatprep.subr.mxu0 %v1625
        %2518 = vmatpush1.msra.mxu0 %v1624
        %2519 = vmatprep.subr.mxu0 %v1629
        %2520 = vmatpush1.msra.mxu0 %v1628
        %2521 = vmatprep.subr.mxu0 %v1633
        %2522 = vmatpush1.msra.mxu0 %v1632
        %2523 = vmatprep.subr.mxu0 0.0
        %2524 = vmatpush1.msra.mxu0 0.0
        %2525 = vmatprep.subr.mxu0 0.0
        %2526 = vmatpush1.msra.mxu0 0.0
        %2527 = vmatprep.subr.mxu0 0.0
        %2528 = vmatpush1.msra.mxu0 0.0
        %2529 = vmatprep.subr.mxu0 0.0
        %2530 = vmatpush1.msra.mxu0 0.0
        %2531 = vmatprep.subr.mxu0 0.0
        %2532 = vmatpush1.msra.mxu0 0.0
        %2533 = vmatprep.subr.mxu0 0.0
        %2534 = vmatpush1.msra.mxu0 0.0
        %2535 = vmatprep.subr.mxu0 0.0
        %2536 = vmatpush1.msra.mxu0 0.0
        %2537 = vmatprep.subr.mxu0 0.0
        %2538 = vmatpush1.msra.mxu0 0.0
        %2539 = vmatprep.subr.mxu0 0.0
        %2540 = vmatpush1.msra.mxu0 0.0
        %2541 = vmatprep.subr.mxu0 0.0
        %2542 = vmatpush1.msra.mxu0 0.0
        %2543 = vmatprep.subr.mxu0 0.0
        %2544 = vmatpush1.msra.mxu0 0.0
        %2545 = vmatprep.subr.mxu0 0.0
        %2546 = vmatpush1.msra.mxu0 0.0
        %2547 = vmatprep.subr.mxu0 0.0
        %2548 = vmatpush1.msra.mxu0 0.0
        %2549 = vmatprep.subr.mxu0 0.0
        %2550 = vmatpush1.msra.mxu0 0.0
        %2551 = vmatprep.subr.mxu0 0.0
        %2552 = vmatpush1.msra.mxu0 0.0
        %2553 = vmatprep.subr.mxu0 0.0
        %2554 = vmatpush1.msra.mxu0 0.0
        %2555 = vmatprep.mubr.f32.mxu0 0.0
        %2556 = vmatmul.mubr.f32.gmra.mrb[0].mxu0 %v2414
        %v2557 = vpop.f32.mrb[0].mxu0
        %v2558 = vadd.f32 0.0, %v2557
        %v2559 = vpop.f32.mrb[0].mxu0
        %v2560 = vadd.f32 0.0, %v2559
        %2561 = vdwg.mxu0
        %v2562 = vadd.f32 %v2416, %v2487
        %v2563 = vadd.f32 %v2417, %v2489
        %v2564 = vadd.f32 %v2418, %v2558
        %v2565 = vadd.f32 %v2419, %v2560
        %v2566 = vxor.u32 %v2562, 2147483648
        %v2567 = vmul.f32 %v2566, 1.442695
        %v2568 = vpow.pop %v2567
        %v2569 = vadd.f32 %v2568, 1.0
        %v2570 = vrcp.pop %v2569
        %v2571 = vmul.f32 1.0, %v2570
        %v2572 = vxor.u32 %v2563, 2147483648
        %v2573 = vmul.f32 %v2572, 1.442695
        %v2574 = vpow.pop %v2573
        %v2575 = vadd.f32 %v2574, 1.0
        %v2576 = vrcp.pop %v2575
        %v2577 = vmul.f32 1.0, %v2576
        %v2578 = vtanh.pop %v2564
        %v2579 = vxor.u32 %v2565, 2147483648
        %v2580 = vmul.f32 %v2579, 1.442695
        %v2581 = vpow.pop %v2580
        %v2582 = vadd.f32 %v2581, 1.0
        %v2583 = vrcp.pop %v2582
        %v2584 = vmul.f32 1.0, %v2583
        %v2585 = vmul.f32 %v2577, %v2415
        %v2586 = vmul.f32 %v2571, %v2578
        %v2587 = vadd.f32 %v2585, %v2586
        %v2588 = vtanh.pop %v2587
        %v2589 = vmul.f32 %v2584, %v2588
        %v2590 = vld [vmem:[%s1488] sm:$0xff]
        %v2591 = vsub.f32 %v2589, %v2414
        %v2592 = vmul.f32 %v2590, %v2591
        %v2593 = vadd.f32 %v2414, %v2592
        %2594 = vst [vmem:[%s1851] sm:$0xff] %v2593
        %v2595 = vsub.f32 %v2587, %v2415
        %v2596 = vmul.f32 %v2590, %v2595
        %v2597 = vadd.f32 %v2415, %v2596
        %2598 = vst [vmem:[%s1853] sm:$0xff] %v2597
        %v2599 = vmul.f32 %v2590, %v2589
        %2600 = vst [vmem:[%s1499] sm:$0xff] %v2599
        %v2601 = vld [vmem:[#allocation2] sm:$0xff]
        %v2602 = vld [vmem:[#allocation2 + $0x8] sm:$0xff]
        %v2603 = vld [vmem:[#allocation2 + $0x10] sm:$0xff]
        %v2604 = vld [vmem:[#allocation2 + $0x18] sm:$0xff]
        %v2605 = vld [vmem:[%s7] sm:$0xff]
        %v2606 = vld [vmem:[%s7 + $0x8] sm:$0xff]
        %v2607 = vld [vmem:[%s7 + $0x10] sm:$0xff]
        %v2608 = vld [vmem:[%s7 + $0x18] sm:$0xff]
        %v2609 = vld [vmem:[%s7 + $0x20] sm:$0xff]
        %v2610 = vld [vmem:[%s7 + $0x28] sm:$0xff]
        %v2611 = vld [vmem:[%s7 + $0x30] sm:$0xff]
        %v2612 = vld [vmem:[%s7 + $0x38] sm:$0xff]
        %v2613 = vld [vmem:[%s7 + $0x40] sm:$0xff]
        %v2614 = vld [vmem:[%s7 + $0x48] sm:$0xff]
        %v2615 = vld [vmem:[%s7 + $0x50] sm:$0xff]
        %v2616 = vld [vmem:[%s7 + $0x58] sm:$0xff]
        %v2617 = vld [vmem:[%s7 + $0x60] sm:$0xff]
        %v2618 = vld [vmem:[%s7 + $0x68] sm:$0xff]
        %v2619 = vld [vmem:[%s7 + $0x70] sm:$0xff]
        %v2620 = vld [vmem:[%s7 + $0x78] sm:$0xff]
        %v2621 = vld [vmem:[%s8] sm:$0x1]
        %v2623 = vlaneseq
        %v2624 = vshrl.u32 %v2623, 7
        %v2625 = vsub.s32 0, %v2624
        %v2626 = vrot.slane %v2621, %v2625
        %2628 = vmatprep.subr.mxu0 0.0
        %2629 = vmatpush1.msra.mxu0 %v2605
        %2630 = vmatprep.subr.mxu0 0.0
        %2631 = vmatpush1.msra.mxu0 %v2606
        %2632 = vmatprep.subr.mxu0 0.0
        %2633 = vmatpush1.msra.mxu0 %v2607
        %2634 = vmatprep.subr.mxu0 0.0
        %2635 = vmatpush1.msra.mxu0 %v2608
        %2636 = vmatprep.subr.mxu0 0.0
        %2637 = vmatpush1.msra.mxu0 %v2609
        %2638 = vmatprep.subr.mxu0 0.0
        %2639 = vmatpush1.msra.mxu0 %v2610
        %2640 = vmatprep.subr.mxu0 0.0
        %2641 = vmatpush1.msra.mxu0 %v2611
        %2642 = vmatprep.subr.mxu0 0.0
        %2643 = vmatpush1.msra.mxu0 %v2612
        %2644 = vmatprep.subr.mxu0 0.0
        %2645 = vmatpush1.msra.mxu0 %v2613
        %2646 = vmatprep.subr.mxu0 0.0
        %2647 = vmatpush1.msra.mxu0 %v2614
        %2648 = vmatprep.subr.mxu0 0.0
        %2649 = vmatpush1.msra.mxu0 %v2615
        %2650 = vmatprep.subr.mxu0 0.0
        %2651 = vmatpush1.msra.mxu0 %v2616
        %2652 = vmatprep.subr.mxu0 0.0
        %2653 = vmatpush1.msra.mxu0 %v2617
        %2654 = vmatprep.subr.mxu0 0.0
        %2655 = vmatpush1.msra.mxu0 %v2618
        %2656 = vmatprep.subr.mxu0 0.0
        %2657 = vmatpush1.msra.mxu0 %v2619
        %2658 = vmatprep.subr.mxu0 0.0
        %2659 = vmatpush1.msra.mxu0 %v2620
        %2660 = vmatprep.subr.mxu0 0.0
        %2661 = vmatpush1.msra.mxu0 0.0
        %2662 = vmatprep.subr.mxu0 0.0
        %2663 = vmatpush1.msra.mxu0 0.0
        %2664 = vmatprep.subr.mxu0 0.0
        %2665 = vmatpush1.msra.mxu0 0.0
        %2666 = vmatprep.subr.mxu0 0.0
        %2667 = vmatpush1.msra.mxu0 0.0
        %2668 = vmatprep.subr.mxu0 0.0
        %2669 = vmatpush1.msra.mxu0 0.0
        %2670 = vmatprep.subr.mxu0 0.0
        %2671 = vmatpush1.msra.mxu0 0.0
        %2672 = vmatprep.subr.mxu0 0.0
        %2673 = vmatpush1.msra.mxu0 0.0
        %2674 = vmatprep.subr.mxu0 0.0
        %2675 = vmatpush1.msra.mxu0 0.0
        %2676 = vmatprep.subr.mxu0 0.0
        %2677 = vmatpush1.msra.mxu0 0.0
        %2678 = vmatprep.subr.mxu0 0.0
        %2679 = vmatpush1.msra.mxu0 0.0
        %2680 = vmatprep.subr.mxu0 0.0
        %2681 = vmatpush1.msra.mxu0 0.0
        %2682 = vmatprep.subr.mxu0 0.0
        %2683 = vmatpush1.msra.mxu0 0.0
        %2684 = vmatprep.subr.mxu0 0.0
        %2685 = vmatpush1.msra.mxu0 0.0
        %2686 = vmatprep.subr.mxu0 0.0
        %2687 = vmatpush1.msra.mxu0 0.0
        %2688 = vmatprep.subr.mxu0 0.0
        %2689 = vmatpush1.msra.mxu0 0.0
        %2690 = vmatprep.subr.mxu0 0.0
        %2691 = vmatpush1.msra.mxu0 0.0
        %2692 = vmatprep.mubr.f32.mxu0 0.0
        %2693 = vmatmul.mubr.f32.gmra.mrb[0].mxu0 %v2601
        %v2694 = vpop.f32.mrb[0].mxu0
        %v2695 = vadd.f32 %v2626, %v2694
        %v2696 = vpop.f32.mrb[0].mxu0
        %2697 = vmatprep.mubr.f32.mxu0 0.0
        %2698 = vmatmul.mubr.f32.gmra.mrb[0].mxu0 %v2602
        %v2699 = vpop.f32.mrb[0].mxu0
        %v2700 = vadd.f32 %v2626, %v2699
        %v2701 = vpop.f32.mrb[0].mxu0
        %2702 = vmatprep.mubr.f32.mxu0 0.0
        %2703 = vmatmul.mubr.f32.gmra.mrb[0].mxu0 %v2603
        %v2704 = vpop.f32.mrb[0].mxu0
        %v2705 = vadd.f32 %v2626, %v2704
        %v2706 = vpop.f32.mrb[0].mxu0
        %2707 = vmatprep.mubr.f32.mxu0 0.0
        %2708 = vmatmul.mubr.f32.gmra.mrb[0].mxu0 %v2604
        %v2709 = vpop.f32.mrb[0].mxu0
        %v2710 = vadd.f32 %v2626, %v2709
        %v2711 = vpop.f32.mrb[0].mxu0
        %2712 = vdwg.mxu0
        %v2713 = vld [vmem:[%s2] sm:$0xff]
        %v2714 = vadd.f32 %v2695, %v2713
        %v2715 = vadd.f32 %v2700, %v2713
        %v2716 = vadd.f32 %v2705, %v2713
        %v2717 = vadd.f32 %v2710, %v2713
        %v2718 = vrot.slane %v2714, 4
        %v2719 = vmax.f32 %v2714, %v2718
        %v2720 = vrot.slane %v2719, 2
        %v2721 = vmax.f32 %v2719, %v2720
        %v2722 = vrot.slane %v2721, 1
        %v2723 = vmax.f32 %v2721, %v2722
        %v2724 = vrot.slane %v2715, 4
        %v2725 = vmax.f32 %v2715, %v2724
        %v2726 = vrot.slane %v2725, 2
        %v2727 = vmax.f32 %v2725, %v2726
        %v2728 = vrot.slane %v2727, 1
        %v2729 = vmax.f32 %v2727, %v2728
        %v2730 = vrot.slane %v2716, 4
        %v2731 = vmax.f32 %v2716, %v2730
        %v2732 = vrot.slane %v2731, 2
        %v2733 = vmax.f32 %v2731, %v2732
        %v2734 = vrot.slane %v2733, 1
        %v2735 = vmax.f32 %v2733, %v2734
        %v2736 = vrot.slane %v2717, 4
        %v2737 = vmax.f32 %v2717, %v2736
        %v2738 = vrot.slane %v2737, 2
        %v2739 = vmax.f32 %v2737, %v2738
        %v2740 = vrot.slane %v2739, 1
        %v2741 = vmax.f32 %v2739, %v2740
        %v2742 = vsub.f32 %v2714, %v2723
        %v2743 = vsub.f32 %v2715, %v2729
        %v2744 = vsub.f32 %v2716, %v2735
        %v2745 = vsub.f32 %v2717, %v2741
        %v2746 = vmul.f32 %v2742, 1.442695
        %v2747 = vpow.pop %v2746
        %v2748 = vmul.f32 %v2743, 1.442695
        %v2749 = vpow.pop %v2748
        %v2750 = vmul.f32 %v2744, 1.442695
        %v2751 = vpow.pop %v2750
        %v2752 = vmul.f32 %v2745, 1.442695
        %v2753 = vpow.pop %v2752
        %v2754 = vrot.slane %v2747, 4
        %v2755 = vadd.f32 %v2747, %v2754
        %v2756 = vrot.slane %v2755, 2
        %v2757 = vadd.f32 %v2755, %v2756
        %v2758 = vrot.slane %v2757, 1
        %v2759 = vadd.f32 %v2757, %v2758
        %v2760 = vrot.slane %v2749, 4
        %v2761 = vadd.f32 %v2749, %v2760
        %v2762 = vrot.slane %v2761, 2
        %v2763 = vadd.f32 %v2761, %v2762
        %v2764 = vrot.slane %v2763, 1
        %v2765 = vadd.f32 %v2763, %v2764
        %v2766 = vrot.slane %v2751, 4
        %v2767 = vadd.f32 %v2751, %v2766
        %v2768 = vrot.slane %v2767, 2
        %v2769 = vadd.f32 %v2767, %v2768
        %v2770 = vrot.slane %v2769, 1
        %v2771 = vadd.f32 %v2769, %v2770
        %v2772 = vrot.slane %v2753, 4
        %v2773 = vadd.f32 %v2753, %v2772
        %v2774 = vrot.slane %v2773, 2
        %v2775 = vadd.f32 %v2773, %v2774
        %v2776 = vrot.slane %v2775, 1
        %v2777 = vadd.f32 %v2775, %v2776
        %v2778 = vlog2.pop %v2759
        %v2779 = vmul.f32 %v2778, 0.6931472
        %v2780 = vlog2.pop %v2765
        %v2781 = vmul.f32 %v2780, 0.6931472
        %v2782 = vlog2.pop %v2771
        %v2783 = vmul.f32 %v2782, 0.6931472
        %v2784 = vlog2.pop %v2777
        %v2785 = vmul.f32 %v2784, 0.6931472
        %v2786 = vadd.f32 %v2779, %v2723
        %v2787 = vadd.f32 %v2781, %v2729
        %v2788 = vadd.f32 %v2783, %v2735
        %v2789 = vadd.f32 %v2785, %v2741
        %v2790 = vsub.f32 %v2695, %v2786
        %v2791 = vsub.f32 %v2700, %v2787
        %v2792 = vsub.f32 %v2705, %v2788
        %v2793 = vsub.f32 %v2710, %v2789
        %2794 = vst [vmem:[%s386] sm:$0xff] %v2790
        %2795 = vst [vmem:[%s386 + $0x8] sm:$0xff] %v2791
        %2796 = vst [vmem:[%s386 + $0x10] sm:$0xff] %v2792
        %2797 = vst [vmem:[%s386 + $0x18] sm:$0xff] %v2793
        %s2798 = smul.u32 4, %s22
        %p2799 = scmp.lt.s32.totalorder %s2798, 7
        %s2800 = scalar_select %p2799, %s2798, 7
        %s2801 = smul.addr %s2800, 8
        %s2802 = scalar_lea.vmem %s9, %s2801
        // Predicated region
        $region69: #{lstm_tagger_forward.1} parent=55 // pred_check
          %p2803 = pneg %p239
        $region70: #{lstm_tagger_forward.1} parent=55 // pred_check_branch
          %2805 = sbr.rel (%p2803) target = $region72
        $region71: #{lstm_tagger_forward.1} parent=55 // pred_region
          %s2806 = smul.u32 4, %s22
        $region72: #{lstm_tagger_forward.1} parent=55 // pred_fallthru
          _
      $region56: #{lstm_tagger_forward.1} parent=5 // pred_fallthru
        _
      %p2807 = scmp.le.s32.totalorder 2, %s17
      // Predicated region
      $region73: #{lstm_tagger_forward.1} parent=5 // pred_check
        %p2808 = pneg %p2807
      $region74: #{lstm_tagger_forward.1} parent=5 // pred_check_branch
        %2810 = sbr.rel (%p2808) target = $region76
      $region75: #{lstm_tagger_forward.1} parent=5 // pred_region
        %s2811 = ssub.s32 %s17, 2
        // Predicated region
        $region77: #{lstm_tagger_forward.1} parent=75 // pred_check
          %p2812 = pneg %p245
        $region78: #{lstm_tagger_forward.1} parent=75 // pred_check_branch
          %2814 = sbr.rel (%p2812) target = $region80
        $region79: #{lstm_tagger_forward.1} parent=75 // pred_region
          %s2815 = smul.u32 4, %s23
          %p2816 = scmp.lt.s32.totalorder %s2815, 7
          %s2817 = scalar_select %p2816, %s2815, 7
          %s2818 = smul.addr %s2817, 8
          %s2819 = scalar_lea.vmem %s9, %s2818
        $region80: #{lstm_tagger_forward.1} parent=75 // pred_fallthru
          _
      $region76: #{lstm_tagger_forward.1} parent=5 // pred_fallthru
        _
    $region6: #{lstm_tagger_forward.1} parent=1 // loop_footer
      %s21 = sadd.s32 1, %s17
    $region7: #{lstm_tagger_forward.1} parent=1 // loop_footer_branch
      %16 = sbr.rel target = $region3
    $region8: #{lstm_tagger_forward.1} parent=1 // loop_exit
      _
    %2820 = vsyncpa [#allocation7], 1
    %s2821 = scalar_lea.sflag [#allocation7], 1
    %2822 = vsyncpa %s2821, 1
    %2823 = vsyncpa [#allocation9], 1

</llo_original>
